<compile_context>
chip_gen: v6e
topology: v6e:2x2x1
jax: 0.10.0
libtpu: 0.0.40
codegen_flags: <defaults>
</compile_context>

<pallas_src>
import math
import functools

import jax
import jax.numpy as jnp
from jax import lax
from jax.experimental import pallas as pl
from jax.experimental.pallas import tpu as pltpu  # noqa: F401


# ------------------------------ helpers -------------------------------------

def _layer_norm(h, gamma, beta, eps=1e-5):
    mu = jnp.mean(h, axis=-1, keepdims=True)
    var = jnp.mean(jnp.square(h - mu), axis=-1, keepdims=True)
    return (h - mu) * lax.rsqrt(var + eps) * gamma + beta


# --------------------------- fused Pallas kernel -----------------------------

def _fused_forward_kernel(x_ref, bias_ref, emb_w_ref, emb_b_ref,
                          wqkv_ref, wo_ref, wf1_ref, wf2_ref, vec_ref,
                          fc_w_ref, fc_b_ref, o_ref,
                          *, num_heads, num_layers):
    H, L = num_heads, num_layers
    D = emb_w_ref.shape[1]
    hd = D // H
    scale = 1.0 / math.sqrt(hd)

    # block-diagonal additive attention bias (0 within a batch sample, -1e30 across)
    attn_bias = bias_ref[...]                                        # (N, N)

    # embedding: (N, Din) @ (Din, D) + (1, D)
    h = jnp.dot(x_ref[...], emb_w_ref[...],
                preferred_element_type=jnp.float32) + emb_b_ref[...]

    for li in range(L):                      # static unroll over layers
        wqkv = wqkv_ref[li]                  # (D, 3D)
        wo = wo_ref[li]                      # (D, D)
        wf1 = wf1_ref[li]                    # (D, 4D)
        wf2 = wf2_ref[li]                    # (4D, D)
        vec = vec_ref[li]                    # (8, W) packed small params
        bqkv = vec[0:1, :3 * D]
        bo = vec[1:2, :D]
        g1 = vec[2:3, :D]
        b1 = vec[3:4, :D]
        bf1 = vec[4:5, :4 * D]
        bf2 = vec[5:6, :D]
        g2 = vec[6:7, :D]
        b2 = vec[7:8, :D]

        # fused Q/K/V projection: one (N, D) x (D, 3D) matmul
        qkv = jnp.dot(h, wqkv, preferred_element_type=jnp.float32) + bqkv

        # per-head attention, fully 2-D: scores over (B*S, B*S) with batch mask
        head_outs = []
        for hh in range(H):                  # static unroll over heads
            q_h = qkv[:, hh * hd:(hh + 1) * hd]               # (N, hd)
            k_h = qkv[:, D + hh * hd:D + (hh + 1) * hd]       # (N, hd)
            v_h = qkv[:, 2 * D + hh * hd:2 * D + (hh + 1) * hd]
            # q_h @ k_h^T without an explicit transpose (contract last dims)
            s = lax.dot_general(q_h, k_h, (((1,), (1,)), ((), ())),
                                preferred_element_type=jnp.float32)
            s = s * scale + attn_bias
            s = s - jnp.max(s, axis=-1, keepdims=True)
            p = jnp.exp(s)
            p = p * pl.reciprocal(jnp.sum(p, axis=-1, keepdims=True), approx=True)
            head_outs.append(jnp.dot(p, v_h, preferred_element_type=jnp.float32))
        attn = jnp.concatenate(head_outs, axis=-1)            # (N, D)

        mha = jnp.dot(attn, wo, preferred_element_type=jnp.float32) + bo
        h = _layer_norm(h + mha, g1, b1)

        f = jnp.dot(h, wf1, preferred_element_type=jnp.float32) + bf1
        f = jnp.maximum(f, 0.0)
        f = jnp.dot(f, wf2, preferred_element_type=jnp.float32) + bf2
        h = _layer_norm(h + f, g2, b2)

    o_ref[...] = (jnp.dot(h, fc_w_ref[...],
                          preferred_element_type=jnp.float32) + fc_b_ref[...])


def fused_pallas_forward(x, pp, num_heads):
    B, S, Din = x.shape
    Dout = pp["fc_w"].shape[1]
    L = pp["wqkv"].shape[0]
    N = B * S
    x2 = x.reshape(N, Din)

    # block-diagonal attention bias: 0 inside a batch sample, -1e30 across samples
    sample = jnp.arange(N, dtype=jnp.int32) // S
    attn_bias = jnp.where(sample[:, None] == sample[None, :], 0.0, -1e30
                          ).astype(jnp.float32)

    out2 = pl.pallas_call(
        functools.partial(_fused_forward_kernel,
                          num_heads=num_heads, num_layers=L),
        out_shape=jax.ShapeDtypeStruct((N, Dout), jnp.float32),
    )(x2, attn_bias, pp["emb_w"], pp["emb_b"],
      pp["wqkv"], pp["wo"], pp["wf1"], pp["wf2"], pp["vec"],
      pp["fc_w"], pp["fc_b"])
    return out2.reshape(B, S, Dout)


# --------------------------- parameter packing --------------------------------

def pack_params(params, hidden_dim):
    """Pack per-layer params for the fused kernel (done once, outside the kernel)."""
    D = hidden_dim
    W = ((max(4 * D, 128) + 127) // 128) * 128   # lane-padded slab width
    layers = params["layers"]

    def pad_row(vrow, width):
        vrow = vrow.reshape(-1)
        return jnp.pad(vrow, (0, width - vrow.shape[0]))

    wqkv = jnp.stack([jnp.concatenate([lp["wq"], lp["wk"], lp["wv"]], axis=1)
                      for lp in layers])                     # (L, D, 3D)
    wo = jnp.stack([lp["wo"] for lp in layers])              # (L, D, D)
    wf1 = jnp.stack([lp["wf1"] for lp in layers])            # (L, D, 4D)
    wf2 = jnp.stack([lp["wf2"] for lp in layers])            # (L, 4D, D)

    vec_layers = []
    for lp in layers:
        bqkv = jnp.concatenate([lp["bq"], lp["bk"], lp["bv"]], axis=1)
        rows = [pad_row(bqkv, W), pad_row(lp["bo"], W),
                pad_row(lp["g1"], W), pad_row(lp["b1"], W),
                pad_row(lp["bf1"], W), pad_row(lp["bf2"], W),
                pad_row(lp["g2"], W), pad_row(lp["b2"], W)]
        vec_layers.append(jnp.stack(rows))                   # (8, W)
    vec = jnp.stack(vec_layers)                              # (L, 8, W)

    return dict(emb_w=params["emb_w"], emb_b=params["emb_b"],
                wqkv=wqkv, wo=wo, wf1=wf1, wf2=wf2, vec=vec,
                fc_w=params["fc_w"], fc_b=params["fc_b"])


# --------------------------- pure-JAX reference -------------------------------

def _ref_linear(a, w, b):
    return jnp.einsum("bsi,io->bso", a, w) + b


def _ref_transformer_layer(x, lp, num_heads):
    B, S, D = x.shape
    hd = D // num_heads
    q = _ref_linear(x, lp["wq"], lp["bq"]).reshape(B, S, num_heads, hd).transpose(0, 2, 1, 3)
    k = _ref_linear(x, lp["wk"], lp["bk"]).reshape(B, S, num_heads, hd).transpose(0, 2, 1, 3)
    v = _ref_linear(x, lp["wv"], lp["bv"]).reshape(B, S, num_heads, hd).transpose(0, 2, 1, 3)
    s = jnp.einsum("bhqd,bhkd->bhqk", q, k) / math.sqrt(hd)
    p = jax.nn.softmax(s, axis=-1)
    attn = jnp.einsum("bhqk,bhkd->bhqd", p, v).transpose(0, 2, 1, 3).reshape(B, S, D)
    mha = _ref_linear(attn, lp["wo"], lp["bo"])
    x1 = _layer_norm(x + mha, lp["g1"], lp["b1"])
    f = jax.nn.relu(_ref_linear(x1, lp["wf1"], lp["bf1"]))
    f = _ref_linear(f, lp["wf2"], lp["bf2"])
    return _layer_norm(x1 + f, lp["g2"], lp["b2"])


# ------------------------------- full forward ---------------------------------

def _axis_glue(x):
    # object id / axis selection (vectorized equivalent of create_axis_batch)
    obj_logits = x[:, 0, 4:18]
    obj_id = jnp.argmax(obj_logits, axis=1)
    yaxis = jnp.array([0.0, -1.0, 0.0], jnp.float32)
    xaxis = jnp.array([-1.0, 0.0, 0.0], jnp.float32)
    zaxis = jnp.zeros((3,), jnp.float32)
    y_ids = jnp.array([1, 2, 3, 4, 10, 11, 13], jnp.int32)
    x_ids = jnp.array([5, 6], jnp.int32)
    is_y = jnp.any(obj_id[:, None] == y_ids[None, :], axis=1)
    is_x = jnp.any(obj_id[:, None] == x_ids[None, :], axis=1)
    return jnp.where(is_y[:, None], yaxis[None, :],
                     jnp.where(is_x[:, None], xaxis[None, :], zaxis[None, :]))


def _head(out, axis):
    kps = out[:, :, :3]
    pose = jnp.mean(out[:, :, 3:], axis=1)
    a = jax.nn.relu(pose[:, -1])[:, None]
    a_axis = axis * a
    pose = jnp.concatenate([pose[:, :-1], a_axis], axis=1)
    return pose, kps


@functools.partial(jax.jit, static_argnums=(2,))
def transformer_forward_pallas(x, packed, num_heads):
    axis = _axis_glue(x)
    out = fused_pallas_forward(x, packed, num_heads)
    return _head(out, axis)


def transformer_forward_ref(x, params, num_heads):
    axis = _axis_glue(x)
    h = _ref_linear(x, params["emb_w"], params["emb_b"])
    for lp in params["layers"]:
        h = _ref_transformer_layer(h, lp, num_heads)
    out = _ref_linear(h, params["fc_w"], params["fc_b"])
    return _head(out, axis)


# ------------------------------- parameters -----------------------------------

def _init_linear(key, din, dout):
    kw, kb = jax.random.split(key)
    bound = 1.0 / math.sqrt(din)
    w = jax.random.uniform(kw, (din, dout), jnp.float32, -bound, bound)
    b = jax.random.uniform(kb, (1, dout), jnp.float32, -bound, bound)
    return w, b


def init_params(key, input_dim, hidden_dim, output_dim, num_layers):
    keys = jax.random.split(key, 2 + num_layers)
    emb_w, emb_b = _init_linear(keys[0], input_dim, hidden_dim)
    fc_w, fc_b = _init_linear(keys[1], hidden_dim, output_dim)
    layers = []
    for li in range(num_layers):
        lk = jax.random.split(keys[2 + li], 6)
        wq, bq = _init_linear(lk[0], hidden_dim, hidden_dim)
        wk, bk = _init_linear(lk[1], hidden_dim, hidden_dim)
        wv, bv = _init_linear(lk[2], hidden_dim, hidden_dim)
        wo, bo = _init_linear(lk[3], hidden_dim, hidden_dim)
        wf1, bf1 = _init_linear(lk[4], hidden_dim, hidden_dim * 4)
        wf2, bf2 = _init_linear(lk[5], hidden_dim * 4, hidden_dim)
        layers.append(dict(
            wq=wq, bq=bq, wk=wk, bk=bk, wv=wv, bv=bv, wo=wo, bo=bo,
            g1=jnp.ones((1, hidden_dim), jnp.float32),
            b1=jnp.zeros((1, hidden_dim), jnp.float32),
            wf1=wf1, bf1=bf1, wf2=wf2, bf2=bf2,
            g2=jnp.ones((1, hidden_dim), jnp.float32),
            b2=jnp.zeros((1, hidden_dim), jnp.float32),
        ))
    return dict(emb_w=emb_w, emb_b=emb_b, fc_w=fc_w, fc_b=fc_b, layers=layers)


# ---------------------------------- main ---------------------------------------

if __name__ == "__main__":
    B, S = 2, 8
    input_dim, hidden_dim, output_dim = 20, 32, 10
    num_layers, num_heads = 2, 4

    key = jax.random.PRNGKey(0)
    kx, kp = jax.random.split(key)
    x = jax.random.normal(kx, (B, S, input_dim), jnp.float32)
    params = init_params(kp, input_dim, hidden_dim, output_dim, num_layers)
    packed = pack_params(params, hidden_dim)

    pose, kps = transformer_forward_pallas(x, packed, num_heads)
    jax.block_until_ready((pose, kps))

    pose_ref, kps_ref = transformer_forward_ref(x, params, num_heads)
    assert pose.shape == (B, output_dim - 1) and kps.shape == (B, S, 3)
    # Tolerance 2e-3 covers pl.reciprocal(approx=True) in the softmax epilogue.
    assert jnp.allclose(pose, pose_ref, atol=2e-3, rtol=2e-3)
    assert jnp.allclose(kps, kps_ref, atol=2e-3, rtol=2e-3)

    # TODO(synk): PositionalEncoding is instantiated by the PyTorch module but never
    # applied in Transformer.forward, so it is intentionally not implemented.
    print("KERNEL_OK")
</pallas_src>

<mosaic_0001>
module attributes {stable_mosaic.version = 11 : i64} {
  func.func @_fused_forward_kernel(%arg0: memref<16x20xf32, #tpu.memory_space<vmem>>, %arg1: memref<16x16xf32, #tpu.memory_space<vmem>>, %arg2: memref<20x32xf32, #tpu.memory_space<vmem>>, %arg3: memref<1x32xf32, #tpu.memory_space<vmem>>, %arg4: memref<2x32x96xf32, #tpu.memory_space<vmem>>, %arg5: memref<2x32x32xf32, #tpu.memory_space<vmem>>, %arg6: memref<2x32x128xf32, #tpu.memory_space<vmem>>, %arg7: memref<2x128x32xf32, #tpu.memory_space<vmem>>, %arg8: memref<2x8x128xf32, #tpu.memory_space<vmem>>, %arg9: memref<32x10xf32, #tpu.memory_space<vmem>>, %arg10: memref<1x10xf32, #tpu.memory_space<vmem>>, %arg11: memref<16x10xf32, #tpu.memory_space<vmem>>) attributes {dimension_semantics = [], scalar_prefetch = 0 : i64, scratch_operands = 0 : i64, tpu.core_type = #tpu.core_type<tc>} {
    %c0 = arith.constant 0 : index
    %c0_0 = arith.constant 0 : index
    %0 = vector.load %arg1[%c0, %c0_0] : memref<16x16xf32, #tpu.memory_space<vmem>>, vector<16x16xf32>
    %c0_1 = arith.constant 0 : index
    %c0_2 = arith.constant 0 : index
    %1 = vector.load %arg0[%c0_1, %c0_2] : memref<16x20xf32, #tpu.memory_space<vmem>>, vector<16x20xf32>
    %c0_3 = arith.constant 0 : index
    %c0_4 = arith.constant 0 : index
    %2 = vector.load %arg2[%c0_3, %c0_4] : memref<20x32xf32, #tpu.memory_space<vmem>>, vector<20x32xf32>
    %cst = arith.constant dense<0.000000e+00> : vector<16x32xf32>
    %3 = tpu.matmul %1, %2, %cst {dimension_numbers = #tpu.dot_dimension_numbers<[1], [0], [0], [1], [0, 0, 1, 1], [], []>} : vector<16x20xf32>, vector<20x32xf32>, vector<16x32xf32> -> vector<16x32xf32>
    %c0_5 = arith.constant 0 : index
    %c0_6 = arith.constant 0 : index
    %4 = vector.load %arg3[%c0_5, %c0_6] : memref<1x32xf32, #tpu.memory_space<vmem>>, vector<1x32xf32>
    %5 = vector.broadcast %4 : vector<1x32xf32> to vector<16x32xf32>
    %6 = arith.addf %3, %5 : vector<16x32xf32>
    %c0_7 = arith.constant 0 : index
    %c0_8 = arith.constant 0 : index
    %c0_9 = arith.constant 0 : index
    %7 = vector.load %arg4[%c0_7, %c0_8, %c0_9] : memref<2x32x96xf32, #tpu.memory_space<vmem>>, vector<1x32x96xf32>
    %8 = vector.shape_cast %7 : vector<1x32x96xf32> to vector<32x96xf32>
    %c0_10 = arith.constant 0 : index
    %c0_11 = arith.constant 0 : index
    %c0_12 = arith.constant 0 : index
    %9 = vector.load %arg5[%c0_10, %c0_11, %c0_12] : memref<2x32x32xf32, #tpu.memory_space<vmem>>, vector<1x32x32xf32>
    %10 = vector.shape_cast %9 : vector<1x32x32xf32> to vector<32x32xf32>
    %c0_13 = arith.constant 0 : index
    %c0_14 = arith.constant 0 : index
    %c0_15 = arith.constant 0 : index
    %11 = vector.load %arg6[%c0_13, %c0_14, %c0_15] : memref<2x32x128xf32, #tpu.memory_space<vmem>>, vector<1x32x128xf32>
    %12 = vector.shape_cast %11 : vector<1x32x128xf32> to vector<32x128xf32>
    %c0_16 = arith.constant 0 : index
    %c0_17 = arith.constant 0 : index
    %c0_18 = arith.constant 0 : index
    %13 = vector.load %arg7[%c0_16, %c0_17, %c0_18] : memref<2x128x32xf32, #tpu.memory_space<vmem>>, vector<1x128x32xf32>
    %14 = vector.shape_cast %13 : vector<1x128x32xf32> to vector<128x32xf32>
    %c0_19 = arith.constant 0 : index
    %c0_20 = arith.constant 0 : index
    %c0_21 = arith.constant 0 : index
    %15 = vector.load %arg8[%c0_19, %c0_20, %c0_21] : memref<2x8x128xf32, #tpu.memory_space<vmem>>, vector<1x8x128xf32>
    %16 = vector.shape_cast %15 : vector<1x8x128xf32> to vector<8x128xf32>
    %17 = vector.extract_strided_slice %16 {offsets = [0, 0], sizes = [1, 96], strides = [1, 1]} : vector<8x128xf32> to vector<1x96xf32>
    %18 = vector.extract_strided_slice %16 {offsets = [1, 0], sizes = [1, 32], strides = [1, 1]} : vector<8x128xf32> to vector<1x32xf32>
    %19 = vector.extract_strided_slice %16 {offsets = [2, 0], sizes = [1, 32], strides = [1, 1]} : vector<8x128xf32> to vector<1x32xf32>
    %20 = vector.extract_strided_slice %16 {offsets = [3, 0], sizes = [1, 32], strides = [1, 1]} : vector<8x128xf32> to vector<1x32xf32>
    %21 = vector.extract_strided_slice %16 {offsets = [4, 0], sizes = [1, 128], strides = [1, 1]} : vector<8x128xf32> to vector<1x128xf32>
    %22 = vector.extract_strided_slice %16 {offsets = [5, 0], sizes = [1, 32], strides = [1, 1]} : vector<8x128xf32> to vector<1x32xf32>
    %23 = vector.extract_strided_slice %16 {offsets = [6, 0], sizes = [1, 32], strides = [1, 1]} : vector<8x128xf32> to vector<1x32xf32>
    %24 = vector.extract_strided_slice %16 {offsets = [7, 0], sizes = [1, 32], strides = [1, 1]} : vector<8x128xf32> to vector<1x32xf32>
    %cst_22 = arith.constant dense<0.000000e+00> : vector<16x96xf32>
    %25 = tpu.matmul %6, %8, %cst_22 {dimension_numbers = #tpu.dot_dimension_numbers<[1], [0], [0], [1], [0, 0, 1, 1], [], []>} : vector<16x32xf32>, vector<32x96xf32>, vector<16x96xf32> -> vector<16x96xf32>
    %26 = vector.broadcast %17 : vector<1x96xf32> to vector<16x96xf32>
    %27 = arith.addf %25, %26 : vector<16x96xf32>
    %28 = vector.extract_strided_slice %27 {offsets = [0, 0], sizes = [16, 8], strides = [1, 1]} : vector<16x96xf32> to vector<16x8xf32>
    %29 = vector.extract_strided_slice %27 {offsets = [0, 32], sizes = [16, 8], strides = [1, 1]} : vector<16x96xf32> to vector<16x8xf32>
    %30 = vector.extract_strided_slice %27 {offsets = [0, 64], sizes = [16, 8], strides = [1, 1]} : vector<16x96xf32> to vector<16x8xf32>
    %cst_23 = arith.constant dense<0.000000e+00> : vector<16x16xf32>
    %31 = tpu.matmul %28, %29, %cst_23 {dimension_numbers = #tpu.dot_dimension_numbers<[1], [1], [0], [0], [0, 0, 1, 0], [], []>} : vector<16x8xf32>, vector<16x8xf32>, vector<16x16xf32> -> vector<16x16xf32>
    %cst_24 = arith.constant 0.353553385 : f32
    %32 = vector.broadcast %cst_24 : f32 to vector<16x16xf32>
    %33 = arith.mulf %31, %32 : vector<16x16xf32>
    %34 = arith.addf %33, %0 : vector<16x16xf32>
    %cst_25 = arith.constant dense<0xFF800000> : vector<16xf32>
    %35 = vector.multi_reduction <maximumf>, %34, %cst_25 [1] : vector<16x16xf32> to vector<16xf32>
    %36 = vector.shape_cast %35 : vector<16xf32> to vector<16x1xf32>
    %37 = vector.broadcast %36 : vector<16x1xf32> to vector<16x16xf32>
    %38 = arith.subf %34, %37 : vector<16x16xf32>
    %39 = math.exp %38 : vector<16x16xf32>
    %cst_26 = arith.constant dense<0.000000e+00> : vector<16xf32>
    %40 = vector.multi_reduction <add>, %39, %cst_26 [1] : vector<16x16xf32> to vector<16xf32>
    %41 = vector.shape_cast %40 : vector<16xf32> to vector<16x1xf32>
    %42 = tpu.reciprocal %41 {approx = true} : vector<16x1xf32> -> vector<16x1xf32>
    %43 = vector.broadcast %42 : vector<16x1xf32> to vector<16x16xf32>
    %44 = arith.mulf %39, %43 : vector<16x16xf32>
    %cst_27 = arith.constant dense<0.000000e+00> : vector<16x8xf32>
    %45 = tpu.matmul %44, %30, %cst_27 {dimension_numbers = #tpu.dot_dimension_numbers<[1], [0], [0], [1], [0, 0, 1, 1], [], []>} : vector<16x16xf32>, vector<16x8xf32>, vector<16x8xf32> -> vector<16x8xf32>
    %46 = vector.extract_strided_slice %27 {offsets = [0, 8], sizes = [16, 8], strides = [1, 1]} : vector<16x96xf32> to vector<16x8xf32>
    %47 = vector.extract_strided_slice %27 {offsets = [0, 40], sizes = [16, 8], strides = [1, 1]} : vector<16x96xf32> to vector<16x8xf32>
    %48 = vector.extract_strided_slice %27 {offsets = [0, 72], sizes = [16, 8], strides = [1, 1]} : vector<16x96xf32> to vector<16x8xf32>
    %cst_28 = arith.constant dense<0.000000e+00> : vector<16x16xf32>
    %49 = tpu.matmul %46, %47, %cst_28 {dimension_numbers = #tpu.dot_dimension_numbers<[1], [1], [0], [0], [0, 0, 1, 0], [], []>} : vector<16x8xf32>, vector<16x8xf32>, vector<16x16xf32> -> vector<16x16xf32>
    %cst_29 = arith.constant 0.353553385 : f32
    %50 = vector.broadcast %cst_29 : f32 to vector<16x16xf32>
    %51 = arith.mulf %49, %50 : vector<16x16xf32>
    %52 = arith.addf %51, %0 : vector<16x16xf32>
    %cst_30 = arith.constant dense<0xFF800000> : vector<16xf32>
    %53 = vector.multi_reduction <maximumf>, %52, %cst_30 [1] : vector<16x16xf32> to vector<16xf32>
    %54 = vector.shape_cast %53 : vector<16xf32> to vector<16x1xf32>
    %55 = vector.broadcast %54 : vector<16x1xf32> to vector<16x16xf32>
    %56 = arith.subf %52, %55 : vector<16x16xf32>
    %57 = math.exp %56 : vector<16x16xf32>
    %cst_31 = arith.constant dense<0.000000e+00> : vector<16xf32>
    %58 = vector.multi_reduction <add>, %57, %cst_31 [1] : vector<16x16xf32> to vector<16xf32>
    %59 = vector.shape_cast %58 : vector<16xf32> to vector<16x1xf32>
    %60 = tpu.reciprocal %59 {approx = true} : vector<16x1xf32> -> vector<16x1xf32>
    %61 = vector.broadcast %60 : vector<16x1xf32> to vector<16x16xf32>
    %62 = arith.mulf %57, %61 : vector<16x16xf32>
    %cst_32 = arith.constant dense<0.000000e+00> : vector<16x8xf32>
    %63 = tpu.matmul %62, %48, %cst_32 {dimension_numbers = #tpu.dot_dimension_numbers<[1], [0], [0], [1], [0, 0, 1, 1], [], []>} : vector<16x16xf32>, vector<16x8xf32>, vector<16x8xf32> -> vector<16x8xf32>
    %64 = vector.extract_strided_slice %27 {offsets = [0, 16], sizes = [16, 8], strides = [1, 1]} : vector<16x96xf32> to vector<16x8xf32>
    %65 = vector.extract_strided_slice %27 {offsets = [0, 48], sizes = [16, 8], strides = [1, 1]} : vector<16x96xf32> to vector<16x8xf32>
    %66 = vector.extract_strided_slice %27 {offsets = [0, 80], sizes = [16, 8], strides = [1, 1]} : vector<16x96xf32> to vector<16x8xf32>
    %cst_33 = arith.constant dense<0.000000e+00> : vector<16x16xf32>
    %67 = tpu.matmul %64, %65, %cst_33 {dimension_numbers = #tpu.dot_dimension_numbers<[1], [1], [0], [0], [0, 0, 1, 0], [], []>} : vector<16x8xf32>, vector<16x8xf32>, vector<16x16xf32> -> vector<16x16xf32>
    %cst_34 = arith.constant 0.353553385 : f32
    %68 = vector.broadcast %cst_34 : f32 to vector<16x16xf32>
    %69 = arith.mulf %67, %68 : vector<16x16xf32>
    %70 = arith.addf %69, %0 : vector<16x16xf32>
    %cst_35 = arith.constant dense<0xFF800000> : vector<16xf32>
    %71 = vector.multi_reduction <maximumf>, %70, %cst_35 [1] : vector<16x16xf32> to vector<16xf32>
    %72 = vector.shape_cast %71 : vector<16xf32> to vector<16x1xf32>
    %73 = vector.broadcast %72 : vector<16x1xf32> to vector<16x16xf32>
    %74 = arith.subf %70, %73 : vector<16x16xf32>
    %75 = math.exp %74 : vector<16x16xf32>
    %cst_36 = arith.constant dense<0.000000e+00> : vector<16xf32>
    %76 = vector.multi_reduction <add>, %75, %cst_36 [1] : vector<16x16xf32> to vector<16xf32>
    %77 = vector.shape_cast %76 : vector<16xf32> to vector<16x1xf32>
    %78 = tpu.reciprocal %77 {approx = true} : vector<16x1xf32> -> vector<16x1xf32>
    %79 = vector.broadcast %78 : vector<16x1xf32> to vector<16x16xf32>
    %80 = arith.mulf %75, %79 : vector<16x16xf32>
    %cst_37 = arith.constant dense<0.000000e+00> : vector<16x8xf32>
    %81 = tpu.matmul %80, %66, %cst_37 {dimension_numbers = #tpu.dot_dimension_numbers<[1], [0], [0], [1], [0, 0, 1, 1], [], []>} : vector<16x16xf32>, vector<16x8xf32>, vector<16x8xf32> -> vector<16x8xf32>
    %82 = vector.extract_strided_slice %27 {offsets = [0, 24], sizes = [16, 8], strides = [1, 1]} : vector<16x96xf32> to vector<16x8xf32>
    %83 = vector.extract_strided_slice %27 {offsets = [0, 56], sizes = [16, 8], strides = [1, 1]} : vector<16x96xf32> to vector<16x8xf32>
    %84 = vector.extract_strided_slice %27 {offsets = [0, 88], sizes = [16, 8], strides = [1, 1]} : vector<16x96xf32> to vector<16x8xf32>
    %cst_38 = arith.constant dense<0.000000e+00> : vector<16x16xf32>
    %85 = tpu.matmul %82, %83, %cst_38 {dimension_numbers = #tpu.dot_dimension_numbers<[1], [1], [0], [0], [0, 0, 1, 0], [], []>} : vector<16x8xf32>, vector<16x8xf32>, vector<16x16xf32> -> vector<16x16xf32>
    %cst_39 = arith.constant 0.353553385 : f32
    %86 = vector.broadcast %cst_39 : f32 to vector<16x16xf32>
    %87 = arith.mulf %85, %86 : vector<16x16xf32>
    %88 = arith.addf %87, %0 : vector<16x16xf32>
    %cst_40 = arith.constant dense<0xFF800000> : vector<16xf32>
    %89 = vector.multi_reduction <maximumf>, %88, %cst_40 [1] : vector<16x16xf32> to vector<16xf32>
    %90 = vector.shape_cast %89 : vector<16xf32> to vector<16x1xf32>
    %91 = vector.broadcast %90 : vector<16x1xf32> to vector<16x16xf32>
    %92 = arith.subf %88, %91 : vector<16x16xf32>
    %93 = math.exp %92 : vector<16x16xf32>
    %cst_41 = arith.constant dense<0.000000e+00> : vector<16xf32>
    %94 = vector.multi_reduction <add>, %93, %cst_41 [1] : vector<16x16xf32> to vector<16xf32>
    %95 = vector.shape_cast %94 : vector<16xf32> to vector<16x1xf32>
    %96 = tpu.reciprocal %95 {approx = true} : vector<16x1xf32> -> vector<16x1xf32>
    %97 = vector.broadcast %96 : vector<16x1xf32> to vector<16x16xf32>
    %98 = arith.mulf %93, %97 : vector<16x16xf32>
    %cst_42 = arith.constant dense<0.000000e+00> : vector<16x8xf32>
    %99 = tpu.matmul %98, %84, %cst_42 {dimension_numbers = #tpu.dot_dimension_numbers<[1], [0], [0], [1], [0, 0, 1, 1], [], []>} : vector<16x16xf32>, vector<16x8xf32>, vector<16x8xf32> -> vector<16x8xf32>
    %100 = tpu.concatenate %45, %63, %81, %99 in 1 : vector<16x8xf32>, vector<16x8xf32>, vector<16x8xf32>, vector<16x8xf32> -> vector<16x32xf32>
    %cst_43 = arith.constant dense<0.000000e+00> : vector<16x32xf32>
    %101 = tpu.matmul %100, %10, %cst_43 {dimension_numbers = #tpu.dot_dimension_numbers<[1], [0], [0], [1], [0, 0, 1, 1], [], []>} : vector<16x32xf32>, vector<32x32xf32>, vector<16x32xf32> -> vector<16x32xf32>
    %102 = vector.broadcast %18 : vector<1x32xf32> to vector<16x32xf32>
    %103 = arith.addf %101, %102 : vector<16x32xf32>
    %104 = arith.addf %6, %103 : vector<16x32xf32>
    %cst_44 = arith.constant dense<0.000000e+00> : vector<16xf32>
    %105 = vector.multi_reduction <add>, %104, %cst_44 [1] : vector<16x32xf32> to vector<16xf32>
    %106 = vector.shape_cast %105 : vector<16xf32> to vector<16x1xf32>
    %cst_45 = arith.constant 3.200000e+01 : f32
    %107 = vector.broadcast %cst_45 : f32 to vector<16x1xf32>
    %108 = arith.divf %106, %107 : vector<16x1xf32>
    %109 = vector.broadcast %108 : vector<16x1xf32> to vector<16x32xf32>
    %110 = arith.subf %104, %109 : vector<16x32xf32>
    %111 = arith.mulf %110, %110 : vector<16x32xf32>
    %cst_46 = arith.constant dense<0.000000e+00> : vector<16xf32>
    %112 = vector.multi_reduction <add>, %111, %cst_46 [1] : vector<16x32xf32> to vector<16xf32>
    %113 = vector.shape_cast %112 : vector<16xf32> to vector<16x1xf32>
    %cst_47 = arith.constant 3.200000e+01 : f32
    %114 = vector.broadcast %cst_47 : f32 to vector<16x1xf32>
    %115 = arith.divf %113, %114 : vector<16x1xf32>
    %116 = vector.broadcast %108 : vector<16x1xf32> to vector<16x32xf32>
    %117 = arith.subf %104, %116 : vector<16x32xf32>
    %cst_48 = arith.constant 9.99999974E-6 : f32
    %118 = vector.broadcast %cst_48 : f32 to vector<16x1xf32>
    %119 = arith.addf %115, %118 : vector<16x1xf32>
    %120 = math.rsqrt %119 : vector<16x1xf32>
    %121 = vector.broadcast %120 : vector<16x1xf32> to vector<16x32xf32>
    %122 = arith.mulf %117, %121 : vector<16x32xf32>
    %123 = vector.broadcast %19 : vector<1x32xf32> to vector<16x32xf32>
    %124 = arith.mulf %122, %123 : vector<16x32xf32>
    %125 = vector.broadcast %20 : vector<1x32xf32> to vector<16x32xf32>
    %126 = arith.addf %124, %125 : vector<16x32xf32>
    %cst_49 = arith.constant dense<0.000000e+00> : vector<16x128xf32>
    %127 = tpu.matmul %126, %12, %cst_49 {dimension_numbers = #tpu.dot_dimension_numbers<[1], [0], [0], [1], [0, 0, 1, 1], [], []>} : vector<16x32xf32>, vector<32x128xf32>, vector<16x128xf32> -> vector<16x128xf32>
    %128 = vector.broadcast %21 : vector<1x128xf32> to vector<16x128xf32>
    %129 = arith.addf %127, %128 : vector<16x128xf32>
    %cst_50 = arith.constant 0.000000e+00 : f32
    %130 = vector.broadcast %cst_50 : f32 to vector<16x128xf32>
    %131 = arith.maximumf %129, %130 : vector<16x128xf32>
    %cst_51 = arith.constant dense<0.000000e+00> : vector<16x32xf32>
    %132 = tpu.matmul %131, %14, %cst_51 {dimension_numbers = #tpu.dot_dimension_numbers<[1], [0], [0], [1], [0, 0, 1, 1], [], []>} : vector<16x128xf32>, vector<128x32xf32>, vector<16x32xf32> -> vector<16x32xf32>
    %133 = vector.broadcast %22 : vector<1x32xf32> to vector<16x32xf32>
    %134 = arith.addf %132, %133 : vector<16x32xf32>
    %135 = arith.addf %126, %134 : vector<16x32xf32>
    %cst_52 = arith.constant dense<0.000000e+00> : vector<16xf32>
    %136 = vector.multi_reduction <add>, %135, %cst_52 [1] : vector<16x32xf32> to vector<16xf32>
    %137 = vector.shape_cast %136 : vector<16xf32> to vector<16x1xf32>
    %cst_53 = arith.constant 3.200000e+01 : f32
    %138 = vector.broadcast %cst_53 : f32 to vector<16x1xf32>
    %139 = arith.divf %137, %138 : vector<16x1xf32>
    %140 = vector.broadcast %139 : vector<16x1xf32> to vector<16x32xf32>
    %141 = arith.subf %135, %140 : vector<16x32xf32>
    %142 = arith.mulf %141, %141 : vector<16x32xf32>
    %cst_54 = arith.constant dense<0.000000e+00> : vector<16xf32>
    %143 = vector.multi_reduction <add>, %142, %cst_54 [1] : vector<16x32xf32> to vector<16xf32>
    %144 = vector.shape_cast %143 : vector<16xf32> to vector<16x1xf32>
    %cst_55 = arith.constant 3.200000e+01 : f32
    %145 = vector.broadcast %cst_55 : f32 to vector<16x1xf32>
    %146 = arith.divf %144, %145 : vector<16x1xf32>
    %147 = vector.broadcast %139 : vector<16x1xf32> to vector<16x32xf32>
    %148 = arith.subf %135, %147 : vector<16x32xf32>
    %cst_56 = arith.constant 9.99999974E-6 : f32
    %149 = vector.broadcast %cst_56 : f32 to vector<16x1xf32>
    %150 = arith.addf %146, %149 : vector<16x1xf32>
    %151 = math.rsqrt %150 : vector<16x1xf32>
    %152 = vector.broadcast %151 : vector<16x1xf32> to vector<16x32xf32>
    %153 = arith.mulf %148, %152 : vector<16x32xf32>
    %154 = vector.broadcast %23 : vector<1x32xf32> to vector<16x32xf32>
    %155 = arith.mulf %153, %154 : vector<16x32xf32>
    %156 = vector.broadcast %24 : vector<1x32xf32> to vector<16x32xf32>
    %157 = arith.addf %155, %156 : vector<16x32xf32>
    %c1 = arith.constant 1 : index
    %c0_57 = arith.constant 0 : index
    %c0_58 = arith.constant 0 : index
    %158 = vector.load %arg4[%c1, %c0_57, %c0_58] : memref<2x32x96xf32, #tpu.memory_space<vmem>>, vector<1x32x96xf32>
    %159 = vector.shape_cast %158 : vector<1x32x96xf32> to vector<32x96xf32>
    %c1_59 = arith.constant 1 : index
    %c0_60 = arith.constant 0 : index
    %c0_61 = arith.constant 0 : index
    %160 = vector.load %arg5[%c1_59, %c0_60, %c0_61] : memref<2x32x32xf32, #tpu.memory_space<vmem>>, vector<1x32x32xf32>
    %161 = vector.shape_cast %160 : vector<1x32x32xf32> to vector<32x32xf32>
    %c1_62 = arith.constant 1 : index
    %c0_63 = arith.constant 0 : index
    %c0_64 = arith.constant 0 : index
    %162 = vector.load %arg6[%c1_62, %c0_63, %c0_64] : memref<2x32x128xf32, #tpu.memory_space<vmem>>, vector<1x32x128xf32>
    %163 = vector.shape_cast %162 : vector<1x32x128xf32> to vector<32x128xf32>
    %c1_65 = arith.constant 1 : index
    %c0_66 = arith.constant 0 : index
    %c0_67 = arith.constant 0 : index
    %164 = vector.load %arg7[%c1_65, %c0_66, %c0_67] : memref<2x128x32xf32, #tpu.memory_space<vmem>>, vector<1x128x32xf32>
    %165 = vector.shape_cast %164 : vector<1x128x32xf32> to vector<128x32xf32>
    %c1_68 = arith.constant 1 : index
    %c0_69 = arith.constant 0 : index
    %c0_70 = arith.constant 0 : index
    %166 = vector.load %arg8[%c1_68, %c0_69, %c0_70] : memref<2x8x128xf32, #tpu.memory_space<vmem>>, vector<1x8x128xf32>
    %167 = vector.shape_cast %166 : vector<1x8x128xf32> to vector<8x128xf32>
    %168 = vector.extract_strided_slice %167 {offsets = [0, 0], sizes = [1, 96], strides = [1, 1]} : vector<8x128xf32> to vector<1x96xf32>
    %169 = vector.extract_strided_slice %167 {offsets = [1, 0], sizes = [1, 32], strides = [1, 1]} : vector<8x128xf32> to vector<1x32xf32>
    %170 = vector.extract_strided_slice %167 {offsets = [2, 0], sizes = [1, 32], strides = [1, 1]} : vector<8x128xf32> to vector<1x32xf32>
    %171 = vector.extract_strided_slice %167 {offsets = [3, 0], sizes = [1, 32], strides = [1, 1]} : vector<8x128xf32> to vector<1x32xf32>
    %172 = vector.extract_strided_slice %167 {offsets = [4, 0], sizes = [1, 128], strides = [1, 1]} : vector<8x128xf32> to vector<1x128xf32>
    %173 = vector.extract_strided_slice %167 {offsets = [5, 0], sizes = [1, 32], strides = [1, 1]} : vector<8x128xf32> to vector<1x32xf32>
    %174 = vector.extract_strided_slice %167 {offsets = [6, 0], sizes = [1, 32], strides = [1, 1]} : vector<8x128xf32> to vector<1x32xf32>
    %175 = vector.extract_strided_slice %167 {offsets = [7, 0], sizes = [1, 32], strides = [1, 1]} : vector<8x128xf32> to vector<1x32xf32>
    %cst_71 = arith.constant dense<0.000000e+00> : vector<16x96xf32>
    %176 = tpu.matmul %157, %159, %cst_71 {dimension_numbers = #tpu.dot_dimension_numbers<[1], [0], [0], [1], [0, 0, 1, 1], [], []>} : vector<16x32xf32>, vector<32x96xf32>, vector<16x96xf32> -> vector<16x96xf32>
    %177 = vector.broadcast %168 : vector<1x96xf32> to vector<16x96xf32>
    %178 = arith.addf %176, %177 : vector<16x96xf32>
    %179 = vector.extract_strided_slice %178 {offsets = [0, 0], sizes = [16, 8], strides = [1, 1]} : vector<16x96xf32> to vector<16x8xf32>
    %180 = vector.extract_strided_slice %178 {offsets = [0, 32], sizes = [16, 8], strides = [1, 1]} : vector<16x96xf32> to vector<16x8xf32>
    %181 = vector.extract_strided_slice %178 {offsets = [0, 64], sizes = [16, 8], strides = [1, 1]} : vector<16x96xf32> to vector<16x8xf32>
    %cst_72 = arith.constant dense<0.000000e+00> : vector<16x16xf32>
    %182 = tpu.matmul %179, %180, %cst_72 {dimension_numbers = #tpu.dot_dimension_numbers<[1], [1], [0], [0], [0, 0, 1, 0], [], []>} : vector<16x8xf32>, vector<16x8xf32>, vector<16x16xf32> -> vector<16x16xf32>
    %cst_73 = arith.constant 0.353553385 : f32
    %183 = vector.broadcast %cst_73 : f32 to vector<16x16xf32>
    %184 = arith.mulf %182, %183 : vector<16x16xf32>
    %185 = arith.addf %184, %0 : vector<16x16xf32>
    %cst_74 = arith.constant dense<0xFF800000> : vector<16xf32>
    %186 = vector.multi_reduction <maximumf>, %185, %cst_74 [1] : vector<16x16xf32> to vector<16xf32>
    %187 = vector.shape_cast %186 : vector<16xf32> to vector<16x1xf32>
    %188 = vector.broadcast %187 : vector<16x1xf32> to vector<16x16xf32>
    %189 = arith.subf %185, %188 : vector<16x16xf32>
    %190 = math.exp %189 : vector<16x16xf32>
    %cst_75 = arith.constant dense<0.000000e+00> : vector<16xf32>
    %191 = vector.multi_reduction <add>, %190, %cst_75 [1] : vector<16x16xf32> to vector<16xf32>
    %192 = vector.shape_cast %191 : vector<16xf32> to vector<16x1xf32>
    %193 = tpu.reciprocal %192 {approx = true} : vector<16x1xf32> -> vector<16x1xf32>
    %194 = vector.broadcast %193 : vector<16x1xf32> to vector<16x16xf32>
    %195 = arith.mulf %190, %194 : vector<16x16xf32>
    %cst_76 = arith.constant dense<0.000000e+00> : vector<16x8xf32>
    %196 = tpu.matmul %195, %181, %cst_76 {dimension_numbers = #tpu.dot_dimension_numbers<[1], [0], [0], [1], [0, 0, 1, 1], [], []>} : vector<16x16xf32>, vector<16x8xf32>, vector<16x8xf32> -> vector<16x8xf32>
    %197 = vector.extract_strided_slice %178 {offsets = [0, 8], sizes = [16, 8], strides = [1, 1]} : vector<16x96xf32> to vector<16x8xf32>
    %198 = vector.extract_strided_slice %178 {offsets = [0, 40], sizes = [16, 8], strides = [1, 1]} : vector<16x96xf32> to vector<16x8xf32>
    %199 = vector.extract_strided_slice %178 {offsets = [0, 72], sizes = [16, 8], strides = [1, 1]} : vector<16x96xf32> to vector<16x8xf32>
    %cst_77 = arith.constant dense<0.000000e+00> : vector<16x16xf32>
    %200 = tpu.matmul %197, %198, %cst_77 {dimension_numbers = #tpu.dot_dimension_numbers<[1], [1], [0], [0], [0, 0, 1, 0], [], []>} : vector<16x8xf32>, vector<16x8xf32>, vector<16x16xf32> -> vector<16x16xf32>
    %cst_78 = arith.constant 0.353553385 : f32
    %201 = vector.broadcast %cst_78 : f32 to vector<16x16xf32>
    %202 = arith.mulf %200, %201 : vector<16x16xf32>
    %203 = arith.addf %202, %0 : vector<16x16xf32>
    %cst_79 = arith.constant dense<0xFF800000> : vector<16xf32>
    %204 = vector.multi_reduction <maximumf>, %203, %cst_79 [1] : vector<16x16xf32> to vector<16xf32>
    %205 = vector.shape_cast %204 : vector<16xf32> to vector<16x1xf32>
    %206 = vector.broadcast %205 : vector<16x1xf32> to vector<16x16xf32>
    %207 = arith.subf %203, %206 : vector<16x16xf32>
    %208 = math.exp %207 : vector<16x16xf32>
    %cst_80 = arith.constant dense<0.000000e+00> : vector<16xf32>
    %209 = vector.multi_reduction <add>, %208, %cst_80 [1] : vector<16x16xf32> to vector<16xf32>
    %210 = vector.shape_cast %209 : vector<16xf32> to vector<16x1xf32>
    %211 = tpu.reciprocal %210 {approx = true} : vector<16x1xf32> -> vector<16x1xf32>
    %212 = vector.broadcast %211 : vector<16x1xf32> to vector<16x16xf32>
    %213 = arith.mulf %208, %212 : vector<16x16xf32>
    %cst_81 = arith.constant dense<0.000000e+00> : vector<16x8xf32>
    %214 = tpu.matmul %213, %199, %cst_81 {dimension_numbers = #tpu.dot_dimension_numbers<[1], [0], [0], [1], [0, 0, 1, 1], [], []>} : vector<16x16xf32>, vector<16x8xf32>, vector<16x8xf32> -> vector<16x8xf32>
    %215 = vector.extract_strided_slice %178 {offsets = [0, 16], sizes = [16, 8], strides = [1, 1]} : vector<16x96xf32> to vector<16x8xf32>
    %216 = vector.extract_strided_slice %178 {offsets = [0, 48], sizes = [16, 8], strides = [1, 1]} : vector<16x96xf32> to vector<16x8xf32>
    %217 = vector.extract_strided_slice %178 {offsets = [0, 80], sizes = [16, 8], strides = [1, 1]} : vector<16x96xf32> to vector<16x8xf32>
    %cst_82 = arith.constant dense<0.000000e+00> : vector<16x16xf32>
    %218 = tpu.matmul %215, %216, %cst_82 {dimension_numbers = #tpu.dot_dimension_numbers<[1], [1], [0], [0], [0, 0, 1, 0], [], []>} : vector<16x8xf32>, vector<16x8xf32>, vector<16x16xf32> -> vector<16x16xf32>
    %cst_83 = arith.constant 0.353553385 : f32
    %219 = vector.broadcast %cst_83 : f32 to vector<16x16xf32>
    %220 = arith.mulf %218, %219 : vector<16x16xf32>
    %221 = arith.addf %220, %0 : vector<16x16xf32>
    %cst_84 = arith.constant dense<0xFF800000> : vector<16xf32>
    %222 = vector.multi_reduction <maximumf>, %221, %cst_84 [1] : vector<16x16xf32> to vector<16xf32>
    %223 = vector.shape_cast %222 : vector<16xf32> to vector<16x1xf32>
    %224 = vector.broadcast %223 : vector<16x1xf32> to vector<16x16xf32>
    %225 = arith.subf %221, %224 : vector<16x16xf32>
    %226 = math.exp %225 : vector<16x16xf32>
    %cst_85 = arith.constant dense<0.000000e+00> : vector<16xf32>
    %227 = vector.multi_reduction <add>, %226, %cst_85 [1] : vector<16x16xf32> to vector<16xf32>
    %228 = vector.shape_cast %227 : vector<16xf32> to vector<16x1xf32>
    %229 = tpu.reciprocal %228 {approx = true} : vector<16x1xf32> -> vector<16x1xf32>
    %230 = vector.broadcast %229 : vector<16x1xf32> to vector<16x16xf32>
    %231 = arith.mulf %226, %230 : vector<16x16xf32>
    %cst_86 = arith.constant dense<0.000000e+00> : vector<16x8xf32>
    %232 = tpu.matmul %231, %217, %cst_86 {dimension_numbers = #tpu.dot_dimension_numbers<[1], [0], [0], [1], [0, 0, 1, 1], [], []>} : vector<16x16xf32>, vector<16x8xf32>, vector<16x8xf32> -> vector<16x8xf32>
    %233 = vector.extract_strided_slice %178 {offsets = [0, 24], sizes = [16, 8], strides = [1, 1]} : vector<16x96xf32> to vector<16x8xf32>
    %234 = vector.extract_strided_slice %178 {offsets = [0, 56], sizes = [16, 8], strides = [1, 1]} : vector<16x96xf32> to vector<16x8xf32>
    %235 = vector.extract_strided_slice %178 {offsets = [0, 88], sizes = [16, 8], strides = [1, 1]} : vector<16x96xf32> to vector<16x8xf32>
    %cst_87 = arith.constant dense<0.000000e+00> : vector<16x16xf32>
    %236 = tpu.matmul %233, %234, %cst_87 {dimension_numbers = #tpu.dot_dimension_numbers<[1], [1], [0], [0], [0, 0, 1, 0], [], []>} : vector<16x8xf32>, vector<16x8xf32>, vector<16x16xf32> -> vector<16x16xf32>
    %cst_88 = arith.constant 0.353553385 : f32
    %237 = vector.broadcast %cst_88 : f32 to vector<16x16xf32>
    %238 = arith.mulf %236, %237 : vector<16x16xf32>
    %239 = arith.addf %238, %0 : vector<16x16xf32>
    %cst_89 = arith.constant dense<0xFF800000> : vector<16xf32>
    %240 = vector.multi_reduction <maximumf>, %239, %cst_89 [1] : vector<16x16xf32> to vector<16xf32>
    %241 = vector.shape_cast %240 : vector<16xf32> to vector<16x1xf32>
    %242 = vector.broadcast %241 : vector<16x1xf32> to vector<16x16xf32>
    %243 = arith.subf %239, %242 : vector<16x16xf32>
    %244 = math.exp %243 : vector<16x16xf32>
    %cst_90 = arith.constant dense<0.000000e+00> : vector<16xf32>
    %245 = vector.multi_reduction <add>, %244, %cst_90 [1] : vector<16x16xf32> to vector<16xf32>
    %246 = vector.shape_cast %245 : vector<16xf32> to vector<16x1xf32>
    %247 = tpu.reciprocal %246 {approx = true} : vector<16x1xf32> -> vector<16x1xf32>
    %248 = vector.broadcast %247 : vector<16x1xf32> to vector<16x16xf32>
    %249 = arith.mulf %244, %248 : vector<16x16xf32>
    %cst_91 = arith.constant dense<0.000000e+00> : vector<16x8xf32>
    %250 = tpu.matmul %249, %235, %cst_91 {dimension_numbers = #tpu.dot_dimension_numbers<[1], [0], [0], [1], [0, 0, 1, 1], [], []>} : vector<16x16xf32>, vector<16x8xf32>, vector<16x8xf32> -> vector<16x8xf32>
    %251 = tpu.concatenate %196, %214, %232, %250 in 1 : vector<16x8xf32>, vector<16x8xf32>, vector<16x8xf32>, vector<16x8xf32> -> vector<16x32xf32>
    %cst_92 = arith.constant dense<0.000000e+00> : vector<16x32xf32>
    %252 = tpu.matmul %251, %161, %cst_92 {dimension_numbers = #tpu.dot_dimension_numbers<[1], [0], [0], [1], [0, 0, 1, 1], [], []>} : vector<16x32xf32>, vector<32x32xf32>, vector<16x32xf32> -> vector<16x32xf32>
    %253 = vector.broadcast %169 : vector<1x32xf32> to vector<16x32xf32>
    %254 = arith.addf %252, %253 : vector<16x32xf32>
    %255 = arith.addf %157, %254 : vector<16x32xf32>
    %cst_93 = arith.constant dense<0.000000e+00> : vector<16xf32>
    %256 = vector.multi_reduction <add>, %255, %cst_93 [1] : vector<16x32xf32> to vector<16xf32>
    %257 = vector.shape_cast %256 : vector<16xf32> to vector<16x1xf32>
    %cst_94 = arith.constant 3.200000e+01 : f32
    %258 = vector.broadcast %cst_94 : f32 to vector<16x1xf32>
    %259 = arith.divf %257, %258 : vector<16x1xf32>
    %260 = vector.broadcast %259 : vector<16x1xf32> to vector<16x32xf32>
    %261 = arith.subf %255, %260 : vector<16x32xf32>
    %262 = arith.mulf %261, %261 : vector<16x32xf32>
    %cst_95 = arith.constant dense<0.000000e+00> : vector<16xf32>
    %263 = vector.multi_reduction <add>, %262, %cst_95 [1] : vector<16x32xf32> to vector<16xf32>
    %264 = vector.shape_cast %263 : vector<16xf32> to vector<16x1xf32>
    %cst_96 = arith.constant 3.200000e+01 : f32
    %265 = vector.broadcast %cst_96 : f32 to vector<16x1xf32>
    %266 = arith.divf %264, %265 : vector<16x1xf32>
    %267 = vector.broadcast %259 : vector<16x1xf32> to vector<16x32xf32>
    %268 = arith.subf %255, %267 : vector<16x32xf32>
    %cst_97 = arith.constant 9.99999974E-6 : f32
    %269 = vector.broadcast %cst_97 : f32 to vector<16x1xf32>
    %270 = arith.addf %266, %269 : vector<16x1xf32>
    %271 = math.rsqrt %270 : vector<16x1xf32>
    %272 = vector.broadcast %271 : vector<16x1xf32> to vector<16x32xf32>
    %273 = arith.mulf %268, %272 : vector<16x32xf32>
    %274 = vector.broadcast %170 : vector<1x32xf32> to vector<16x32xf32>
    %275 = arith.mulf %273, %274 : vector<16x32xf32>
    %276 = vector.broadcast %171 : vector<1x32xf32> to vector<16x32xf32>
    %277 = arith.addf %275, %276 : vector<16x32xf32>
    %cst_98 = arith.constant dense<0.000000e+00> : vector<16x128xf32>
    %278 = tpu.matmul %277, %163, %cst_98 {dimension_numbers = #tpu.dot_dimension_numbers<[1], [0], [0], [1], [0, 0, 1, 1], [], []>} : vector<16x32xf32>, vector<32x128xf32>, vector<16x128xf32> -> vector<16x128xf32>
    %279 = vector.broadcast %172 : vector<1x128xf32> to vector<16x128xf32>
    %280 = arith.addf %278, %279 : vector<16x128xf32>
    %cst_99 = arith.constant 0.000000e+00 : f32
    %281 = vector.broadcast %cst_99 : f32 to vector<16x128xf32>
    %282 = arith.maximumf %280, %281 : vector<16x128xf32>
    %cst_100 = arith.constant dense<0.000000e+00> : vector<16x32xf32>
    %283 = tpu.matmul %282, %165, %cst_100 {dimension_numbers = #tpu.dot_dimension_numbers<[1], [0], [0], [1], [0, 0, 1, 1], [], []>} : vector<16x128xf32>, vector<128x32xf32>, vector<16x32xf32> -> vector<16x32xf32>
    %284 = vector.broadcast %173 : vector<1x32xf32> to vector<16x32xf32>
    %285 = arith.addf %283, %284 : vector<16x32xf32>
    %286 = arith.addf %277, %285 : vector<16x32xf32>
    %cst_101 = arith.constant dense<0.000000e+00> : vector<16xf32>
    %287 = vector.multi_reduction <add>, %286, %cst_101 [1] : vector<16x32xf32> to vector<16xf32>
    %288 = vector.shape_cast %287 : vector<16xf32> to vector<16x1xf32>
    %cst_102 = arith.constant 3.200000e+01 : f32
    %289 = vector.broadcast %cst_102 : f32 to vector<16x1xf32>
    %290 = arith.divf %288, %289 : vector<16x1xf32>
    %291 = vector.broadcast %290 : vector<16x1xf32> to vector<16x32xf32>
    %292 = arith.subf %286, %291 : vector<16x32xf32>
    %293 = arith.mulf %292, %292 : vector<16x32xf32>
    %cst_103 = arith.constant dense<0.000000e+00> : vector<16xf32>
    %294 = vector.multi_reduction <add>, %293, %cst_103 [1] : vector<16x32xf32> to vector<16xf32>
    %295 = vector.shape_cast %294 : vector<16xf32> to vector<16x1xf32>
    %cst_104 = arith.constant 3.200000e+01 : f32
    %296 = vector.broadcast %cst_104 : f32 to vector<16x1xf32>
    %297 = arith.divf %295, %296 : vector<16x1xf32>
    %298 = vector.broadcast %290 : vector<16x1xf32> to vector<16x32xf32>
    %299 = arith.subf %286, %298 : vector<16x32xf32>
    %cst_105 = arith.constant 9.99999974E-6 : f32
    %300 = vector.broadcast %cst_105 : f32 to vector<16x1xf32>
    %301 = arith.addf %297, %300 : vector<16x1xf32>
    %302 = math.rsqrt %301 : vector<16x1xf32>
    %303 = vector.broadcast %302 : vector<16x1xf32> to vector<16x32xf32>
    %304 = arith.mulf %299, %303 : vector<16x32xf32>
    %305 = vector.broadcast %174 : vector<1x32xf32> to vector<16x32xf32>
    %306 = arith.mulf %304, %305 : vector<16x32xf32>
    %307 = vector.broadcast %175 : vector<1x32xf32> to vector<16x32xf32>
    %308 = arith.addf %306, %307 : vector<16x32xf32>
    %c0_106 = arith.constant 0 : index
    %c0_107 = arith.constant 0 : index
    %309 = vector.load %arg9[%c0_106, %c0_107] : memref<32x10xf32, #tpu.memory_space<vmem>>, vector<32x10xf32>
    %cst_108 = arith.constant dense<0.000000e+00> : vector<16x10xf32>
    %310 = tpu.matmul %308, %309, %cst_108 {dimension_numbers = #tpu.dot_dimension_numbers<[1], [0], [0], [1], [0, 0, 1, 1], [], []>} : vector<16x32xf32>, vector<32x10xf32>, vector<16x10xf32> -> vector<16x10xf32>
    %c0_109 = arith.constant 0 : index
    %c0_110 = arith.constant 0 : index
    %311 = vector.load %arg10[%c0_109, %c0_110] : memref<1x10xf32, #tpu.memory_space<vmem>>, vector<1x10xf32>
    %312 = vector.broadcast %311 : vector<1x10xf32> to vector<16x10xf32>
    %313 = arith.addf %310, %312 : vector<16x10xf32>
    %c0_111 = arith.constant 0 : index
    %c0_112 = arith.constant 0 : index
    %314 = vector.load %arg11[%c0_111, %c0_112] : memref<16x10xf32, #tpu.memory_space<vmem>>, vector<16x10xf32>
    tpu.vector_store %arg11[%c0_111, %c0_112], %313 {strides = array<i32>} : memref<16x10xf32, #tpu.memory_space<vmem>>, vector<16x10xf32>,
    return
  }
}

</mosaic_0001>

<llo_original>
// kernel: transformer_forward_pallas.1
$region0: #{transformer_forward_pallas.1}
  #allocation0 [shape = 'u32[]', space=smem, size = 0x4, offset = 0x4, fixed_abs, tag = 'smem constant byte address 0x4 - core index']
  #allocation1 [shape = 'u32[144,128]{1,0:T(1,128)}', space=vmem, size = 0x12000, scoped, tag = 'internal scratch']
  %s0 = inlined_call_operand.vmem [shape: f32[16,20], index: 0, kind: input, shape index: {}]
  %s1 = inlined_call_operand.vmem [shape: f32[16,16], index: 1, kind: input, shape index: {}]
  %s2 = inlined_call_operand.vmem [shape: f32[20,32], index: 2, kind: input, shape index: {}]
  %s3 = inlined_call_operand.vmem [shape: f32[1,32], index: 3, kind: input, shape index: {}]
  %s4 = inlined_call_operand.vmem [shape: f32[2,32,96], index: 4, kind: input, shape index: {}]
  %s5 = inlined_call_operand.vmem [shape: f32[2,32,32], index: 5, kind: input, shape index: {}]
  %s6 = inlined_call_operand.vmem [shape: f32[2,32,128], index: 6, kind: input, shape index: {}]
  %s7 = inlined_call_operand.vmem [shape: f32[2,128,32], index: 7, kind: input, shape index: {}]
  %s8 = inlined_call_operand.vmem [shape: f32[2,8,128], index: 8, kind: input, shape index: {}]
  %s9 = inlined_call_operand.vmem [shape: f32[32,10], index: 9, kind: input, shape index: {}]
  %s10 = inlined_call_operand.vmem [shape: f32[1,10], index: 10, kind: input, shape index: {}]
  %s11 = inlined_call_operand.vmem [shape: f32[16,10], index: 11, kind: output, shape index: {}]
  %s12 = sld [smem:[#allocation0]]
  $region54: #{transformer_forward_pallas.1} parent=0
    _
  %s14 = ssub.s32 1, %s12
  %s15 = scalar_select 0, %s14, %s12
  // Predicated region
  $region2: #{transformer_forward_pallas.1} parent=0 // pred_check
    _
  $region3: #{transformer_forward_pallas.1} parent=0 // pred_check_branch
    %17 = sbr.rel (0) target = $region5
  $region4: #{transformer_forward_pallas.1} parent=0 // pred_region
    _
  $region5: #{transformer_forward_pallas.1} parent=0 // pred_fallthru
    _
  // Predicated region
  $region6: #{transformer_forward_pallas.1} parent=0 // pred_check
    _
  $region7: #{transformer_forward_pallas.1} parent=0 // pred_check_branch
    %19 = sbr.rel (0) target = $region9
  $region8: #{transformer_forward_pallas.1} parent=0 // pred_region
    _
  $region9: #{transformer_forward_pallas.1} parent=0 // pred_fallthru
    _
  // Predicated region
  $region10: #{transformer_forward_pallas.1} parent=0 // pred_check
    _
  $region11: #{transformer_forward_pallas.1} parent=0 // pred_check_branch
    %21 = sbr.rel (0) target = $region13
  $region12: #{transformer_forward_pallas.1} parent=0 // pred_region
    _
  $region13: #{transformer_forward_pallas.1} parent=0 // pred_fallthru
    _
  // Predicated region
  $region14: #{transformer_forward_pallas.1} parent=0 // pred_check
    _
  $region15: #{transformer_forward_pallas.1} parent=0 // pred_check_branch
    %23 = sbr.rel (0) target = $region17
  $region16: #{transformer_forward_pallas.1} parent=0 // pred_region
    _
  $region17: #{transformer_forward_pallas.1} parent=0 // pred_fallthru
    _
  // Predicated region
  $region18: #{transformer_forward_pallas.1} parent=0 // pred_check
    _
  $region19: #{transformer_forward_pallas.1} parent=0 // pred_check_branch
    %25 = sbr.rel (0) target = $region21
  $region20: #{transformer_forward_pallas.1} parent=0 // pred_region
    _
  $region21: #{transformer_forward_pallas.1} parent=0 // pred_fallthru
    _
  // Predicated region
  $region22: #{transformer_forward_pallas.1} parent=0 // pred_check
    _
  $region23: #{transformer_forward_pallas.1} parent=0 // pred_check_branch
    %27 = sbr.rel (0) target = $region25
  $region24: #{transformer_forward_pallas.1} parent=0 // pred_region
    _
  $region25: #{transformer_forward_pallas.1} parent=0 // pred_fallthru
    _
  // Predicated region
  $region26: #{transformer_forward_pallas.1} parent=0 // pred_check
    _
  $region27: #{transformer_forward_pallas.1} parent=0 // pred_check_branch
    %29 = sbr.rel (0) target = $region29
  $region28: #{transformer_forward_pallas.1} parent=0 // pred_region
    _
  $region29: #{transformer_forward_pallas.1} parent=0 // pred_fallthru
    _
  // Predicated region
  $region30: #{transformer_forward_pallas.1} parent=0 // pred_check
    _
  $region31: #{transformer_forward_pallas.1} parent=0 // pred_check_branch
    %31 = sbr.rel (0) target = $region33
  $region32: #{transformer_forward_pallas.1} parent=0 // pred_region
    _
  $region33: #{transformer_forward_pallas.1} parent=0 // pred_fallthru
    _
  // Predicated region
  $region34: #{transformer_forward_pallas.1} parent=0 // pred_check
    _
  $region35: #{transformer_forward_pallas.1} parent=0 // pred_check_branch
    %33 = sbr.rel (0) target = $region37
  $region36: #{transformer_forward_pallas.1} parent=0 // pred_region
    _
  $region37: #{transformer_forward_pallas.1} parent=0 // pred_fallthru
    _
  // Predicated region
  $region38: #{transformer_forward_pallas.1} parent=0 // pred_check
    _
  $region39: #{transformer_forward_pallas.1} parent=0 // pred_check_branch
    %35 = sbr.rel (0) target = $region41
  $region40: #{transformer_forward_pallas.1} parent=0 // pred_region
    _
  $region41: #{transformer_forward_pallas.1} parent=0 // pred_fallthru
    _
  // Predicated region
  $region42: #{transformer_forward_pallas.1} parent=0 // pred_check
    _
  $region43: #{transformer_forward_pallas.1} parent=0 // pred_check_branch
    %37 = sbr.rel (0) target = $region45
  $region44: #{transformer_forward_pallas.1} parent=0 // pred_region
    _
  $region45: #{transformer_forward_pallas.1} parent=0 // pred_fallthru
    _
  %v38 = vld [vmem:[%s1] sm:$0xff]
  %v39 = vld [vmem:[%s1 + $0x8] sm:$0xff]
  %v40 = vld [vmem:[%s0] sm:$0xff]
  %v41 = vld [vmem:[%s0 + $0x8] sm:$0xff]
  %v42 = vld [vmem:[%s2] sm:$0xff]
  %v43 = vld [vmem:[%s2 + $0x8] sm:$0xff]
  %v44 = vld [vmem:[%s2 + $0x10] sm:$0xf]
  %v45 = vld [vmem:[%s3] sm:$0x1]
  %v47 = vlaneseq
  %v48 = vshrl.u32 %v47, 7
  %v49 = vsub.s32 0, %v48
  %v50 = vrot.slane %v45, %v49
  %vm52 = vcmask 162816
  %v54 = vsel %vm52, %v40, 0
  %v57 = vsel %vm52, %v41, 0
  %vm59 = vcmask 1043456
  %v61 = vsel %vm59, %v44, 0
  %63 = vmatprep.subr.mxu0 0.0
  %64 = vmatpush1.msra.mxu0 0.0
  %65 = vmatprep.subr.mxu0 0.0
  %66 = vmatpush1.msra.mxu0 0.0
  %67 = vmatprep.subr.mxu0 0.0
  %68 = vmatpush1.msra.mxu0 0.0
  %69 = vmatprep.subr.mxu0 0.0
  %70 = vmatpush1.msra.mxu0 0.0
  %71 = vmatprep.subr.mxu0 0.0
  %72 = vmatpush1.msra.mxu0 0.0
  %73 = vmatprep.subr.mxu0 0.0
  %74 = vmatpush1.msra.mxu0 0.0
  %75 = vmatprep.subr.mxu0 0.0
  %76 = vmatpush1.msra.mxu0 0.0
  %77 = vmatprep.subr.mxu0 0.0
  %78 = vmatpush1.msra.mxu0 0.0
  %79 = vmatprep.subr.mxu0 0.0
  %80 = vmatpush1.msra.mxu0 0.0
  %81 = vmatprep.subr.mxu0 0.0
  %82 = vmatpush1.msra.mxu0 0.0
  %83 = vmatprep.subr.mxu0 0.0
  %84 = vmatpush1.msra.mxu0 0.0
  %85 = vmatprep.subr.mxu0 0.0
  %86 = vmatpush1.msra.mxu0 0.0
  %87 = vmatprep.subr.mxu0 0.0
  %88 = vmatpush1.msra.mxu0 0.0
  %89 = vmatprep.subr.mxu0 0.0
  %90 = vmatpush1.msra.mxu0 %v61
  %91 = vmatprep.subr.mxu0 0.0
  %92 = vmatpush1.msra.mxu0 %v43
  %93 = vmatprep.subr.mxu0 0.0
  %94 = vmatpush1.msra.mxu0 %v42
  %95 = vmatprep.subr.mxu0 0.0
  %96 = vmatpush2.msra.mxu0 0.0
  %97 = vmatprep.subr.mxu0 0.0
  %98 = vmatpush2.msra.mxu0 0.0
  %99 = vmatprep.subr.mxu0 0.0
  %100 = vmatpush2.msra.mxu0 0.0
  %101 = vmatprep.subr.mxu0 0.0
  %102 = vmatpush2.msra.mxu0 0.0
  %103 = vmatprep.subr.mxu0 0.0
  %104 = vmatpush2.msra.mxu0 0.0
  %105 = vmatprep.subr.mxu0 0.0
  %106 = vmatpush2.msra.mxu0 0.0
  %107 = vmatprep.subr.mxu0 0.0
  %108 = vmatpush2.msra.mxu0 0.0
  %109 = vmatprep.subr.mxu0 0.0
  %110 = vmatpush2.msra.mxu0 0.0
  %111 = vmatprep.subr.mxu0 0.0
  %112 = vmatpush2.msra.mxu0 0.0
  %113 = vmatprep.subr.mxu0 0.0
  %114 = vmatpush2.msra.mxu0 0.0
  %115 = vmatprep.subr.mxu0 0.0
  %116 = vmatpush2.msra.mxu0 0.0
  %117 = vmatprep.subr.mxu0 0.0
  %118 = vmatpush2.msra.mxu0 0.0
  %119 = vmatprep.subr.mxu0 0.0
  %120 = vmatpush2.msra.mxu0 0.0
  %121 = vmatprep.subr.mxu0 0.0
  %122 = vmatpush2.msra.mxu0 0.0
  %123 = vmatprep.subr.mxu0 0.0
  %124 = vmatpush2.msra.mxu0 0.0
  %125 = vmatprep.subr.mxu0 0.0
  %126 = vmatpush2.msra.mxu0 0.0
  %127 = vmatprep.mubr.f32.mxu0 0.0
  %128 = vmatmul.mubr.f32.gmra.mxu0 %v54
  %v129 = vpop.f32.mrf.mxu0
  %v130 = vadd.f32 %v50, %v129
  %v131 = vpop.f32.mrf.mxu0
  %132 = vmatprep.mubr.f32.mxu0 0.0
  %133 = vmatmul.mubr.f32.gmra.mxu0 %v57
  %v134 = vpop.f32.mrf.mxu0
  %v135 = vadd.f32 %v50, %v134
  %v136 = vpop.f32.mrf.mxu0
  %137 = vdwg.mxu0
  %v138 = vld [vmem:[%s4] sm:$0xff]
  %v139 = vld [vmem:[%s4 + $0x8] sm:$0xff]
  %v140 = vld [vmem:[%s4 + $0x10] sm:$0xff]
  %v141 = vld [vmem:[%s4 + $0x18] sm:$0xff]
  %v142 = vld [vmem:[%s5] sm:$0xff]
  %v143 = vld [vmem:[%s5 + $0x8] sm:$0xff]
  %v144 = vld [vmem:[%s5 + $0x10] sm:$0xff]
  %v145 = vld [vmem:[%s5 + $0x18] sm:$0xff]
  %v146 = vld [vmem:[%s6] sm:$0xff]
  %v147 = vld [vmem:[%s6 + $0x8] sm:$0xff]
  %v148 = vld [vmem:[%s6 + $0x10] sm:$0xff]
  %v149 = vld [vmem:[%s6 + $0x18] sm:$0xff]
  %v150 = vld [vmem:[%s7] sm:$0xff]
  %v151 = vld [vmem:[%s7 + $0x8] sm:$0xff]
  %v152 = vld [vmem:[%s7 + $0x10] sm:$0xff]
  %v153 = vld [vmem:[%s7 + $0x18] sm:$0xff]
  %v154 = vld [vmem:[%s7 + $0x20] sm:$0xff]
  %v155 = vld [vmem:[%s7 + $0x28] sm:$0xff]
  %v156 = vld [vmem:[%s7 + $0x30] sm:$0xff]
  %v157 = vld [vmem:[%s7 + $0x38] sm:$0xff]
  %v158 = vld [vmem:[%s7 + $0x40] sm:$0xff]
  %v159 = vld [vmem:[%s7 + $0x48] sm:$0xff]
  %v160 = vld [vmem:[%s7 + $0x50] sm:$0xff]
  %v161 = vld [vmem:[%s7 + $0x58] sm:$0xff]
  %v162 = vld [vmem:[%s7 + $0x60] sm:$0xff]
  %v163 = vld [vmem:[%s7 + $0x68] sm:$0xff]
  %v164 = vld [vmem:[%s7 + $0x70] sm:$0xff]
  %v165 = vld [vmem:[%s7 + $0x78] sm:$0xff]
  %v166 = vld [vmem:[%s8] sm:$0xff]
  %v167 = vlaneseq
  %v168 = vshrl.u32 %v167, 7
  %v169 = vsub.s32 0, %v168
  %v170 = vrot.slane %v166, %v169
  %vm171 = vcmask 261120
  %v173 = vsel %vm171, %v130, 0
  %v176 = vsel %vm171, %v135, 0
  %178 = vmatprep.subr.mxu0 0.0
  %179 = vmatpush1.msra.mxu0 0.0
  %180 = vmatprep.subr.mxu0 0.0
  %181 = vmatpush1.msra.mxu0 0.0
  %182 = vmatprep.subr.mxu0 0.0
  %183 = vmatpush1.msra.mxu0 0.0
  %184 = vmatprep.subr.mxu0 0.0
  %185 = vmatpush1.msra.mxu0 0.0
  %186 = vmatprep.subr.mxu0 0.0
  %187 = vmatpush1.msra.mxu0 0.0
  %188 = vmatprep.subr.mxu0 0.0
  %189 = vmatpush1.msra.mxu0 0.0
  %190 = vmatprep.subr.mxu0 0.0
  %191 = vmatpush1.msra.mxu0 0.0
  %192 = vmatprep.subr.mxu0 0.0
  %193 = vmatpush1.msra.mxu0 0.0
  %194 = vmatprep.subr.mxu0 0.0
  %195 = vmatpush1.msra.mxu0 0.0
  %196 = vmatprep.subr.mxu0 0.0
  %197 = vmatpush1.msra.mxu0 0.0
  %198 = vmatprep.subr.mxu0 0.0
  %199 = vmatpush1.msra.mxu0 0.0
  %200 = vmatprep.subr.mxu0 0.0
  %201 = vmatpush1.msra.mxu0 0.0
  %202 = vmatprep.subr.mxu0 0.0
  %203 = vmatpush1.msra.mxu0 %v141
  %204 = vmatprep.subr.mxu0 0.0
  %205 = vmatpush1.msra.mxu0 %v140
  %206 = vmatprep.subr.mxu0 0.0
  %207 = vmatpush1.msra.mxu0 %v139
  %208 = vmatprep.subr.mxu0 0.0
  %209 = vmatpush1.msra.mxu0 %v138
  %210 = vmatprep.subr.mxu0 0.0
  %211 = vmatpush2.msra.mxu0 0.0
  %212 = vmatprep.subr.mxu0 0.0
  %213 = vmatpush2.msra.mxu0 0.0
  %214 = vmatprep.subr.mxu0 0.0
  %215 = vmatpush2.msra.mxu0 0.0
  %216 = vmatprep.subr.mxu0 0.0
  %217 = vmatpush2.msra.mxu0 0.0
  %218 = vmatprep.subr.mxu0 0.0
  %219 = vmatpush2.msra.mxu0 0.0
  %220 = vmatprep.subr.mxu0 0.0
  %221 = vmatpush2.msra.mxu0 0.0
  %222 = vmatprep.subr.mxu0 0.0
  %223 = vmatpush2.msra.mxu0 0.0
  %224 = vmatprep.subr.mxu0 0.0
  %225 = vmatpush2.msra.mxu0 0.0
  %226 = vmatprep.subr.mxu0 0.0
  %227 = vmatpush2.msra.mxu0 0.0
  %228 = vmatprep.subr.mxu0 0.0
  %229 = vmatpush2.msra.mxu0 0.0
  %230 = vmatprep.subr.mxu0 0.0
  %231 = vmatpush2.msra.mxu0 0.0
  %232 = vmatprep.subr.mxu0 0.0
  %233 = vmatpush2.msra.mxu0 0.0
  %234 = vmatprep.subr.mxu0 0.0
  %235 = vmatpush2.msra.mxu0 0.0
  %236 = vmatprep.subr.mxu0 0.0
  %237 = vmatpush2.msra.mxu0 0.0
  %238 = vmatprep.subr.mxu0 0.0
  %239 = vmatpush2.msra.mxu0 0.0
  %240 = vmatprep.subr.mxu0 0.0
  %241 = vmatpush2.msra.mxu0 0.0
  %242 = vmatprep.mubr.f32.mxu0 0.0
  %243 = vmatmul.mubr.f32.gmra.mxu0 %v173
  %v244 = vpop.f32.mrf.mxu0
  %v245 = vadd.f32 %v170, %v244
  %v246 = vpop.f32.mrf.mxu0
  %247 = vmatprep.mubr.f32.mxu0 0.0
  %248 = vmatmul.mubr.f32.gmra.mxu0 %v176
  %v249 = vpop.f32.mrf.mxu0
  %v250 = vadd.f32 %v170, %v249
  %v251 = vpop.f32.mrf.mxu0
  %252 = vdwg.mxu0
  %255 = vrot.lane.b32.xlu0 %v245, 96
  %v256 = vpop.permute.xlu0 %255
  %257 = vrot.lane.b32.xlu0 %v250, 96
  %v258 = vpop.permute.xlu0 %257
  %vm259 = vcmask 64512
  %v260 = vsel %vm259, %v245, 0
  %v262 = vsel %vm259, %v250, 0
  %v264 = vsel %vm259, %v256, 0
  %v266 = vsel %vm259, %v258, 0
  %268 = vmatprep.subr.mxu0 0.0
  %269 = vmatpush1.xpose.msra.mxu0 0.0
  %270 = vmatprep.subr.mxu0 0.0
  %271 = vmatpush1.xpose.msra.mxu0 0.0
  %272 = vmatprep.subr.mxu0 0.0
  %273 = vmatpush1.xpose.msra.mxu0 0.0
  %274 = vmatprep.subr.mxu0 0.0
  %275 = vmatpush1.xpose.msra.mxu0 0.0
  %276 = vmatprep.subr.mxu0 0.0
  %277 = vmatpush1.xpose.msra.mxu0 0.0
  %278 = vmatprep.subr.mxu0 0.0
  %279 = vmatpush1.xpose.msra.mxu0 0.0
  %280 = vmatprep.subr.mxu0 0.0
  %281 = vmatpush1.xpose.msra.mxu0 0.0
  %282 = vmatprep.subr.mxu0 0.0
  %283 = vmatpush1.xpose.msra.mxu0 0.0
  %284 = vmatprep.subr.mxu0 0.0
  %285 = vmatpush1.xpose.msra.mxu0 0.0
  %286 = vmatprep.subr.mxu0 0.0
  %287 = vmatpush1.xpose.msra.mxu0 0.0
  %288 = vmatprep.subr.mxu0 0.0
  %289 = vmatpush1.xpose.msra.mxu0 0.0
  %290 = vmatprep.subr.mxu0 0.0
  %291 = vmatpush1.xpose.msra.mxu0 0.0
  %292 = vmatprep.subr.mxu0 0.0
  %293 = vmatpush1.xpose.msra.mxu0 0.0
  %294 = vmatprep.subr.mxu0 0.0
  %295 = vmatpush1.xpose.msra.mxu0 0.0
  %296 = vmatprep.subr.mxu0 0.0
  %297 = vmatpush1.xpose.msra.mxu0 %v266
  %298 = vmatprep.subr.mxu0 0.0
  %299 = vmatpush1.xpose.msra.mxu0 %v264
  %300 = vmatprep.subr.mxu0 0.0
  %301 = vmatpush2.xpose.msra.mxu0 0.0
  %302 = vmatprep.subr.mxu0 0.0
  %303 = vmatpush2.xpose.msra.mxu0 0.0
  %304 = vmatprep.subr.mxu0 0.0
  %305 = vmatpush2.xpose.msra.mxu0 0.0
  %306 = vmatprep.subr.mxu0 0.0
  %307 = vmatpush2.xpose.msra.mxu0 0.0
  %308 = vmatprep.subr.mxu0 0.0
  %309 = vmatpush2.xpose.msra.mxu0 0.0
  %310 = vmatprep.subr.mxu0 0.0
  %311 = vmatpush2.xpose.msra.mxu0 0.0
  %312 = vmatprep.subr.mxu0 0.0
  %313 = vmatpush2.xpose.msra.mxu0 0.0
  %314 = vmatprep.subr.mxu0 0.0
  %315 = vmatpush2.xpose.msra.mxu0 0.0
  %316 = vmatprep.subr.mxu0 0.0
  %317 = vmatpush2.xpose.msra.mxu0 0.0
  %318 = vmatprep.subr.mxu0 0.0
  %319 = vmatpush2.xpose.msra.mxu0 0.0
  %320 = vmatprep.subr.mxu0 0.0
  %321 = vmatpush2.xpose.msra.mxu0 0.0
  %322 = vmatprep.subr.mxu0 0.0
  %323 = vmatpush2.xpose.msra.mxu0 0.0
  %324 = vmatprep.subr.mxu0 0.0
  %325 = vmatpush2.xpose.msra.mxu0 0.0
  %326 = vmatprep.subr.mxu0 0.0
  %327 = vmatpush2.xpose.msra.mxu0 0.0
  %328 = vmatprep.subr.mxu0 0.0
  %329 = vmatpush2.xpose.msra.mxu0 0.0
  %330 = vmatprep.subr.mxu0 0.0
  %331 = vmatpush2.xpose.msra.mxu0 0.0
  %332 = vmatprep.mubr.f32.mxu0 0.0
  %333 = vmatmul.mubr.f32.gmra.mxu0 %v260
  %v334 = vpop.f32.mrf.mxu0
  %v335 = vadd.f32 0.0, %v334
  %v336 = vpop.f32.mrf.mxu0
  %337 = vmatprep.mubr.f32.mxu0 0.0
  %338 = vmatmul.mubr.f32.gmra.mxu0 %v262
  %v339 = vpop.f32.mrf.mxu0
  %v340 = vadd.f32 0.0, %v339
  %v341 = vpop.f32.mrf.mxu0
  %342 = vdwg.mxu0
  %v343 = vmul.f32 %v335, 0.35355338
  %v344 = vmul.f32 %v340, 0.35355338
  %v345 = vadd.f32 %v343, %v38
  %v346 = vadd.f32 %v344, %v39
  %vm347 = vcmask 130048
  %v348 = vsel %vm347, %v345, -inf
  %349 = vmax.xlane.f32.xlu0 %v348
  %v350 = vpop.xlane.xlu0 %349
  %v351 = vsel %vm347, %v346, -inf
  %352 = vmax.xlane.f32.xlu0 %v351
  %v353 = vpop.xlane.xlu0 %352
  %v354 = vsub.f32 %v345, %v350
  %v355 = vsub.f32 %v346, %v353
  %v356 = vmul.f32 %v354, 1.442695
  %v357 = vpow.pop %v356
  %v358 = vmul.f32 %v355, 1.442695
  %v359 = vpow.pop %v358
  %v360 = vsel %vm347, %v357, 0.0
  %361 = vadd.xlane.f32.xlu0 %v360
  %v362 = vpop.xlane.xlu0 %361
  %v363 = vsel %vm347, %v359, 0.0
  %364 = vadd.xlane.f32.xlu0 %v363
  %v365 = vpop.xlane.xlu0 %364
  %v366 = vrcp.pop %v362
  %v367 = vrcp.pop %v365
  %v368 = vmul.f32 %v357, %v366
  %v369 = vmul.f32 %v359, %v367
  %370 = vrot.lane.b32.xlu0 %v245, 64
  %v371 = vpop.permute.xlu0 %370
  %372 = vrot.lane.b32.xlu0 %v250, 64
  %v373 = vpop.permute.xlu0 %372
  %v377 = vsel %vm347, %v368, 0
  %v380 = vsel %vm347, %v369, 0
  %382 = vmatprep.subr.mxu0 0.0
  %383 = vmatpush1.msra.mxu0 0.0
  %384 = vmatprep.subr.mxu0 0.0
  %385 = vmatpush1.msra.mxu0 0.0
  %386 = vmatprep.subr.mxu0 0.0
  %387 = vmatpush1.msra.mxu0 0.0
  %388 = vmatprep.subr.mxu0 0.0
  %389 = vmatpush1.msra.mxu0 0.0
  %390 = vmatprep.subr.mxu0 0.0
  %391 = vmatpush1.msra.mxu0 0.0
  %392 = vmatprep.subr.mxu0 0.0
  %393 = vmatpush1.msra.mxu0 0.0
  %394 = vmatprep.subr.mxu0 0.0
  %395 = vmatpush1.msra.mxu0 0.0
  %396 = vmatprep.subr.mxu0 0.0
  %397 = vmatpush1.msra.mxu0 0.0
  %398 = vmatprep.subr.mxu0 0.0
  %399 = vmatpush1.msra.mxu0 0.0
  %400 = vmatprep.subr.mxu0 0.0
  %401 = vmatpush1.msra.mxu0 0.0
  %402 = vmatprep.subr.mxu0 0.0
  %403 = vmatpush1.msra.mxu0 0.0
  %404 = vmatprep.subr.mxu0 0.0
  %405 = vmatpush1.msra.mxu0 0.0
  %406 = vmatprep.subr.mxu0 0.0
  %407 = vmatpush1.msra.mxu0 0.0
  %408 = vmatprep.subr.mxu0 0.0
  %409 = vmatpush1.msra.mxu0 0.0
  %410 = vmatprep.subr.mxu0 0.0
  %411 = vmatpush1.msra.mxu0 %v373
  %412 = vmatprep.subr.mxu0 0.0
  %413 = vmatpush1.msra.mxu0 %v371
  %414 = vmatprep.subr.mxu0 0.0
  %415 = vmatpush2.msra.mxu0 0.0
  %416 = vmatprep.subr.mxu0 0.0
  %417 = vmatpush2.msra.mxu0 0.0
  %418 = vmatprep.subr.mxu0 0.0
  %419 = vmatpush2.msra.mxu0 0.0
  %420 = vmatprep.subr.mxu0 0.0
  %421 = vmatpush2.msra.mxu0 0.0
  %422 = vmatprep.subr.mxu0 0.0
  %423 = vmatpush2.msra.mxu0 0.0
  %424 = vmatprep.subr.mxu0 0.0
  %425 = vmatpush2.msra.mxu0 0.0
  %426 = vmatprep.subr.mxu0 0.0
  %427 = vmatpush2.msra.mxu0 0.0
  %428 = vmatprep.subr.mxu0 0.0
  %429 = vmatpush2.msra.mxu0 0.0
  %430 = vmatprep.subr.mxu0 0.0
  %431 = vmatpush2.msra.mxu0 0.0
  %432 = vmatprep.subr.mxu0 0.0
  %433 = vmatpush2.msra.mxu0 0.0
  %434 = vmatprep.subr.mxu0 0.0
  %435 = vmatpush2.msra.mxu0 0.0
  %436 = vmatprep.subr.mxu0 0.0
  %437 = vmatpush2.msra.mxu0 0.0
  %438 = vmatprep.subr.mxu0 0.0
  %439 = vmatpush2.msra.mxu0 0.0
  %440 = vmatprep.subr.mxu0 0.0
  %441 = vmatpush2.msra.mxu0 0.0
  %442 = vmatprep.subr.mxu0 0.0
  %443 = vmatpush2.msra.mxu0 0.0
  %444 = vmatprep.subr.mxu0 0.0
  %445 = vmatpush2.msra.mxu0 0.0
  %446 = vmatprep.mubr.f32.mxu0 0.0
  %447 = vmatmul.mubr.f32.gmra.mxu0 %v377
  %v448 = vpop.f32.mrf.mxu0
  %v449 = vadd.f32 0.0, %v448
  %v450 = vpop.f32.mrf.mxu0
  %451 = vmatprep.mubr.f32.mxu0 0.0
  %452 = vmatmul.mubr.f32.gmra.mxu0 %v380
  %v453 = vpop.f32.mrf.mxu0
  %v454 = vadd.f32 0.0, %v453
  %v455 = vpop.f32.mrf.mxu0
  %456 = vdwg.mxu0
  %457 = vrot.lane.b32.xlu0 %v245, 120
  %v458 = vpop.permute.xlu0 %457
  %459 = vrot.lane.b32.xlu0 %v250, 120
  %v460 = vpop.permute.xlu0 %459
  %461 = vrot.lane.b32.xlu0 %v245, 88
  %v462 = vpop.permute.xlu0 %461
  %463 = vrot.lane.b32.xlu0 %v250, 88
  %v464 = vpop.permute.xlu0 %463
  %v465 = vsel %vm259, %v458, 0
  %v467 = vsel %vm259, %v460, 0
  %v469 = vsel %vm259, %v462, 0
  %v471 = vsel %vm259, %v464, 0
  %473 = vmatprep.subr.mxu0 0.0
  %474 = vmatpush1.xpose.msra.mxu0 0.0
  %475 = vmatprep.subr.mxu0 0.0
  %476 = vmatpush1.xpose.msra.mxu0 0.0
  %477 = vmatprep.subr.mxu0 0.0
  %478 = vmatpush1.xpose.msra.mxu0 0.0
  %479 = vmatprep.subr.mxu0 0.0
  %480 = vmatpush1.xpose.msra.mxu0 0.0
  %481 = vmatprep.subr.mxu0 0.0
  %482 = vmatpush1.xpose.msra.mxu0 0.0
  %483 = vmatprep.subr.mxu0 0.0
  %484 = vmatpush1.xpose.msra.mxu0 0.0
  %485 = vmatprep.subr.mxu0 0.0
  %486 = vmatpush1.xpose.msra.mxu0 0.0
  %487 = vmatprep.subr.mxu0 0.0
  %488 = vmatpush1.xpose.msra.mxu0 0.0
  %489 = vmatprep.subr.mxu0 0.0
  %490 = vmatpush1.xpose.msra.mxu0 0.0
  %491 = vmatprep.subr.mxu0 0.0
  %492 = vmatpush1.xpose.msra.mxu0 0.0
  %493 = vmatprep.subr.mxu0 0.0
  %494 = vmatpush1.xpose.msra.mxu0 0.0
  %495 = vmatprep.subr.mxu0 0.0
  %496 = vmatpush1.xpose.msra.mxu0 0.0
  %497 = vmatprep.subr.mxu0 0.0
  %498 = vmatpush1.xpose.msra.mxu0 0.0
  %499 = vmatprep.subr.mxu0 0.0
  %500 = vmatpush1.xpose.msra.mxu0 0.0
  %501 = vmatprep.subr.mxu0 0.0
  %502 = vmatpush1.xpose.msra.mxu0 %v471
  %503 = vmatprep.subr.mxu0 0.0
  %504 = vmatpush1.xpose.msra.mxu0 %v469
  %505 = vmatprep.subr.mxu0 0.0
  %506 = vmatpush2.xpose.msra.mxu0 0.0
  %507 = vmatprep.subr.mxu0 0.0
  %508 = vmatpush2.xpose.msra.mxu0 0.0
  %509 = vmatprep.subr.mxu0 0.0
  %510 = vmatpush2.xpose.msra.mxu0 0.0
  %511 = vmatprep.subr.mxu0 0.0
  %512 = vmatpush2.xpose.msra.mxu0 0.0
  %513 = vmatprep.subr.mxu0 0.0
  %514 = vmatpush2.xpose.msra.mxu0 0.0
  %515 = vmatprep.subr.mxu0 0.0
  %516 = vmatpush2.xpose.msra.mxu0 0.0
  %517 = vmatprep.subr.mxu0 0.0
  %518 = vmatpush2.xpose.msra.mxu0 0.0
  %519 = vmatprep.subr.mxu0 0.0
  %520 = vmatpush2.xpose.msra.mxu0 0.0
  %521 = vmatprep.subr.mxu0 0.0
  %522 = vmatpush2.xpose.msra.mxu0 0.0
  %523 = vmatprep.subr.mxu0 0.0
  %524 = vmatpush2.xpose.msra.mxu0 0.0
  %525 = vmatprep.subr.mxu0 0.0
  %526 = vmatpush2.xpose.msra.mxu0 0.0
  %527 = vmatprep.subr.mxu0 0.0
  %528 = vmatpush2.xpose.msra.mxu0 0.0
  %529 = vmatprep.subr.mxu0 0.0
  %530 = vmatpush2.xpose.msra.mxu0 0.0
  %531 = vmatprep.subr.mxu0 0.0
  %532 = vmatpush2.xpose.msra.mxu0 0.0
  %533 = vmatprep.subr.mxu0 0.0
  %534 = vmatpush2.xpose.msra.mxu0 0.0
  %535 = vmatprep.subr.mxu0 0.0
  %536 = vmatpush2.xpose.msra.mxu0 0.0
  %537 = vmatprep.mubr.f32.mxu0 0.0
  %538 = vmatmul.mubr.f32.gmra.mxu0 %v465
  %v539 = vpop.f32.mrf.mxu0
  %v540 = vadd.f32 0.0, %v539
  %v541 = vpop.f32.mrf.mxu0
  %542 = vmatprep.mubr.f32.mxu0 0.0
  %543 = vmatmul.mubr.f32.gmra.mxu0 %v467
  %v544 = vpop.f32.mrf.mxu0
  %v545 = vadd.f32 0.0, %v544
  %v546 = vpop.f32.mrf.mxu0
  %547 = vdwg.mxu0
  %v548 = vmul.f32 %v540, 0.35355338
  %v549 = vmul.f32 %v545, 0.35355338
  %v550 = vadd.f32 %v548, %v38
  %v551 = vadd.f32 %v549, %v39
  %v552 = vsel %vm347, %v550, -inf
  %553 = vmax.xlane.f32.xlu0 %v552
  %v554 = vpop.xlane.xlu0 %553
  %v555 = vsel %vm347, %v551, -inf
  %556 = vmax.xlane.f32.xlu0 %v555
  %v557 = vpop.xlane.xlu0 %556
  %v558 = vsub.f32 %v550, %v554
  %v559 = vsub.f32 %v551, %v557
  %v560 = vmul.f32 %v558, 1.442695
  %v561 = vpow.pop %v560
  %v562 = vmul.f32 %v559, 1.442695
  %v563 = vpow.pop %v562
  %v564 = vsel %vm347, %v561, 0.0
  %565 = vadd.xlane.f32.xlu0 %v564
  %v566 = vpop.xlane.xlu0 %565
  %v567 = vsel %vm347, %v563, 0.0
  %568 = vadd.xlane.f32.xlu0 %v567
  %v569 = vpop.xlane.xlu0 %568
  %v570 = vrcp.pop %v566
  %v571 = vrcp.pop %v569
  %v572 = vmul.f32 %v561, %v570
  %v573 = vmul.f32 %v563, %v571
  %574 = vrot.lane.b32.xlu0 %v245, 56
  %v575 = vpop.permute.xlu0 %574
  %576 = vrot.lane.b32.xlu0 %v250, 56
  %v577 = vpop.permute.xlu0 %576
  %v581 = vsel %vm347, %v572, 0
  %v584 = vsel %vm347, %v573, 0
  %586 = vmatprep.subr.mxu0 0.0
  %587 = vmatpush1.msra.mxu0 0.0
  %588 = vmatprep.subr.mxu0 0.0
  %589 = vmatpush1.msra.mxu0 0.0
  %590 = vmatprep.subr.mxu0 0.0
  %591 = vmatpush1.msra.mxu0 0.0
  %592 = vmatprep.subr.mxu0 0.0
  %593 = vmatpush1.msra.mxu0 0.0
  %594 = vmatprep.subr.mxu0 0.0
  %595 = vmatpush1.msra.mxu0 0.0
  %596 = vmatprep.subr.mxu0 0.0
  %597 = vmatpush1.msra.mxu0 0.0
  %598 = vmatprep.subr.mxu0 0.0
  %599 = vmatpush1.msra.mxu0 0.0
  %600 = vmatprep.subr.mxu0 0.0
  %601 = vmatpush1.msra.mxu0 0.0
  %602 = vmatprep.subr.mxu0 0.0
  %603 = vmatpush1.msra.mxu0 0.0
  %604 = vmatprep.subr.mxu0 0.0
  %605 = vmatpush1.msra.mxu0 0.0
  %606 = vmatprep.subr.mxu0 0.0
  %607 = vmatpush1.msra.mxu0 0.0
  %608 = vmatprep.subr.mxu0 0.0
  %609 = vmatpush1.msra.mxu0 0.0
  %610 = vmatprep.subr.mxu0 0.0
  %611 = vmatpush1.msra.mxu0 0.0
  %612 = vmatprep.subr.mxu0 0.0
  %613 = vmatpush1.msra.mxu0 0.0
  %614 = vmatprep.subr.mxu0 0.0
  %615 = vmatpush1.msra.mxu0 %v577
  %616 = vmatprep.subr.mxu0 0.0
  %617 = vmatpush1.msra.mxu0 %v575
  %618 = vmatprep.subr.mxu0 0.0
  %619 = vmatpush2.msra.mxu0 0.0
  %620 = vmatprep.subr.mxu0 0.0
  %621 = vmatpush2.msra.mxu0 0.0
  %622 = vmatprep.subr.mxu0 0.0
  %623 = vmatpush2.msra.mxu0 0.0
  %624 = vmatprep.subr.mxu0 0.0
  %625 = vmatpush2.msra.mxu0 0.0
  %626 = vmatprep.subr.mxu0 0.0
  %627 = vmatpush2.msra.mxu0 0.0
  %628 = vmatprep.subr.mxu0 0.0
  %629 = vmatpush2.msra.mxu0 0.0
  %630 = vmatprep.subr.mxu0 0.0
  %631 = vmatpush2.msra.mxu0 0.0
  %632 = vmatprep.subr.mxu0 0.0
  %633 = vmatpush2.msra.mxu0 0.0
  %634 = vmatprep.subr.mxu0 0.0
  %635 = vmatpush2.msra.mxu0 0.0
  %636 = vmatprep.subr.mxu0 0.0
  %637 = vmatpush2.msra.mxu0 0.0
  %638 = vmatprep.subr.mxu0 0.0
  %639 = vmatpush2.msra.mxu0 0.0
  %640 = vmatprep.subr.mxu0 0.0
  %641 = vmatpush2.msra.mxu0 0.0
  %642 = vmatprep.subr.mxu0 0.0
  %643 = vmatpush2.msra.mxu0 0.0
  %644 = vmatprep.subr.mxu0 0.0
  %645 = vmatpush2.msra.mxu0 0.0
  %646 = vmatprep.subr.mxu0 0.0
  %647 = vmatpush2.msra.mxu0 0.0
  %648 = vmatprep.subr.mxu0 0.0
  %649 = vmatpush2.msra.mxu0 0.0
  %650 = vmatprep.mubr.f32.mxu0 0.0
  %651 = vmatmul.mubr.f32.gmra.mxu0 %v581
  %v652 = vpop.f32.mrf.mxu0
  %v653 = vadd.f32 0.0, %v652
  %v654 = vpop.f32.mrf.mxu0
  %655 = vmatprep.mubr.f32.mxu0 0.0
  %656 = vmatmul.mubr.f32.gmra.mxu0 %v584
  %v657 = vpop.f32.mrf.mxu0
  %v658 = vadd.f32 0.0, %v657
  %v659 = vpop.f32.mrf.mxu0
  %660 = vdwg.mxu0
  %661 = vrot.lane.b32.xlu0 %v245, 112
  %v662 = vpop.permute.xlu0 %661
  %663 = vrot.lane.b32.xlu0 %v250, 112
  %v664 = vpop.permute.xlu0 %663
  %665 = vrot.lane.b32.xlu0 %v245, 80
  %v666 = vpop.permute.xlu0 %665
  %667 = vrot.lane.b32.xlu0 %v250, 80
  %v668 = vpop.permute.xlu0 %667
  %v669 = vsel %vm259, %v662, 0
  %v671 = vsel %vm259, %v664, 0
  %v673 = vsel %vm259, %v666, 0
  %v675 = vsel %vm259, %v668, 0
  %677 = vmatprep.subr.mxu0 0.0
  %678 = vmatpush1.xpose.msra.mxu0 0.0
  %679 = vmatprep.subr.mxu0 0.0
  %680 = vmatpush1.xpose.msra.mxu0 0.0
  %681 = vmatprep.subr.mxu0 0.0
  %682 = vmatpush1.xpose.msra.mxu0 0.0
  %683 = vmatprep.subr.mxu0 0.0
  %684 = vmatpush1.xpose.msra.mxu0 0.0
  %685 = vmatprep.subr.mxu0 0.0
  %686 = vmatpush1.xpose.msra.mxu0 0.0
  %687 = vmatprep.subr.mxu0 0.0
  %688 = vmatpush1.xpose.msra.mxu0 0.0
  %689 = vmatprep.subr.mxu0 0.0
  %690 = vmatpush1.xpose.msra.mxu0 0.0
  %691 = vmatprep.subr.mxu0 0.0
  %692 = vmatpush1.xpose.msra.mxu0 0.0
  %693 = vmatprep.subr.mxu0 0.0
  %694 = vmatpush1.xpose.msra.mxu0 0.0
  %695 = vmatprep.subr.mxu0 0.0
  %696 = vmatpush1.xpose.msra.mxu0 0.0
  %697 = vmatprep.subr.mxu0 0.0
  %698 = vmatpush1.xpose.msra.mxu0 0.0
  %699 = vmatprep.subr.mxu0 0.0
  %700 = vmatpush1.xpose.msra.mxu0 0.0
  %701 = vmatprep.subr.mxu0 0.0
  %702 = vmatpush1.xpose.msra.mxu0 0.0
  %703 = vmatprep.subr.mxu0 0.0
  %704 = vmatpush1.xpose.msra.mxu0 0.0
  %705 = vmatprep.subr.mxu0 0.0
  %706 = vmatpush1.xpose.msra.mxu0 %v675
  %707 = vmatprep.subr.mxu0 0.0
  %708 = vmatpush1.xpose.msra.mxu0 %v673
  %709 = vmatprep.subr.mxu0 0.0
  %710 = vmatpush2.xpose.msra.mxu0 0.0
  %711 = vmatprep.subr.mxu0 0.0
  %712 = vmatpush2.xpose.msra.mxu0 0.0
  %713 = vmatprep.subr.mxu0 0.0
  %714 = vmatpush2.xpose.msra.mxu0 0.0
  %715 = vmatprep.subr.mxu0 0.0
  %716 = vmatpush2.xpose.msra.mxu0 0.0
  %717 = vmatprep.subr.mxu0 0.0
  %718 = vmatpush2.xpose.msra.mxu0 0.0
  %719 = vmatprep.subr.mxu0 0.0
  %720 = vmatpush2.xpose.msra.mxu0 0.0
  %721 = vmatprep.subr.mxu0 0.0
  %722 = vmatpush2.xpose.msra.mxu0 0.0
  %723 = vmatprep.subr.mxu0 0.0
  %724 = vmatpush2.xpose.msra.mxu0 0.0
  %725 = vmatprep.subr.mxu0 0.0
  %726 = vmatpush2.xpose.msra.mxu0 0.0
  %727 = vmatprep.subr.mxu0 0.0
  %728 = vmatpush2.xpose.msra.mxu0 0.0
  %729 = vmatprep.subr.mxu0 0.0
  %730 = vmatpush2.xpose.msra.mxu0 0.0
  %731 = vmatprep.subr.mxu0 0.0
  %732 = vmatpush2.xpose.msra.mxu0 0.0
  %733 = vmatprep.subr.mxu0 0.0
  %734 = vmatpush2.xpose.msra.mxu0 0.0
  %735 = vmatprep.subr.mxu0 0.0
  %736 = vmatpush2.xpose.msra.mxu0 0.0
  %737 = vmatprep.subr.mxu0 0.0
  %738 = vmatpush2.xpose.msra.mxu0 0.0
  %739 = vmatprep.subr.mxu0 0.0
  %740 = vmatpush2.xpose.msra.mxu0 0.0
  %741 = vmatprep.mubr.f32.mxu0 0.0
  %742 = vmatmul.mubr.f32.gmra.mxu0 %v669
  %v743 = vpop.f32.mrf.mxu0
  %v744 = vadd.f32 0.0, %v743
  %v745 = vpop.f32.mrf.mxu0
  %746 = vmatprep.mubr.f32.mxu0 0.0
  %747 = vmatmul.mubr.f32.gmra.mxu0 %v671
  %v748 = vpop.f32.mrf.mxu0
  %v749 = vadd.f32 0.0, %v748
  %v750 = vpop.f32.mrf.mxu0
  %751 = vdwg.mxu0
  %v752 = vmul.f32 %v744, 0.35355338
  %v753 = vmul.f32 %v749, 0.35355338
  %v754 = vadd.f32 %v752, %v38
  %v755 = vadd.f32 %v753, %v39
  %v756 = vsel %vm347, %v754, -inf
  %757 = vmax.xlane.f32.xlu0 %v756
  %v758 = vpop.xlane.xlu0 %757
  %v759 = vsel %vm347, %v755, -inf
  %760 = vmax.xlane.f32.xlu0 %v759
  %v761 = vpop.xlane.xlu0 %760
  %v762 = vsub.f32 %v754, %v758
  %v763 = vsub.f32 %v755, %v761
  %v764 = vmul.f32 %v762, 1.442695
  %v765 = vpow.pop %v764
  %v766 = vmul.f32 %v763, 1.442695
  %v767 = vpow.pop %v766
  %v768 = vsel %vm347, %v765, 0.0
  %769 = vadd.xlane.f32.xlu0 %v768
  %v770 = vpop.xlane.xlu0 %769
  %v771 = vsel %vm347, %v767, 0.0
  %772 = vadd.xlane.f32.xlu0 %v771
  %v773 = vpop.xlane.xlu0 %772
  %v774 = vrcp.pop %v770
  %v775 = vrcp.pop %v773
  %v776 = vmul.f32 %v765, %v774
  %v777 = vmul.f32 %v767, %v775
  %778 = vrot.lane.b32.xlu0 %v245, 48
  %v779 = vpop.permute.xlu0 %778
  %780 = vrot.lane.b32.xlu0 %v250, 48
  %v781 = vpop.permute.xlu0 %780
  %v785 = vsel %vm347, %v776, 0
  %v788 = vsel %vm347, %v777, 0
  %790 = vmatprep.subr.mxu0 0.0
  %791 = vmatpush1.msra.mxu0 0.0
  %792 = vmatprep.subr.mxu0 0.0
  %793 = vmatpush1.msra.mxu0 0.0
  %794 = vmatprep.subr.mxu0 0.0
  %795 = vmatpush1.msra.mxu0 0.0
  %796 = vmatprep.subr.mxu0 0.0
  %797 = vmatpush1.msra.mxu0 0.0
  %798 = vmatprep.subr.mxu0 0.0
  %799 = vmatpush1.msra.mxu0 0.0
  %800 = vmatprep.subr.mxu0 0.0
  %801 = vmatpush1.msra.mxu0 0.0
  %802 = vmatprep.subr.mxu0 0.0
  %803 = vmatpush1.msra.mxu0 0.0
  %804 = vmatprep.subr.mxu0 0.0
  %805 = vmatpush1.msra.mxu0 0.0
  %806 = vmatprep.subr.mxu0 0.0
  %807 = vmatpush1.msra.mxu0 0.0
  %808 = vmatprep.subr.mxu0 0.0
  %809 = vmatpush1.msra.mxu0 0.0
  %810 = vmatprep.subr.mxu0 0.0
  %811 = vmatpush1.msra.mxu0 0.0
  %812 = vmatprep.subr.mxu0 0.0
  %813 = vmatpush1.msra.mxu0 0.0
  %814 = vmatprep.subr.mxu0 0.0
  %815 = vmatpush1.msra.mxu0 0.0
  %816 = vmatprep.subr.mxu0 0.0
  %817 = vmatpush1.msra.mxu0 0.0
  %818 = vmatprep.subr.mxu0 0.0
  %819 = vmatpush1.msra.mxu0 %v781
  %820 = vmatprep.subr.mxu0 0.0
  %821 = vmatpush1.msra.mxu0 %v779
  %822 = vmatprep.subr.mxu0 0.0
  %823 = vmatpush2.msra.mxu0 0.0
  %824 = vmatprep.subr.mxu0 0.0
  %825 = vmatpush2.msra.mxu0 0.0
  %826 = vmatprep.subr.mxu0 0.0
  %827 = vmatpush2.msra.mxu0 0.0
  %828 = vmatprep.subr.mxu0 0.0
  %829 = vmatpush2.msra.mxu0 0.0
  %830 = vmatprep.subr.mxu0 0.0
  %831 = vmatpush2.msra.mxu0 0.0
  %832 = vmatprep.subr.mxu0 0.0
  %833 = vmatpush2.msra.mxu0 0.0
  %834 = vmatprep.subr.mxu0 0.0
  %835 = vmatpush2.msra.mxu0 0.0
  %836 = vmatprep.subr.mxu0 0.0
  %837 = vmatpush2.msra.mxu0 0.0
  %838 = vmatprep.subr.mxu0 0.0
  %839 = vmatpush2.msra.mxu0 0.0
  %840 = vmatprep.subr.mxu0 0.0
  %841 = vmatpush2.msra.mxu0 0.0
  %842 = vmatprep.subr.mxu0 0.0
  %843 = vmatpush2.msra.mxu0 0.0
  %844 = vmatprep.subr.mxu0 0.0
  %845 = vmatpush2.msra.mxu0 0.0
  %846 = vmatprep.subr.mxu0 0.0
  %847 = vmatpush2.msra.mxu0 0.0
  %848 = vmatprep.subr.mxu0 0.0
  %849 = vmatpush2.msra.mxu0 0.0
  %850 = vmatprep.subr.mxu0 0.0
  %851 = vmatpush2.msra.mxu0 0.0
  %852 = vmatprep.subr.mxu0 0.0
  %853 = vmatpush2.msra.mxu0 0.0
  %854 = vmatprep.mubr.f32.mxu0 0.0
  %855 = vmatmul.mubr.f32.gmra.mxu0 %v785
  %v856 = vpop.f32.mrf.mxu0
  %v857 = vadd.f32 0.0, %v856
  %v858 = vpop.f32.mrf.mxu0
  %859 = vmatprep.mubr.f32.mxu0 0.0
  %860 = vmatmul.mubr.f32.gmra.mxu0 %v788
  %v861 = vpop.f32.mrf.mxu0
  %v862 = vadd.f32 0.0, %v861
  %v863 = vpop.f32.mrf.mxu0
  %864 = vdwg.mxu0
  %865 = vrot.lane.b32.xlu0 %v245, 104
  %v866 = vpop.permute.xlu0 %865
  %867 = vrot.lane.b32.xlu0 %v250, 104
  %v868 = vpop.permute.xlu0 %867
  %869 = vrot.lane.b32.xlu0 %v245, 72
  %v870 = vpop.permute.xlu0 %869
  %871 = vrot.lane.b32.xlu0 %v250, 72
  %v872 = vpop.permute.xlu0 %871
  %v873 = vsel %vm259, %v866, 0
  %v875 = vsel %vm259, %v868, 0
  %v877 = vsel %vm259, %v870, 0
  %v879 = vsel %vm259, %v872, 0
  %881 = vmatprep.subr.mxu0 0.0
  %882 = vmatpush1.xpose.msra.mxu0 0.0
  %883 = vmatprep.subr.mxu0 0.0
  %884 = vmatpush1.xpose.msra.mxu0 0.0
  %885 = vmatprep.subr.mxu0 0.0
  %886 = vmatpush1.xpose.msra.mxu0 0.0
  %887 = vmatprep.subr.mxu0 0.0
  %888 = vmatpush1.xpose.msra.mxu0 0.0
  %889 = vmatprep.subr.mxu0 0.0
  %890 = vmatpush1.xpose.msra.mxu0 0.0
  %891 = vmatprep.subr.mxu0 0.0
  %892 = vmatpush1.xpose.msra.mxu0 0.0
  %893 = vmatprep.subr.mxu0 0.0
  %894 = vmatpush1.xpose.msra.mxu0 0.0
  %895 = vmatprep.subr.mxu0 0.0
  %896 = vmatpush1.xpose.msra.mxu0 0.0
  %897 = vmatprep.subr.mxu0 0.0
  %898 = vmatpush1.xpose.msra.mxu0 0.0
  %899 = vmatprep.subr.mxu0 0.0
  %900 = vmatpush1.xpose.msra.mxu0 0.0
  %901 = vmatprep.subr.mxu0 0.0
  %902 = vmatpush1.xpose.msra.mxu0 0.0
  %903 = vmatprep.subr.mxu0 0.0
  %904 = vmatpush1.xpose.msra.mxu0 0.0
  %905 = vmatprep.subr.mxu0 0.0
  %906 = vmatpush1.xpose.msra.mxu0 0.0
  %907 = vmatprep.subr.mxu0 0.0
  %908 = vmatpush1.xpose.msra.mxu0 0.0
  %909 = vmatprep.subr.mxu0 0.0
  %910 = vmatpush1.xpose.msra.mxu0 %v879
  %911 = vmatprep.subr.mxu0 0.0
  %912 = vmatpush1.xpose.msra.mxu0 %v877
  %913 = vmatprep.subr.mxu0 0.0
  %914 = vmatpush2.xpose.msra.mxu0 0.0
  %915 = vmatprep.subr.mxu0 0.0
  %916 = vmatpush2.xpose.msra.mxu0 0.0
  %917 = vmatprep.subr.mxu0 0.0
  %918 = vmatpush2.xpose.msra.mxu0 0.0
  %919 = vmatprep.subr.mxu0 0.0
  %920 = vmatpush2.xpose.msra.mxu0 0.0
  %921 = vmatprep.subr.mxu0 0.0
  %922 = vmatpush2.xpose.msra.mxu0 0.0
  %923 = vmatprep.subr.mxu0 0.0
  %924 = vmatpush2.xpose.msra.mxu0 0.0
  %925 = vmatprep.subr.mxu0 0.0
  %926 = vmatpush2.xpose.msra.mxu0 0.0
  %927 = vmatprep.subr.mxu0 0.0
  %928 = vmatpush2.xpose.msra.mxu0 0.0
  %929 = vmatprep.subr.mxu0 0.0
  %930 = vmatpush2.xpose.msra.mxu0 0.0
  %931 = vmatprep.subr.mxu0 0.0
  %932 = vmatpush2.xpose.msra.mxu0 0.0
  %933 = vmatprep.subr.mxu0 0.0
  %934 = vmatpush2.xpose.msra.mxu0 0.0
  %935 = vmatprep.subr.mxu0 0.0
  %936 = vmatpush2.xpose.msra.mxu0 0.0
  %937 = vmatprep.subr.mxu0 0.0
  %938 = vmatpush2.xpose.msra.mxu0 0.0
  %939 = vmatprep.subr.mxu0 0.0
  %940 = vmatpush2.xpose.msra.mxu0 0.0
  %941 = vmatprep.subr.mxu0 0.0
  %942 = vmatpush2.xpose.msra.mxu0 0.0
  %943 = vmatprep.subr.mxu0 0.0
  %944 = vmatpush2.xpose.msra.mxu0 0.0
  %945 = vmatprep.mubr.f32.mxu0 0.0
  %946 = vmatmul.mubr.f32.gmra.mxu0 %v873
  %v947 = vpop.f32.mrf.mxu0
  %v948 = vadd.f32 0.0, %v947
  %v949 = vpop.f32.mrf.mxu0
  %950 = vmatprep.mubr.f32.mxu0 0.0
  %951 = vmatmul.mubr.f32.gmra.mxu0 %v875
  %v952 = vpop.f32.mrf.mxu0
  %v953 = vadd.f32 0.0, %v952
  %v954 = vpop.f32.mrf.mxu0
  %955 = vdwg.mxu0
  %v956 = vmul.f32 %v948, 0.35355338
  %v957 = vmul.f32 %v953, 0.35355338
  %v958 = vadd.f32 %v956, %v38
  %v959 = vadd.f32 %v957, %v39
  %v960 = vsel %vm347, %v958, -inf
  %961 = vmax.xlane.f32.xlu0 %v960
  %v962 = vpop.xlane.xlu0 %961
  %v963 = vsel %vm347, %v959, -inf
  %964 = vmax.xlane.f32.xlu0 %v963
  %v965 = vpop.xlane.xlu0 %964
  %v966 = vsub.f32 %v958, %v962
  %v967 = vsub.f32 %v959, %v965
  %v968 = vmul.f32 %v966, 1.442695
  %v969 = vpow.pop %v968
  %v970 = vmul.f32 %v967, 1.442695
  %v971 = vpow.pop %v970
  %v972 = vsel %vm347, %v969, 0.0
  %973 = vadd.xlane.f32.xlu0 %v972
  %v974 = vpop.xlane.xlu0 %973
  %v975 = vsel %vm347, %v971, 0.0
  %976 = vadd.xlane.f32.xlu0 %v975
  %v977 = vpop.xlane.xlu0 %976
  %v978 = vrcp.pop %v974
  %v979 = vrcp.pop %v977
  %v980 = vmul.f32 %v969, %v978
  %v981 = vmul.f32 %v971, %v979
  %982 = vrot.lane.b32.xlu0 %v245, 40
  %v983 = vpop.permute.xlu0 %982
  %984 = vrot.lane.b32.xlu0 %v250, 40
  %v985 = vpop.permute.xlu0 %984
  %v989 = vsel %vm347, %v980, 0
  %v992 = vsel %vm347, %v981, 0
  %994 = vmatprep.subr.mxu0 0.0
  %995 = vmatpush1.msra.mxu0 0.0
  %996 = vmatprep.subr.mxu0 0.0
  %997 = vmatpush1.msra.mxu0 0.0
  %998 = vmatprep.subr.mxu0 0.0
  %999 = vmatpush1.msra.mxu0 0.0
  %1000 = vmatprep.subr.mxu0 0.0
  %1001 = vmatpush1.msra.mxu0 0.0
  %1002 = vmatprep.subr.mxu0 0.0
  %1003 = vmatpush1.msra.mxu0 0.0
  %1004 = vmatprep.subr.mxu0 0.0
  %1005 = vmatpush1.msra.mxu0 0.0
  %1006 = vmatprep.subr.mxu0 0.0
  %1007 = vmatpush1.msra.mxu0 0.0
  %1008 = vmatprep.subr.mxu0 0.0
  %1009 = vmatpush1.msra.mxu0 0.0
  %1010 = vmatprep.subr.mxu0 0.0
  %1011 = vmatpush1.msra.mxu0 0.0
  %1012 = vmatprep.subr.mxu0 0.0
  %1013 = vmatpush1.msra.mxu0 0.0
  %1014 = vmatprep.subr.mxu0 0.0
  %1015 = vmatpush1.msra.mxu0 0.0
  %1016 = vmatprep.subr.mxu0 0.0
  %1017 = vmatpush1.msra.mxu0 0.0
  %1018 = vmatprep.subr.mxu0 0.0
  %1019 = vmatpush1.msra.mxu0 0.0
  %1020 = vmatprep.subr.mxu0 0.0
  %1021 = vmatpush1.msra.mxu0 0.0
  %1022 = vmatprep.subr.mxu0 0.0
  %1023 = vmatpush1.msra.mxu0 %v985
  %1024 = vmatprep.subr.mxu0 0.0
  %1025 = vmatpush1.msra.mxu0 %v983
  %1026 = vmatprep.subr.mxu0 0.0
  %1027 = vmatpush2.msra.mxu0 0.0
  %1028 = vmatprep.subr.mxu0 0.0
  %1029 = vmatpush2.msra.mxu0 0.0
  %1030 = vmatprep.subr.mxu0 0.0
  %1031 = vmatpush2.msra.mxu0 0.0
  %1032 = vmatprep.subr.mxu0 0.0
  %1033 = vmatpush2.msra.mxu0 0.0
  %1034 = vmatprep.subr.mxu0 0.0
  %1035 = vmatpush2.msra.mxu0 0.0
  %1036 = vmatprep.subr.mxu0 0.0
  %1037 = vmatpush2.msra.mxu0 0.0
  %1038 = vmatprep.subr.mxu0 0.0
  %1039 = vmatpush2.msra.mxu0 0.0
  %1040 = vmatprep.subr.mxu0 0.0
  %1041 = vmatpush2.msra.mxu0 0.0
  %1042 = vmatprep.subr.mxu0 0.0
  %1043 = vmatpush2.msra.mxu0 0.0
  %1044 = vmatprep.subr.mxu0 0.0
  %1045 = vmatpush2.msra.mxu0 0.0
  %1046 = vmatprep.subr.mxu0 0.0
  %1047 = vmatpush2.msra.mxu0 0.0
  %1048 = vmatprep.subr.mxu0 0.0
  %1049 = vmatpush2.msra.mxu0 0.0
  %1050 = vmatprep.subr.mxu0 0.0
  %1051 = vmatpush2.msra.mxu0 0.0
  %1052 = vmatprep.subr.mxu0 0.0
  %1053 = vmatpush2.msra.mxu0 0.0
  %1054 = vmatprep.subr.mxu0 0.0
  %1055 = vmatpush2.msra.mxu0 0.0
  %1056 = vmatprep.subr.mxu0 0.0
  %1057 = vmatpush2.msra.mxu0 0.0
  %1058 = vmatprep.mubr.f32.mxu0 0.0
  %1059 = vmatmul.mubr.f32.gmra.mxu0 %v989
  %v1060 = vpop.f32.mrf.mxu0
  %v1061 = vadd.f32 0.0, %v1060
  %v1062 = vpop.f32.mrf.mxu0
  %1063 = vmatprep.mubr.f32.mxu0 0.0
  %1064 = vmatmul.mubr.f32.gmra.mxu0 %v992
  %v1065 = vpop.f32.mrf.mxu0
  %v1066 = vadd.f32 0.0, %v1065
  %v1067 = vpop.f32.mrf.mxu0
  %1068 = vdwg.mxu0
  %1071 = vrot.lane.b32.xlu0 %v653, 8
  %v1072 = vpop.permute.xlu0 %1071
  %1073 = vrot.lane.b32.xlu0 %v658, 8
  %v1074 = vpop.permute.xlu0 %1073
  %1079 = vrot.lane.b32.xlu0 %v857, 16
  %v1080 = vpop.permute.xlu0 %1079
  %1081 = vrot.lane.b32.xlu0 %v862, 16
  %v1082 = vpop.permute.xlu0 %1081
  %1087 = vrot.lane.b32.xlu0 %v1061, 24
  %v1088 = vpop.permute.xlu0 %1087
  %1089 = vrot.lane.b32.xlu0 %v1066, 24
  %v1090 = vpop.permute.xlu0 %1089
  %v1093 = vsel %vm259, %v449, %v1072
  %v1094 = vsel %vm259, %v454, %v1074
  %v1095 = vsel %vm347, %v1093, %v1080
  %v1096 = vsel %vm347, %v1094, %v1082
  %vm1097 = vcmask 195584
  %v1098 = vsel %vm1097, %v1095, %v1088
  %v1099 = vsel %vm1097, %v1096, %v1090
  %v1100 = vlaneseq
  %v1101 = vshrl.u32 %v1100, 7
  %v1102 = vsub.s32 1, %v1101
  %v1103 = vrot.slane %v166, %v1102
  %v1105 = vsel %vm171, %v1098, 0
  %v1108 = vsel %vm171, %v1099, 0
  %1110 = vmatprep.subr.mxu0 0.0
  %1111 = vmatpush1.msra.mxu0 0.0
  %1112 = vmatprep.subr.mxu0 0.0
  %1113 = vmatpush1.msra.mxu0 0.0
  %1114 = vmatprep.subr.mxu0 0.0
  %1115 = vmatpush1.msra.mxu0 0.0
  %1116 = vmatprep.subr.mxu0 0.0
  %1117 = vmatpush1.msra.mxu0 0.0
  %1118 = vmatprep.subr.mxu0 0.0
  %1119 = vmatpush1.msra.mxu0 0.0
  %1120 = vmatprep.subr.mxu0 0.0
  %1121 = vmatpush1.msra.mxu0 0.0
  %1122 = vmatprep.subr.mxu0 0.0
  %1123 = vmatpush1.msra.mxu0 0.0
  %1124 = vmatprep.subr.mxu0 0.0
  %1125 = vmatpush1.msra.mxu0 0.0
  %1126 = vmatprep.subr.mxu0 0.0
  %1127 = vmatpush1.msra.mxu0 0.0
  %1128 = vmatprep.subr.mxu0 0.0
  %1129 = vmatpush1.msra.mxu0 0.0
  %1130 = vmatprep.subr.mxu0 0.0
  %1131 = vmatpush1.msra.mxu0 0.0
  %1132 = vmatprep.subr.mxu0 0.0
  %1133 = vmatpush1.msra.mxu0 0.0
  %1134 = vmatprep.subr.mxu0 0.0
  %1135 = vmatpush1.msra.mxu0 %v145
  %1136 = vmatprep.subr.mxu0 0.0
  %1137 = vmatpush1.msra.mxu0 %v144
  %1138 = vmatprep.subr.mxu0 0.0
  %1139 = vmatpush1.msra.mxu0 %v143
  %1140 = vmatprep.subr.mxu0 0.0
  %1141 = vmatpush1.msra.mxu0 %v142
  %1142 = vmatprep.subr.mxu0 0.0
  %1143 = vmatpush2.msra.mxu0 0.0
  %1144 = vmatprep.subr.mxu0 0.0
  %1145 = vmatpush2.msra.mxu0 0.0
  %1146 = vmatprep.subr.mxu0 0.0
  %1147 = vmatpush2.msra.mxu0 0.0
  %1148 = vmatprep.subr.mxu0 0.0
  %1149 = vmatpush2.msra.mxu0 0.0
  %1150 = vmatprep.subr.mxu0 0.0
  %1151 = vmatpush2.msra.mxu0 0.0
  %1152 = vmatprep.subr.mxu0 0.0
  %1153 = vmatpush2.msra.mxu0 0.0
  %1154 = vmatprep.subr.mxu0 0.0
  %1155 = vmatpush2.msra.mxu0 0.0
  %1156 = vmatprep.subr.mxu0 0.0
  %1157 = vmatpush2.msra.mxu0 0.0
  %1158 = vmatprep.subr.mxu0 0.0
  %1159 = vmatpush2.msra.mxu0 0.0
  %1160 = vmatprep.subr.mxu0 0.0
  %1161 = vmatpush2.msra.mxu0 0.0
  %1162 = vmatprep.subr.mxu0 0.0
  %1163 = vmatpush2.msra.mxu0 0.0
  %1164 = vmatprep.subr.mxu0 0.0
  %1165 = vmatpush2.msra.mxu0 0.0
  %1166 = vmatprep.subr.mxu0 0.0
  %1167 = vmatpush2.msra.mxu0 0.0
  %1168 = vmatprep.subr.mxu0 0.0
  %1169 = vmatpush2.msra.mxu0 0.0
  %1170 = vmatprep.subr.mxu0 0.0
  %1171 = vmatpush2.msra.mxu0 0.0
  %1172 = vmatprep.subr.mxu0 0.0
  %1173 = vmatpush2.msra.mxu0 0.0
  %1174 = vmatprep.mubr.f32.mxu0 0.0
  %1175 = vmatmul.mubr.f32.gmra.mxu0 %v1105
  %v1176 = vpop.f32.mrf.mxu0
  %v1177 = vadd.f32 %v1103, %v1176
  %v1178 = vpop.f32.mrf.mxu0
  %1179 = vmatprep.mubr.f32.mxu0 0.0
  %1180 = vmatmul.mubr.f32.gmra.mxu0 %v1108
  %v1181 = vpop.f32.mrf.mxu0
  %v1182 = vadd.f32 %v1103, %v1181
  %v1183 = vpop.f32.mrf.mxu0
  %1184 = vdwg.mxu0
  %v1185 = vadd.f32 %v130, %v1177
  %v1186 = vadd.f32 %v135, %v1182
  %v1187 = vsel %vm171, %v1185, 0.0
  %1188 = vadd.xlane.f32.xlu0 %v1187
  %v1189 = vpop.xlane.xlu0 %1188
  %v1190 = vsel %vm171, %v1186, 0.0
  %1191 = vadd.xlane.f32.xlu0 %v1190
  %v1192 = vpop.xlane.xlu0 %1191
  %v1193 = vrcp.pop 32.0
  %v1194 = vmul.f32 %v1189, %v1193
  %v1195 = vmul.f32 %v1192, %v1193
  %v1196 = vsub.f32 %v1185, %v1194
  %v1197 = vsub.f32 %v1186, %v1195
  %v1198 = vmul.f32 %v1196, %v1196
  %v1199 = vmul.f32 %v1197, %v1197
  %v1200 = vsel %vm171, %v1198, 0.0
  %1201 = vadd.xlane.f32.xlu0 %v1200
  %v1202 = vpop.xlane.xlu0 %1201
  %v1203 = vsel %vm171, %v1199, 0.0
  %1204 = vadd.xlane.f32.xlu0 %v1203
  %v1205 = vpop.xlane.xlu0 %1204
  %v1206 = vmul.f32 %v1202, %v1193
  %v1207 = vmul.f32 %v1205, %v1193
  %v1208 = vadd.f32 %v1206, 1e-05
  %v1209 = vadd.f32 %v1207, 1e-05
  %v1210 = vrsqrt.pop %v1208
  %v1211 = vrsqrt.pop %v1209
  %v1212 = vmul.f32 %v1196, %v1210
  %v1213 = vmul.f32 %v1197, %v1211
  %v1214 = vlaneseq
  %v1215 = vshrl.u32 %v1214, 7
  %v1216 = vsub.s32 2, %v1215
  %v1217 = vrot.slane %v166, %v1216
  %v1218 = vmul.f32 %v1212, %v1217
  %v1219 = vmul.f32 %v1213, %v1217
  %v1220 = vlaneseq
  %v1221 = vshrl.u32 %v1220, 7
  %v1222 = vsub.s32 3, %v1221
  %v1223 = vrot.slane %v166, %v1222
  %v1224 = vadd.f32 %v1218, %v1223
  %v1225 = vadd.f32 %v1219, %v1223
  %v1226 = vlaneseq
  %v1227 = vshrl.u32 %v1226, 7
  %v1228 = vsub.s32 4, %v1227
  %v1229 = vrot.slane %v166, %v1228
  %v1231 = vsel %vm171, %v1224, 0
  %v1234 = vsel %vm171, %v1225, 0
  %1236 = vmatprep.subr.mxu0 0.0
  %1237 = vmatpush1.msra.mxu0 0.0
  %1238 = vmatprep.subr.mxu0 0.0
  %1239 = vmatpush1.msra.mxu0 0.0
  %1240 = vmatprep.subr.mxu0 0.0
  %1241 = vmatpush1.msra.mxu0 0.0
  %1242 = vmatprep.subr.mxu0 0.0
  %1243 = vmatpush1.msra.mxu0 0.0
  %1244 = vmatprep.subr.mxu0 0.0
  %1245 = vmatpush1.msra.mxu0 0.0
  %1246 = vmatprep.subr.mxu0 0.0
  %1247 = vmatpush1.msra.mxu0 0.0
  %1248 = vmatprep.subr.mxu0 0.0
  %1249 = vmatpush1.msra.mxu0 0.0
  %1250 = vmatprep.subr.mxu0 0.0
  %1251 = vmatpush1.msra.mxu0 0.0
  %1252 = vmatprep.subr.mxu0 0.0
  %1253 = vmatpush1.msra.mxu0 0.0
  %1254 = vmatprep.subr.mxu0 0.0
  %1255 = vmatpush1.msra.mxu0 0.0
  %1256 = vmatprep.subr.mxu0 0.0
  %1257 = vmatpush1.msra.mxu0 0.0
  %1258 = vmatprep.subr.mxu0 0.0
  %1259 = vmatpush1.msra.mxu0 0.0
  %1260 = vmatprep.subr.mxu0 0.0
  %1261 = vmatpush1.msra.mxu0 %v149
  %1262 = vmatprep.subr.mxu0 0.0
  %1263 = vmatpush1.msra.mxu0 %v148
  %1264 = vmatprep.subr.mxu0 0.0
  %1265 = vmatpush1.msra.mxu0 %v147
  %1266 = vmatprep.subr.mxu0 0.0
  %1267 = vmatpush1.msra.mxu0 %v146
  %1268 = vmatprep.subr.mxu0 0.0
  %1269 = vmatpush2.msra.mxu0 0.0
  %1270 = vmatprep.subr.mxu0 0.0
  %1271 = vmatpush2.msra.mxu0 0.0
  %1272 = vmatprep.subr.mxu0 0.0
  %1273 = vmatpush2.msra.mxu0 0.0
  %1274 = vmatprep.subr.mxu0 0.0
  %1275 = vmatpush2.msra.mxu0 0.0
  %1276 = vmatprep.subr.mxu0 0.0
  %1277 = vmatpush2.msra.mxu0 0.0
  %1278 = vmatprep.subr.mxu0 0.0
  %1279 = vmatpush2.msra.mxu0 0.0
  %1280 = vmatprep.subr.mxu0 0.0
  %1281 = vmatpush2.msra.mxu0 0.0
  %1282 = vmatprep.subr.mxu0 0.0
  %1283 = vmatpush2.msra.mxu0 0.0
  %1284 = vmatprep.subr.mxu0 0.0
  %1285 = vmatpush2.msra.mxu0 0.0
  %1286 = vmatprep.subr.mxu0 0.0
  %1287 = vmatpush2.msra.mxu0 0.0
  %1288 = vmatprep.subr.mxu0 0.0
  %1289 = vmatpush2.msra.mxu0 0.0
  %1290 = vmatprep.subr.mxu0 0.0
  %1291 = vmatpush2.msra.mxu0 0.0
  %1292 = vmatprep.subr.mxu0 0.0
  %1293 = vmatpush2.msra.mxu0 0.0
  %1294 = vmatprep.subr.mxu0 0.0
  %1295 = vmatpush2.msra.mxu0 0.0
  %1296 = vmatprep.subr.mxu0 0.0
  %1297 = vmatpush2.msra.mxu0 0.0
  %1298 = vmatprep.subr.mxu0 0.0
  %1299 = vmatpush2.msra.mxu0 0.0
  %1300 = vmatprep.mubr.f32.mxu0 0.0
  %1301 = vmatmul.mubr.f32.gmra.mxu0 %v1231
  %v1302 = vpop.f32.mrf.mxu0
  %v1303 = vadd.f32 %v1229, %v1302
  %v1304 = vpop.f32.mrf.mxu0
  %1305 = vmatprep.mubr.f32.mxu0 0.0
  %1306 = vmatmul.mubr.f32.gmra.mxu0 %v1234
  %v1307 = vpop.f32.mrf.mxu0
  %v1308 = vadd.f32 %v1229, %v1307
  %v1309 = vpop.f32.mrf.mxu0
  %1310 = vdwg.mxu0
  %v1311 = vmax.f32 %v1303, 0.0
  %v1312 = vmax.f32 %v1308, 0.0
  %v1313 = vlaneseq
  %v1314 = vshrl.u32 %v1313, 7
  %v1315 = vsub.s32 5, %v1314
  %v1316 = vrot.slane %v166, %v1315
  %1317 = vmatprep.subr.mxu0 0.0
  %1318 = vmatpush1.msra.mxu0 %v165
  %1319 = vmatprep.subr.mxu0 0.0
  %1320 = vmatpush1.msra.mxu0 %v164
  %1321 = vmatprep.subr.mxu0 0.0
  %1322 = vmatpush1.msra.mxu0 %v163
  %1323 = vmatprep.subr.mxu0 0.0
  %1324 = vmatpush1.msra.mxu0 %v162
  %1325 = vmatprep.subr.mxu0 0.0
  %1326 = vmatpush1.msra.mxu0 %v161
  %1327 = vmatprep.subr.mxu0 0.0
  %1328 = vmatpush1.msra.mxu0 %v160
  %1329 = vmatprep.subr.mxu0 0.0
  %1330 = vmatpush1.msra.mxu0 %v159
  %1331 = vmatprep.subr.mxu0 0.0
  %1332 = vmatpush1.msra.mxu0 %v158
  %1333 = vmatprep.subr.mxu0 0.0
  %1334 = vmatpush1.msra.mxu0 %v157
  %1335 = vmatprep.subr.mxu0 0.0
  %1336 = vmatpush1.msra.mxu0 %v156
  %1337 = vmatprep.subr.mxu0 0.0
  %1338 = vmatpush1.msra.mxu0 %v155
  %1339 = vmatprep.subr.mxu0 0.0
  %1340 = vmatpush1.msra.mxu0 %v154
  %1341 = vmatprep.subr.mxu0 0.0
  %1342 = vmatpush1.msra.mxu0 %v153
  %1343 = vmatprep.subr.mxu0 0.0
  %1344 = vmatpush1.msra.mxu0 %v152
  %1345 = vmatprep.subr.mxu0 0.0
  %1346 = vmatpush1.msra.mxu0 %v151
  %1347 = vmatprep.subr.mxu0 0.0
  %1348 = vmatpush1.msra.mxu0 %v150
  %1349 = vmatprep.subr.mxu0 0.0
  %1350 = vmatpush2.msra.mxu0 0.0
  %1351 = vmatprep.subr.mxu0 0.0
  %1352 = vmatpush2.msra.mxu0 0.0
  %1353 = vmatprep.subr.mxu0 0.0
  %1354 = vmatpush2.msra.mxu0 0.0
  %1355 = vmatprep.subr.mxu0 0.0
  %1356 = vmatpush2.msra.mxu0 0.0
  %1357 = vmatprep.subr.mxu0 0.0
  %1358 = vmatpush2.msra.mxu0 0.0
  %1359 = vmatprep.subr.mxu0 0.0
  %1360 = vmatpush2.msra.mxu0 0.0
  %1361 = vmatprep.subr.mxu0 0.0
  %1362 = vmatpush2.msra.mxu0 0.0
  %1363 = vmatprep.subr.mxu0 0.0
  %1364 = vmatpush2.msra.mxu0 0.0
  %1365 = vmatprep.subr.mxu0 0.0
  %1366 = vmatpush2.msra.mxu0 0.0
  %1367 = vmatprep.subr.mxu0 0.0
  %1368 = vmatpush2.msra.mxu0 0.0
  %1369 = vmatprep.subr.mxu0 0.0
  %1370 = vmatpush2.msra.mxu0 0.0
  %1371 = vmatprep.subr.mxu0 0.0
  %1372 = vmatpush2.msra.mxu0 0.0
  %1373 = vmatprep.subr.mxu0 0.0
  %1374 = vmatpush2.msra.mxu0 0.0
  %1375 = vmatprep.subr.mxu0 0.0
  %1376 = vmatpush2.msra.mxu0 0.0
  %1377 = vmatprep.subr.mxu0 0.0
  %1378 = vmatpush2.msra.mxu0 0.0
  %1379 = vmatprep.subr.mxu0 0.0
  %1380 = vmatpush2.msra.mxu0 0.0
  %1381 = vmatprep.mubr.f32.mxu0 0.0
  %1382 = vmatmul.mubr.f32.gmra.mxu0 %v1311
  %v1383 = vpop.f32.mrf.mxu0
  %v1384 = vadd.f32 %v1316, %v1383
  %v1385 = vpop.f32.mrf.mxu0
  %1386 = vmatprep.mubr.f32.mxu0 0.0
  %1387 = vmatmul.mubr.f32.gmra.mxu0 %v1312
  %v1388 = vpop.f32.mrf.mxu0
  %v1389 = vadd.f32 %v1316, %v1388
  %v1390 = vpop.f32.mrf.mxu0
  %1391 = vdwg.mxu0
  %v1392 = vadd.f32 %v1224, %v1384
  %v1393 = vadd.f32 %v1225, %v1389
  %v1394 = vsel %vm171, %v1392, 0.0
  %1395 = vadd.xlane.f32.xlu0 %v1394
  %v1396 = vpop.xlane.xlu0 %1395
  %v1397 = vsel %vm171, %v1393, 0.0
  %1398 = vadd.xlane.f32.xlu0 %v1397
  %v1399 = vpop.xlane.xlu0 %1398
  %v1400 = vmul.f32 %v1396, %v1193
  %v1401 = vmul.f32 %v1399, %v1193
  %v1402 = vsub.f32 %v1392, %v1400
  %v1403 = vsub.f32 %v1393, %v1401
  %v1404 = vmul.f32 %v1402, %v1402
  %v1405 = vmul.f32 %v1403, %v1403
  %v1406 = vsel %vm171, %v1404, 0.0
  %1407 = vadd.xlane.f32.xlu0 %v1406
  %v1408 = vpop.xlane.xlu0 %1407
  %v1409 = vsel %vm171, %v1405, 0.0
  %1410 = vadd.xlane.f32.xlu0 %v1409
  %v1411 = vpop.xlane.xlu0 %1410
  %v1412 = vmul.f32 %v1408, %v1193
  %v1413 = vmul.f32 %v1411, %v1193
  %v1414 = vadd.f32 %v1412, 1e-05
  %v1415 = vadd.f32 %v1413, 1e-05
  %v1416 = vrsqrt.pop %v1414
  %v1417 = vrsqrt.pop %v1415
  %v1418 = vmul.f32 %v1402, %v1416
  %v1419 = vmul.f32 %v1403, %v1417
  %v1420 = vlaneseq
  %v1421 = vshrl.u32 %v1420, 7
  %v1422 = vsub.s32 6, %v1421
  %v1423 = vrot.slane %v166, %v1422
  %v1424 = vmul.f32 %v1418, %v1423
  %v1425 = vmul.f32 %v1419, %v1423
  %v1426 = vlaneseq
  %v1427 = vshrl.u32 %v1426, 7
  %v1428 = vsub.s32 7, %v1427
  %v1429 = vrot.slane %v166, %v1428
  %v1430 = vadd.f32 %v1424, %v1429
  %v1431 = vadd.f32 %v1425, %v1429
  %s1432 = scalar_lea.vmem %s4, 32
  %v1433 = vld [vmem:[%s1432] sm:$0xff]
  %v1434 = vld [vmem:[%s1432 + $0x8] sm:$0xff]
  %v1435 = vld [vmem:[%s1432 + $0x10] sm:$0xff]
  %v1436 = vld [vmem:[%s1432 + $0x18] sm:$0xff]
  %s1437 = scalar_lea.vmem %s5, 32
  %v1438 = vld [vmem:[%s1437] sm:$0xff]
  %v1439 = vld [vmem:[%s1437 + $0x8] sm:$0xff]
  %v1440 = vld [vmem:[%s1437 + $0x10] sm:$0xff]
  %v1441 = vld [vmem:[%s1437 + $0x18] sm:$0xff]
  %s1442 = scalar_lea.vmem %s6, 32
  %v1443 = vld [vmem:[%s1442] sm:$0xff]
  %v1444 = vld [vmem:[%s1442 + $0x8] sm:$0xff]
  %v1445 = vld [vmem:[%s1442 + $0x10] sm:$0xff]
  %v1446 = vld [vmem:[%s1442 + $0x18] sm:$0xff]
  %s1447 = scalar_lea.vmem %s7, 128
  %v1448 = vld [vmem:[%s1447] sm:$0xff]
  %v1449 = vld [vmem:[%s1447 + $0x8] sm:$0xff]
  %v1450 = vld [vmem:[%s1447 + $0x10] sm:$0xff]
  %v1451 = vld [vmem:[%s1447 + $0x18] sm:$0xff]
  %v1452 = vld [vmem:[%s1447 + $0x20] sm:$0xff]
  %v1453 = vld [vmem:[%s1447 + $0x28] sm:$0xff]
  %v1454 = vld [vmem:[%s1447 + $0x30] sm:$0xff]
  %v1455 = vld [vmem:[%s1447 + $0x38] sm:$0xff]
  %v1456 = vld [vmem:[%s1447 + $0x40] sm:$0xff]
  %v1457 = vld [vmem:[%s1447 + $0x48] sm:$0xff]
  %v1458 = vld [vmem:[%s1447 + $0x50] sm:$0xff]
  %v1459 = vld [vmem:[%s1447 + $0x58] sm:$0xff]
  %v1460 = vld [vmem:[%s1447 + $0x60] sm:$0xff]
  %v1461 = vld [vmem:[%s1447 + $0x68] sm:$0xff]
  %v1462 = vld [vmem:[%s1447 + $0x70] sm:$0xff]
  %v1463 = vld [vmem:[%s1447 + $0x78] sm:$0xff]
  %s1464 = scalar_lea.vmem %s8, 8
  %v1465 = vld [vmem:[%s1464] sm:$0xff]
  %v1466 = vlaneseq
  %v1467 = vshrl.u32 %v1466, 7
  %v1468 = vsub.s32 0, %v1467
  %v1469 = vrot.slane %v1465, %v1468
  %v1471 = vsel %vm171, %v1430, 0
  %v1474 = vsel %vm171, %v1431, 0
  %1476 = vmatprep.subr.mxu0 0.0
  %1477 = vmatpush1.msra.mxu0 0.0
  %1478 = vmatprep.subr.mxu0 0.0
  %1479 = vmatpush1.msra.mxu0 0.0
  %1480 = vmatprep.subr.mxu0 0.0
  %1481 = vmatpush1.msra.mxu0 0.0
  %1482 = vmatprep.subr.mxu0 0.0
  %1483 = vmatpush1.msra.mxu0 0.0
  %1484 = vmatprep.subr.mxu0 0.0
  %1485 = vmatpush1.msra.mxu0 0.0
  %1486 = vmatprep.subr.mxu0 0.0
  %1487 = vmatpush1.msra.mxu0 0.0
  %1488 = vmatprep.subr.mxu0 0.0
  %1489 = vmatpush1.msra.mxu0 0.0
  %1490 = vmatprep.subr.mxu0 0.0
  %1491 = vmatpush1.msra.mxu0 0.0
  %1492 = vmatprep.subr.mxu0 0.0
  %1493 = vmatpush1.msra.mxu0 0.0
  %1494 = vmatprep.subr.mxu0 0.0
  %1495 = vmatpush1.msra.mxu0 0.0
  %1496 = vmatprep.subr.mxu0 0.0
  %1497 = vmatpush1.msra.mxu0 0.0
  %1498 = vmatprep.subr.mxu0 0.0
  %1499 = vmatpush1.msra.mxu0 0.0
  %1500 = vmatprep.subr.mxu0 0.0
  %1501 = vmatpush1.msra.mxu0 %v1436
  %1502 = vmatprep.subr.mxu0 0.0
  %1503 = vmatpush1.msra.mxu0 %v1435
  %1504 = vmatprep.subr.mxu0 0.0
  %1505 = vmatpush1.msra.mxu0 %v1434
  %1506 = vmatprep.subr.mxu0 0.0
  %1507 = vmatpush1.msra.mxu0 %v1433
  %1508 = vmatprep.subr.mxu0 0.0
  %1509 = vmatpush2.msra.mxu0 0.0
  %1510 = vmatprep.subr.mxu0 0.0
  %1511 = vmatpush2.msra.mxu0 0.0
  %1512 = vmatprep.subr.mxu0 0.0
  %1513 = vmatpush2.msra.mxu0 0.0
  %1514 = vmatprep.subr.mxu0 0.0
  %1515 = vmatpush2.msra.mxu0 0.0
  %1516 = vmatprep.subr.mxu0 0.0
  %1517 = vmatpush2.msra.mxu0 0.0
  %1518 = vmatprep.subr.mxu0 0.0
  %1519 = vmatpush2.msra.mxu0 0.0
  %1520 = vmatprep.subr.mxu0 0.0
  %1521 = vmatpush2.msra.mxu0 0.0
  %1522 = vmatprep.subr.mxu0 0.0
  %1523 = vmatpush2.msra.mxu0 0.0
  %1524 = vmatprep.subr.mxu0 0.0
  %1525 = vmatpush2.msra.mxu0 0.0
  %1526 = vmatprep.subr.mxu0 0.0
  %1527 = vmatpush2.msra.mxu0 0.0
  %1528 = vmatprep.subr.mxu0 0.0
  %1529 = vmatpush2.msra.mxu0 0.0
  %1530 = vmatprep.subr.mxu0 0.0
  %1531 = vmatpush2.msra.mxu0 0.0
  %1532 = vmatprep.subr.mxu0 0.0
  %1533 = vmatpush2.msra.mxu0 0.0
  %1534 = vmatprep.subr.mxu0 0.0
  %1535 = vmatpush2.msra.mxu0 0.0
  %1536 = vmatprep.subr.mxu0 0.0
  %1537 = vmatpush2.msra.mxu0 0.0
  %1538 = vmatprep.subr.mxu0 0.0
  %1539 = vmatpush2.msra.mxu0 0.0
  %1540 = vmatprep.mubr.f32.mxu0 0.0
  %1541 = vmatmul.mubr.f32.gmra.mxu0 %v1471
  %v1542 = vpop.f32.mrf.mxu0
  %v1543 = vadd.f32 %v1469, %v1542
  %v1544 = vpop.f32.mrf.mxu0
  %1545 = vmatprep.mubr.f32.mxu0 0.0
  %1546 = vmatmul.mubr.f32.gmra.mxu0 %v1474
  %v1547 = vpop.f32.mrf.mxu0
  %v1548 = vadd.f32 %v1469, %v1547
  %v1549 = vpop.f32.mrf.mxu0
  %1550 = vdwg.mxu0
  %1553 = vrot.lane.b32.xlu0 %v1543, 96
  %v1554 = vpop.permute.xlu0 %1553
  %1555 = vrot.lane.b32.xlu0 %v1548, 96
  %v1556 = vpop.permute.xlu0 %1555
  %v1557 = vsel %vm259, %v1543, 0
  %v1559 = vsel %vm259, %v1548, 0
  %v1561 = vsel %vm259, %v1554, 0
  %v1563 = vsel %vm259, %v1556, 0
  %1565 = vmatprep.subr.mxu0 0.0
  %1566 = vmatpush1.xpose.msra.mxu0 0.0
  %1567 = vmatprep.subr.mxu0 0.0
  %1568 = vmatpush1.xpose.msra.mxu0 0.0
  %1569 = vmatprep.subr.mxu0 0.0
  %1570 = vmatpush1.xpose.msra.mxu0 0.0
  %1571 = vmatprep.subr.mxu0 0.0
  %1572 = vmatpush1.xpose.msra.mxu0 0.0
  %1573 = vmatprep.subr.mxu0 0.0
  %1574 = vmatpush1.xpose.msra.mxu0 0.0
  %1575 = vmatprep.subr.mxu0 0.0
  %1576 = vmatpush1.xpose.msra.mxu0 0.0
  %1577 = vmatprep.subr.mxu0 0.0
  %1578 = vmatpush1.xpose.msra.mxu0 0.0
  %1579 = vmatprep.subr.mxu0 0.0
  %1580 = vmatpush1.xpose.msra.mxu0 0.0
  %1581 = vmatprep.subr.mxu0 0.0
  %1582 = vmatpush1.xpose.msra.mxu0 0.0
  %1583 = vmatprep.subr.mxu0 0.0
  %1584 = vmatpush1.xpose.msra.mxu0 0.0
  %1585 = vmatprep.subr.mxu0 0.0
  %1586 = vmatpush1.xpose.msra.mxu0 0.0
  %1587 = vmatprep.subr.mxu0 0.0
  %1588 = vmatpush1.xpose.msra.mxu0 0.0
  %1589 = vmatprep.subr.mxu0 0.0
  %1590 = vmatpush1.xpose.msra.mxu0 0.0
  %1591 = vmatprep.subr.mxu0 0.0
  %1592 = vmatpush1.xpose.msra.mxu0 0.0
  %1593 = vmatprep.subr.mxu0 0.0
  %1594 = vmatpush1.xpose.msra.mxu0 %v1563
  %1595 = vmatprep.subr.mxu0 0.0
  %1596 = vmatpush1.xpose.msra.mxu0 %v1561
  %1597 = vmatprep.subr.mxu0 0.0
  %1598 = vmatpush2.xpose.msra.mxu0 0.0
  %1599 = vmatprep.subr.mxu0 0.0
  %1600 = vmatpush2.xpose.msra.mxu0 0.0
  %1601 = vmatprep.subr.mxu0 0.0
  %1602 = vmatpush2.xpose.msra.mxu0 0.0
  %1603 = vmatprep.subr.mxu0 0.0
  %1604 = vmatpush2.xpose.msra.mxu0 0.0
  %1605 = vmatprep.subr.mxu0 0.0
  %1606 = vmatpush2.xpose.msra.mxu0 0.0
  %1607 = vmatprep.subr.mxu0 0.0
  %1608 = vmatpush2.xpose.msra.mxu0 0.0
  %1609 = vmatprep.subr.mxu0 0.0
  %1610 = vmatpush2.xpose.msra.mxu0 0.0
  %1611 = vmatprep.subr.mxu0 0.0
  %1612 = vmatpush2.xpose.msra.mxu0 0.0
  %1613 = vmatprep.subr.mxu0 0.0
  %1614 = vmatpush2.xpose.msra.mxu0 0.0
  %1615 = vmatprep.subr.mxu0 0.0
  %1616 = vmatpush2.xpose.msra.mxu0 0.0
  %1617 = vmatprep.subr.mxu0 0.0
  %1618 = vmatpush2.xpose.msra.mxu0 0.0
  %1619 = vmatprep.subr.mxu0 0.0
  %1620 = vmatpush2.xpose.msra.mxu0 0.0
  %1621 = vmatprep.subr.mxu0 0.0
  %1622 = vmatpush2.xpose.msra.mxu0 0.0
  %1623 = vmatprep.subr.mxu0 0.0
  %1624 = vmatpush2.xpose.msra.mxu0 0.0
  %1625 = vmatprep.subr.mxu0 0.0
  %1626 = vmatpush2.xpose.msra.mxu0 0.0
  %1627 = vmatprep.subr.mxu0 0.0
  %1628 = vmatpush2.xpose.msra.mxu0 0.0
  %1629 = vmatprep.mubr.f32.mxu0 0.0
  %1630 = vmatmul.mubr.f32.gmra.mxu0 %v1557
  %v1631 = vpop.f32.mrf.mxu0
  %v1632 = vadd.f32 0.0, %v1631
  %v1633 = vpop.f32.mrf.mxu0
  %1634 = vmatprep.mubr.f32.mxu0 0.0
  %1635 = vmatmul.mubr.f32.gmra.mxu0 %v1559
  %v1636 = vpop.f32.mrf.mxu0
  %v1637 = vadd.f32 0.0, %v1636
  %v1638 = vpop.f32.mrf.mxu0
  %1639 = vdwg.mxu0
  %v1640 = vmul.f32 %v1632, 0.35355338
  %v1641 = vmul.f32 %v1637, 0.35355338
  %v1642 = vadd.f32 %v1640, %v38
  %v1643 = vadd.f32 %v1641, %v39
  %v1644 = vsel %vm347, %v1642, -inf
  %1645 = vmax.xlane.f32.xlu0 %v1644
  %v1646 = vpop.xlane.xlu0 %1645
  %v1647 = vsel %vm347, %v1643, -inf
  %1648 = vmax.xlane.f32.xlu0 %v1647
  %v1649 = vpop.xlane.xlu0 %1648
  %v1650 = vsub.f32 %v1642, %v1646
  %v1651 = vsub.f32 %v1643, %v1649
  %v1652 = vmul.f32 %v1650, 1.442695
  %v1653 = vpow.pop %v1652
  %v1654 = vmul.f32 %v1651, 1.442695
  %v1655 = vpow.pop %v1654
  %v1656 = vsel %vm347, %v1653, 0.0
  %1657 = vadd.xlane.f32.xlu0 %v1656
  %v1658 = vpop.xlane.xlu0 %1657
  %v1659 = vsel %vm347, %v1655, 0.0
  %1660 = vadd.xlane.f32.xlu0 %v1659
  %v1661 = vpop.xlane.xlu0 %1660
  %v1662 = vrcp.pop %v1658
  %v1663 = vrcp.pop %v1661
  %v1664 = vmul.f32 %v1653, %v1662
  %v1665 = vmul.f32 %v1655, %v1663
  %1666 = vrot.lane.b32.xlu0 %v1543, 64
  %v1667 = vpop.permute.xlu0 %1666
  %1668 = vrot.lane.b32.xlu0 %v1548, 64
  %v1669 = vpop.permute.xlu0 %1668
  %v1673 = vsel %vm347, %v1664, 0
  %v1676 = vsel %vm347, %v1665, 0
  %1678 = vmatprep.subr.mxu0 0.0
  %1679 = vmatpush1.msra.mxu0 0.0
  %1680 = vmatprep.subr.mxu0 0.0
  %1681 = vmatpush1.msra.mxu0 0.0
  %1682 = vmatprep.subr.mxu0 0.0
  %1683 = vmatpush1.msra.mxu0 0.0
  %1684 = vmatprep.subr.mxu0 0.0
  %1685 = vmatpush1.msra.mxu0 0.0
  %1686 = vmatprep.subr.mxu0 0.0
  %1687 = vmatpush1.msra.mxu0 0.0
  %1688 = vmatprep.subr.mxu0 0.0
  %1689 = vmatpush1.msra.mxu0 0.0
  %1690 = vmatprep.subr.mxu0 0.0
  %1691 = vmatpush1.msra.mxu0 0.0
  %1692 = vmatprep.subr.mxu0 0.0
  %1693 = vmatpush1.msra.mxu0 0.0
  %1694 = vmatprep.subr.mxu0 0.0
  %1695 = vmatpush1.msra.mxu0 0.0
  %1696 = vmatprep.subr.mxu0 0.0
  %1697 = vmatpush1.msra.mxu0 0.0
  %1698 = vmatprep.subr.mxu0 0.0
  %1699 = vmatpush1.msra.mxu0 0.0
  %1700 = vmatprep.subr.mxu0 0.0
  %1701 = vmatpush1.msra.mxu0 0.0
  %1702 = vmatprep.subr.mxu0 0.0
  %1703 = vmatpush1.msra.mxu0 0.0
  %1704 = vmatprep.subr.mxu0 0.0
  %1705 = vmatpush1.msra.mxu0 0.0
  %1706 = vmatprep.subr.mxu0 0.0
  %1707 = vmatpush1.msra.mxu0 %v1669
  %1708 = vmatprep.subr.mxu0 0.0
  %1709 = vmatpush1.msra.mxu0 %v1667
  %1710 = vmatprep.subr.mxu0 0.0
  %1711 = vmatpush2.msra.mxu0 0.0
  %1712 = vmatprep.subr.mxu0 0.0
  %1713 = vmatpush2.msra.mxu0 0.0
  %1714 = vmatprep.subr.mxu0 0.0
  %1715 = vmatpush2.msra.mxu0 0.0
  %1716 = vmatprep.subr.mxu0 0.0
  %1717 = vmatpush2.msra.mxu0 0.0
  %1718 = vmatprep.subr.mxu0 0.0
  %1719 = vmatpush2.msra.mxu0 0.0
  %1720 = vmatprep.subr.mxu0 0.0
  %1721 = vmatpush2.msra.mxu0 0.0
  %1722 = vmatprep.subr.mxu0 0.0
  %1723 = vmatpush2.msra.mxu0 0.0
  %1724 = vmatprep.subr.mxu0 0.0
  %1725 = vmatpush2.msra.mxu0 0.0
  %1726 = vmatprep.subr.mxu0 0.0
  %1727 = vmatpush2.msra.mxu0 0.0
  %1728 = vmatprep.subr.mxu0 0.0
  %1729 = vmatpush2.msra.mxu0 0.0
  %1730 = vmatprep.subr.mxu0 0.0
  %1731 = vmatpush2.msra.mxu0 0.0
  %1732 = vmatprep.subr.mxu0 0.0
  %1733 = vmatpush2.msra.mxu0 0.0
  %1734 = vmatprep.subr.mxu0 0.0
  %1735 = vmatpush2.msra.mxu0 0.0
  %1736 = vmatprep.subr.mxu0 0.0
  %1737 = vmatpush2.msra.mxu0 0.0
  %1738 = vmatprep.subr.mxu0 0.0
  %1739 = vmatpush2.msra.mxu0 0.0
  %1740 = vmatprep.subr.mxu0 0.0
  %1741 = vmatpush2.msra.mxu0 0.0
  %1742 = vmatprep.mubr.f32.mxu0 0.0
  %1743 = vmatmul.mubr.f32.gmra.mxu0 %v1673
  %v1744 = vpop.f32.mrf.mxu0
  %v1745 = vadd.f32 0.0, %v1744
  %v1746 = vpop.f32.mrf.mxu0
  %1747 = vmatprep.mubr.f32.mxu0 0.0
  %1748 = vmatmul.mubr.f32.gmra.mxu0 %v1676
  %v1749 = vpop.f32.mrf.mxu0
  %v1750 = vadd.f32 0.0, %v1749
  %v1751 = vpop.f32.mrf.mxu0
  %1752 = vdwg.mxu0
  %1753 = vrot.lane.b32.xlu0 %v1543, 120
  %v1754 = vpop.permute.xlu0 %1753
  %1755 = vrot.lane.b32.xlu0 %v1548, 120
  %v1756 = vpop.permute.xlu0 %1755
  %1757 = vrot.lane.b32.xlu0 %v1543, 88
  %v1758 = vpop.permute.xlu0 %1757
  %1759 = vrot.lane.b32.xlu0 %v1548, 88
  %v1760 = vpop.permute.xlu0 %1759
  %v1761 = vsel %vm259, %v1754, 0
  %v1763 = vsel %vm259, %v1756, 0
  %v1765 = vsel %vm259, %v1758, 0
  %v1767 = vsel %vm259, %v1760, 0
  %1769 = vmatprep.subr.mxu0 0.0
  %1770 = vmatpush1.xpose.msra.mxu0 0.0
  %1771 = vmatprep.subr.mxu0 0.0
  %1772 = vmatpush1.xpose.msra.mxu0 0.0
  %1773 = vmatprep.subr.mxu0 0.0
  %1774 = vmatpush1.xpose.msra.mxu0 0.0
  %1775 = vmatprep.subr.mxu0 0.0
  %1776 = vmatpush1.xpose.msra.mxu0 0.0
  %1777 = vmatprep.subr.mxu0 0.0
  %1778 = vmatpush1.xpose.msra.mxu0 0.0
  %1779 = vmatprep.subr.mxu0 0.0
  %1780 = vmatpush1.xpose.msra.mxu0 0.0
  %1781 = vmatprep.subr.mxu0 0.0
  %1782 = vmatpush1.xpose.msra.mxu0 0.0
  %1783 = vmatprep.subr.mxu0 0.0
  %1784 = vmatpush1.xpose.msra.mxu0 0.0
  %1785 = vmatprep.subr.mxu0 0.0
  %1786 = vmatpush1.xpose.msra.mxu0 0.0
  %1787 = vmatprep.subr.mxu0 0.0
  %1788 = vmatpush1.xpose.msra.mxu0 0.0
  %1789 = vmatprep.subr.mxu0 0.0
  %1790 = vmatpush1.xpose.msra.mxu0 0.0
  %1791 = vmatprep.subr.mxu0 0.0
  %1792 = vmatpush1.xpose.msra.mxu0 0.0
  %1793 = vmatprep.subr.mxu0 0.0
  %1794 = vmatpush1.xpose.msra.mxu0 0.0
  %1795 = vmatprep.subr.mxu0 0.0
  %1796 = vmatpush1.xpose.msra.mxu0 0.0
  %1797 = vmatprep.subr.mxu0 0.0
  %1798 = vmatpush1.xpose.msra.mxu0 %v1767
  %1799 = vmatprep.subr.mxu0 0.0
  %1800 = vmatpush1.xpose.msra.mxu0 %v1765
  %1801 = vmatprep.subr.mxu0 0.0
  %1802 = vmatpush2.xpose.msra.mxu0 0.0
  %1803 = vmatprep.subr.mxu0 0.0
  %1804 = vmatpush2.xpose.msra.mxu0 0.0
  %1805 = vmatprep.subr.mxu0 0.0
  %1806 = vmatpush2.xpose.msra.mxu0 0.0
  %1807 = vmatprep.subr.mxu0 0.0
  %1808 = vmatpush2.xpose.msra.mxu0 0.0
  %1809 = vmatprep.subr.mxu0 0.0
  %1810 = vmatpush2.xpose.msra.mxu0 0.0
  %1811 = vmatprep.subr.mxu0 0.0
  %1812 = vmatpush2.xpose.msra.mxu0 0.0
  %1813 = vmatprep.subr.mxu0 0.0
  %1814 = vmatpush2.xpose.msra.mxu0 0.0
  %1815 = vmatprep.subr.mxu0 0.0
  %1816 = vmatpush2.xpose.msra.mxu0 0.0
  %1817 = vmatprep.subr.mxu0 0.0
  %1818 = vmatpush2.xpose.msra.mxu0 0.0
  %1819 = vmatprep.subr.mxu0 0.0
  %1820 = vmatpush2.xpose.msra.mxu0 0.0
  %1821 = vmatprep.subr.mxu0 0.0
  %1822 = vmatpush2.xpose.msra.mxu0 0.0
  %1823 = vmatprep.subr.mxu0 0.0
  %1824 = vmatpush2.xpose.msra.mxu0 0.0
  %1825 = vmatprep.subr.mxu0 0.0
  %1826 = vmatpush2.xpose.msra.mxu0 0.0
  %1827 = vmatprep.subr.mxu0 0.0
  %1828 = vmatpush2.xpose.msra.mxu0 0.0
  %1829 = vmatprep.subr.mxu0 0.0
  %1830 = vmatpush2.xpose.msra.mxu0 0.0
  %1831 = vmatprep.subr.mxu0 0.0
  %1832 = vmatpush2.xpose.msra.mxu0 0.0
  %1833 = vmatprep.mubr.f32.mxu0 0.0
  %1834 = vmatmul.mubr.f32.gmra.mxu0 %v1761
  %v1835 = vpop.f32.mrf.mxu0
  %v1836 = vadd.f32 0.0, %v1835
  %v1837 = vpop.f32.mrf.mxu0
  %1838 = vmatprep.mubr.f32.mxu0 0.0
  %1839 = vmatmul.mubr.f32.gmra.mxu0 %v1763
  %v1840 = vpop.f32.mrf.mxu0
  %v1841 = vadd.f32 0.0, %v1840
  %v1842 = vpop.f32.mrf.mxu0
  %1843 = vdwg.mxu0
  %v1844 = vmul.f32 %v1836, 0.35355338
  %v1845 = vmul.f32 %v1841, 0.35355338
  %v1846 = vadd.f32 %v1844, %v38
  %v1847 = vadd.f32 %v1845, %v39
  %v1848 = vsel %vm347, %v1846, -inf
  %1849 = vmax.xlane.f32.xlu0 %v1848
  %v1850 = vpop.xlane.xlu0 %1849
  %v1851 = vsel %vm347, %v1847, -inf
  %1852 = vmax.xlane.f32.xlu0 %v1851
  %v1853 = vpop.xlane.xlu0 %1852
  %v1854 = vsub.f32 %v1846, %v1850
  %v1855 = vsub.f32 %v1847, %v1853
  %v1856 = vmul.f32 %v1854, 1.442695
  %v1857 = vpow.pop %v1856
  %v1858 = vmul.f32 %v1855, 1.442695
  %v1859 = vpow.pop %v1858
  %v1860 = vsel %vm347, %v1857, 0.0
  %1861 = vadd.xlane.f32.xlu0 %v1860
  %v1862 = vpop.xlane.xlu0 %1861
  %v1863 = vsel %vm347, %v1859, 0.0
  %1864 = vadd.xlane.f32.xlu0 %v1863
  %v1865 = vpop.xlane.xlu0 %1864
  %v1866 = vrcp.pop %v1862
  %v1867 = vrcp.pop %v1865
  %v1868 = vmul.f32 %v1857, %v1866
  %v1869 = vmul.f32 %v1859, %v1867
  %1870 = vrot.lane.b32.xlu0 %v1543, 56
  %v1871 = vpop.permute.xlu0 %1870
  %1872 = vrot.lane.b32.xlu0 %v1548, 56
  %v1873 = vpop.permute.xlu0 %1872
  %v1877 = vsel %vm347, %v1868, 0
  %v1880 = vsel %vm347, %v1869, 0
  %1882 = vmatprep.subr.mxu0 0.0
  %1883 = vmatpush1.msra.mxu0 0.0
  %1884 = vmatprep.subr.mxu0 0.0
  %1885 = vmatpush1.msra.mxu0 0.0
  %1886 = vmatprep.subr.mxu0 0.0
  %1887 = vmatpush1.msra.mxu0 0.0
  %1888 = vmatprep.subr.mxu0 0.0
  %1889 = vmatpush1.msra.mxu0 0.0
  %1890 = vmatprep.subr.mxu0 0.0
  %1891 = vmatpush1.msra.mxu0 0.0
  %1892 = vmatprep.subr.mxu0 0.0
  %1893 = vmatpush1.msra.mxu0 0.0
  %1894 = vmatprep.subr.mxu0 0.0
  %1895 = vmatpush1.msra.mxu0 0.0
  %1896 = vmatprep.subr.mxu0 0.0
  %1897 = vmatpush1.msra.mxu0 0.0
  %1898 = vmatprep.subr.mxu0 0.0
  %1899 = vmatpush1.msra.mxu0 0.0
  %1900 = vmatprep.subr.mxu0 0.0
  %1901 = vmatpush1.msra.mxu0 0.0
  %1902 = vmatprep.subr.mxu0 0.0
  %1903 = vmatpush1.msra.mxu0 0.0
  %1904 = vmatprep.subr.mxu0 0.0
  %1905 = vmatpush1.msra.mxu0 0.0
  %1906 = vmatprep.subr.mxu0 0.0
  %1907 = vmatpush1.msra.mxu0 0.0
  %1908 = vmatprep.subr.mxu0 0.0
  %1909 = vmatpush1.msra.mxu0 0.0
  %1910 = vmatprep.subr.mxu0 0.0
  %1911 = vmatpush1.msra.mxu0 %v1873
  %1912 = vmatprep.subr.mxu0 0.0
  %1913 = vmatpush1.msra.mxu0 %v1871
  %1914 = vmatprep.subr.mxu0 0.0
  %1915 = vmatpush2.msra.mxu0 0.0
  %1916 = vmatprep.subr.mxu0 0.0
  %1917 = vmatpush2.msra.mxu0 0.0
  %1918 = vmatprep.subr.mxu0 0.0
  %1919 = vmatpush2.msra.mxu0 0.0
  %1920 = vmatprep.subr.mxu0 0.0
  %1921 = vmatpush2.msra.mxu0 0.0
  %1922 = vmatprep.subr.mxu0 0.0
  %1923 = vmatpush2.msra.mxu0 0.0
  %1924 = vmatprep.subr.mxu0 0.0
  %1925 = vmatpush2.msra.mxu0 0.0
  %1926 = vmatprep.subr.mxu0 0.0
  %1927 = vmatpush2.msra.mxu0 0.0
  %1928 = vmatprep.subr.mxu0 0.0
  %1929 = vmatpush2.msra.mxu0 0.0
  %1930 = vmatprep.subr.mxu0 0.0
  %1931 = vmatpush2.msra.mxu0 0.0
  %1932 = vmatprep.subr.mxu0 0.0
  %1933 = vmatpush2.msra.mxu0 0.0
  %1934 = vmatprep.subr.mxu0 0.0
  %1935 = vmatpush2.msra.mxu0 0.0
  %1936 = vmatprep.subr.mxu0 0.0
  %1937 = vmatpush2.msra.mxu0 0.0
  %1938 = vmatprep.subr.mxu0 0.0
  %1939 = vmatpush2.msra.mxu0 0.0
  %1940 = vmatprep.subr.mxu0 0.0
  %1941 = vmatpush2.msra.mxu0 0.0
  %1942 = vmatprep.subr.mxu0 0.0
  %1943 = vmatpush2.msra.mxu0 0.0
  %1944 = vmatprep.subr.mxu0 0.0
  %1945 = vmatpush2.msra.mxu0 0.0
  %1946 = vmatprep.mubr.f32.mxu0 0.0
  %1947 = vmatmul.mubr.f32.gmra.mxu0 %v1877
  %v1948 = vpop.f32.mrf.mxu0
  %v1949 = vadd.f32 0.0, %v1948
  %v1950 = vpop.f32.mrf.mxu0
  %1951 = vmatprep.mubr.f32.mxu0 0.0
  %1952 = vmatmul.mubr.f32.gmra.mxu0 %v1880
  %v1953 = vpop.f32.mrf.mxu0
  %v1954 = vadd.f32 0.0, %v1953
  %v1955 = vpop.f32.mrf.mxu0
  %1956 = vdwg.mxu0
  %1957 = vrot.lane.b32.xlu0 %v1543, 112
  %v1958 = vpop.permute.xlu0 %1957
  %1959 = vrot.lane.b32.xlu0 %v1548, 112
  %v1960 = vpop.permute.xlu0 %1959
  %1961 = vrot.lane.b32.xlu0 %v1543, 80
  %v1962 = vpop.permute.xlu0 %1961
  %1963 = vrot.lane.b32.xlu0 %v1548, 80
  %v1964 = vpop.permute.xlu0 %1963
  %v1965 = vsel %vm259, %v1958, 0
  %v1967 = vsel %vm259, %v1960, 0
  %v1969 = vsel %vm259, %v1962, 0
  %v1971 = vsel %vm259, %v1964, 0
  %1973 = vmatprep.subr.mxu0 0.0
  %1974 = vmatpush1.xpose.msra.mxu0 0.0
  %1975 = vmatprep.subr.mxu0 0.0
  %1976 = vmatpush1.xpose.msra.mxu0 0.0
  %1977 = vmatprep.subr.mxu0 0.0
  %1978 = vmatpush1.xpose.msra.mxu0 0.0
  %1979 = vmatprep.subr.mxu0 0.0
  %1980 = vmatpush1.xpose.msra.mxu0 0.0
  %1981 = vmatprep.subr.mxu0 0.0
  %1982 = vmatpush1.xpose.msra.mxu0 0.0
  %1983 = vmatprep.subr.mxu0 0.0
  %1984 = vmatpush1.xpose.msra.mxu0 0.0
  %1985 = vmatprep.subr.mxu0 0.0
  %1986 = vmatpush1.xpose.msra.mxu0 0.0
  %1987 = vmatprep.subr.mxu0 0.0
  %1988 = vmatpush1.xpose.msra.mxu0 0.0
  %1989 = vmatprep.subr.mxu0 0.0
  %1990 = vmatpush1.xpose.msra.mxu0 0.0
  %1991 = vmatprep.subr.mxu0 0.0
  %1992 = vmatpush1.xpose.msra.mxu0 0.0
  %1993 = vmatprep.subr.mxu0 0.0
  %1994 = vmatpush1.xpose.msra.mxu0 0.0
  %1995 = vmatprep.subr.mxu0 0.0
  %1996 = vmatpush1.xpose.msra.mxu0 0.0
  %1997 = vmatprep.subr.mxu0 0.0
  %1998 = vmatpush1.xpose.msra.mxu0 0.0
  %1999 = vmatprep.subr.mxu0 0.0
  %2000 = vmatpush1.xpose.msra.mxu0 0.0
  %2001 = vmatprep.subr.mxu0 0.0
  %2002 = vmatpush1.xpose.msra.mxu0 %v1971
  %2003 = vmatprep.subr.mxu0 0.0
  %2004 = vmatpush1.xpose.msra.mxu0 %v1969
  %2005 = vmatprep.subr.mxu0 0.0
  %2006 = vmatpush2.xpose.msra.mxu0 0.0
  %2007 = vmatprep.subr.mxu0 0.0
  %2008 = vmatpush2.xpose.msra.mxu0 0.0
  %2009 = vmatprep.subr.mxu0 0.0
  %2010 = vmatpush2.xpose.msra.mxu0 0.0
  %2011 = vmatprep.subr.mxu0 0.0
  %2012 = vmatpush2.xpose.msra.mxu0 0.0
  %2013 = vmatprep.subr.mxu0 0.0
  %2014 = vmatpush2.xpose.msra.mxu0 0.0
  %2015 = vmatprep.subr.mxu0 0.0
  %2016 = vmatpush2.xpose.msra.mxu0 0.0
  %2017 = vmatprep.subr.mxu0 0.0
  %2018 = vmatpush2.xpose.msra.mxu0 0.0
  %2019 = vmatprep.subr.mxu0 0.0
  %2020 = vmatpush2.xpose.msra.mxu0 0.0
  %2021 = vmatprep.subr.mxu0 0.0
  %2022 = vmatpush2.xpose.msra.mxu0 0.0
  %2023 = vmatprep.subr.mxu0 0.0
  %2024 = vmatpush2.xpose.msra.mxu0 0.0
  %2025 = vmatprep.subr.mxu0 0.0
  %2026 = vmatpush2.xpose.msra.mxu0 0.0
  %2027 = vmatprep.subr.mxu0 0.0
  %2028 = vmatpush2.xpose.msra.mxu0 0.0
  %2029 = vmatprep.subr.mxu0 0.0
  %2030 = vmatpush2.xpose.msra.mxu0 0.0
  %2031 = vmatprep.subr.mxu0 0.0
  %2032 = vmatpush2.xpose.msra.mxu0 0.0
  %2033 = vmatprep.subr.mxu0 0.0
  %2034 = vmatpush2.xpose.msra.mxu0 0.0
  %2035 = vmatprep.subr.mxu0 0.0
  %2036 = vmatpush2.xpose.msra.mxu0 0.0
  %2037 = vmatprep.mubr.f32.mxu0 0.0
  %2038 = vmatmul.mubr.f32.gmra.mxu0 %v1965
  %v2039 = vpop.f32.mrf.mxu0
  %v2040 = vadd.f32 0.0, %v2039
  %v2041 = vpop.f32.mrf.mxu0
  %2042 = vmatprep.mubr.f32.mxu0 0.0
  %2043 = vmatmul.mubr.f32.gmra.mxu0 %v1967
  %v2044 = vpop.f32.mrf.mxu0
  %v2045 = vadd.f32 0.0, %v2044
  %v2046 = vpop.f32.mrf.mxu0
  %2047 = vdwg.mxu0
  %v2048 = vmul.f32 %v2040, 0.35355338
  %v2049 = vmul.f32 %v2045, 0.35355338
  %v2050 = vadd.f32 %v2048, %v38
  %v2051 = vadd.f32 %v2049, %v39
  %v2052 = vsel %vm347, %v2050, -inf
  %2053 = vmax.xlane.f32.xlu0 %v2052
  %v2054 = vpop.xlane.xlu0 %2053
  %v2055 = vsel %vm347, %v2051, -inf
  %2056 = vmax.xlane.f32.xlu0 %v2055
  %v2057 = vpop.xlane.xlu0 %2056
  %v2058 = vsub.f32 %v2050, %v2054
  %v2059 = vsub.f32 %v2051, %v2057
  %v2060 = vmul.f32 %v2058, 1.442695
  %v2061 = vpow.pop %v2060
  %v2062 = vmul.f32 %v2059, 1.442695
  %v2063 = vpow.pop %v2062
  %v2064 = vsel %vm347, %v2061, 0.0
  %2065 = vadd.xlane.f32.xlu0 %v2064
  %v2066 = vpop.xlane.xlu0 %2065
  %v2067 = vsel %vm347, %v2063, 0.0
  %2068 = vadd.xlane.f32.xlu0 %v2067
  %v2069 = vpop.xlane.xlu0 %2068
  %v2070 = vrcp.pop %v2066
  %v2071 = vrcp.pop %v2069
  %v2072 = vmul.f32 %v2061, %v2070
  %v2073 = vmul.f32 %v2063, %v2071
  %2074 = vrot.lane.b32.xlu0 %v1543, 48
  %v2075 = vpop.permute.xlu0 %2074
  %2076 = vrot.lane.b32.xlu0 %v1548, 48
  %v2077 = vpop.permute.xlu0 %2076
  %v2081 = vsel %vm347, %v2072, 0
  %v2084 = vsel %vm347, %v2073, 0
  %2086 = vmatprep.subr.mxu0 0.0
  %2087 = vmatpush1.msra.mxu0 0.0
  %2088 = vmatprep.subr.mxu0 0.0
  %2089 = vmatpush1.msra.mxu0 0.0
  %2090 = vmatprep.subr.mxu0 0.0
  %2091 = vmatpush1.msra.mxu0 0.0
  %2092 = vmatprep.subr.mxu0 0.0
  %2093 = vmatpush1.msra.mxu0 0.0
  %2094 = vmatprep.subr.mxu0 0.0
  %2095 = vmatpush1.msra.mxu0 0.0
  %2096 = vmatprep.subr.mxu0 0.0
  %2097 = vmatpush1.msra.mxu0 0.0
  %2098 = vmatprep.subr.mxu0 0.0
  %2099 = vmatpush1.msra.mxu0 0.0
  %2100 = vmatprep.subr.mxu0 0.0
  %2101 = vmatpush1.msra.mxu0 0.0
  %2102 = vmatprep.subr.mxu0 0.0
  %2103 = vmatpush1.msra.mxu0 0.0
  %2104 = vmatprep.subr.mxu0 0.0
  %2105 = vmatpush1.msra.mxu0 0.0
  %2106 = vmatprep.subr.mxu0 0.0
  %2107 = vmatpush1.msra.mxu0 0.0
  %2108 = vmatprep.subr.mxu0 0.0
  %2109 = vmatpush1.msra.mxu0 0.0
  %2110 = vmatprep.subr.mxu0 0.0
  %2111 = vmatpush1.msra.mxu0 0.0
  %2112 = vmatprep.subr.mxu0 0.0
  %2113 = vmatpush1.msra.mxu0 0.0
  %2114 = vmatprep.subr.mxu0 0.0
  %2115 = vmatpush1.msra.mxu0 %v2077
  %2116 = vmatprep.subr.mxu0 0.0
  %2117 = vmatpush1.msra.mxu0 %v2075
  %2118 = vmatprep.subr.mxu0 0.0
  %2119 = vmatpush2.msra.mxu0 0.0
  %2120 = vmatprep.subr.mxu0 0.0
  %2121 = vmatpush2.msra.mxu0 0.0
  %2122 = vmatprep.subr.mxu0 0.0
  %2123 = vmatpush2.msra.mxu0 0.0
  %2124 = vmatprep.subr.mxu0 0.0
  %2125 = vmatpush2.msra.mxu0 0.0
  %2126 = vmatprep.subr.mxu0 0.0
  %2127 = vmatpush2.msra.mxu0 0.0
  %2128 = vmatprep.subr.mxu0 0.0
  %2129 = vmatpush2.msra.mxu0 0.0
  %2130 = vmatprep.subr.mxu0 0.0
  %2131 = vmatpush2.msra.mxu0 0.0
  %2132 = vmatprep.subr.mxu0 0.0
  %2133 = vmatpush2.msra.mxu0 0.0
  %2134 = vmatprep.subr.mxu0 0.0
  %2135 = vmatpush2.msra.mxu0 0.0
  %2136 = vmatprep.subr.mxu0 0.0
  %2137 = vmatpush2.msra.mxu0 0.0
  %2138 = vmatprep.subr.mxu0 0.0
  %2139 = vmatpush2.msra.mxu0 0.0
  %2140 = vmatprep.subr.mxu0 0.0
  %2141 = vmatpush2.msra.mxu0 0.0
  %2142 = vmatprep.subr.mxu0 0.0
  %2143 = vmatpush2.msra.mxu0 0.0
  %2144 = vmatprep.subr.mxu0 0.0
  %2145 = vmatpush2.msra.mxu0 0.0
  %2146 = vmatprep.subr.mxu0 0.0
  %2147 = vmatpush2.msra.mxu0 0.0
  %2148 = vmatprep.subr.mxu0 0.0
  %2149 = vmatpush2.msra.mxu0 0.0
  %2150 = vmatprep.mubr.f32.mxu0 0.0
  %2151 = vmatmul.mubr.f32.gmra.mxu0 %v2081
  %v2152 = vpop.f32.mrf.mxu0
  %v2153 = vadd.f32 0.0, %v2152
  %v2154 = vpop.f32.mrf.mxu0
  %2155 = vmatprep.mubr.f32.mxu0 0.0
  %2156 = vmatmul.mubr.f32.gmra.mxu0 %v2084
  %v2157 = vpop.f32.mrf.mxu0
  %v2158 = vadd.f32 0.0, %v2157
  %v2159 = vpop.f32.mrf.mxu0
  %2160 = vdwg.mxu0
  %2161 = vrot.lane.b32.xlu0 %v1543, 104
  %v2162 = vpop.permute.xlu0 %2161
  %2163 = vrot.lane.b32.xlu0 %v1548, 104
  %v2164 = vpop.permute.xlu0 %2163
  %2165 = vrot.lane.b32.xlu0 %v1543, 72
  %v2166 = vpop.permute.xlu0 %2165
  %2167 = vrot.lane.b32.xlu0 %v1548, 72
  %v2168 = vpop.permute.xlu0 %2167
  %v2169 = vsel %vm259, %v2162, 0
  %v2171 = vsel %vm259, %v2164, 0
  %v2173 = vsel %vm259, %v2166, 0
  %v2175 = vsel %vm259, %v2168, 0
  %2177 = vmatprep.subr.mxu0 0.0
  %2178 = vmatpush1.xpose.msra.mxu0 0.0
  %2179 = vmatprep.subr.mxu0 0.0
  %2180 = vmatpush1.xpose.msra.mxu0 0.0
  %2181 = vmatprep.subr.mxu0 0.0
  %2182 = vmatpush1.xpose.msra.mxu0 0.0
  %2183 = vmatprep.subr.mxu0 0.0
  %2184 = vmatpush1.xpose.msra.mxu0 0.0
  %2185 = vmatprep.subr.mxu0 0.0
  %2186 = vmatpush1.xpose.msra.mxu0 0.0
  %2187 = vmatprep.subr.mxu0 0.0
  %2188 = vmatpush1.xpose.msra.mxu0 0.0
  %2189 = vmatprep.subr.mxu0 0.0
  %2190 = vmatpush1.xpose.msra.mxu0 0.0
  %2191 = vmatprep.subr.mxu0 0.0
  %2192 = vmatpush1.xpose.msra.mxu0 0.0
  %2193 = vmatprep.subr.mxu0 0.0
  %2194 = vmatpush1.xpose.msra.mxu0 0.0
  %2195 = vmatprep.subr.mxu0 0.0
  %2196 = vmatpush1.xpose.msra.mxu0 0.0
  %2197 = vmatprep.subr.mxu0 0.0
  %2198 = vmatpush1.xpose.msra.mxu0 0.0
  %2199 = vmatprep.subr.mxu0 0.0
  %2200 = vmatpush1.xpose.msra.mxu0 0.0
  %2201 = vmatprep.subr.mxu0 0.0
  %2202 = vmatpush1.xpose.msra.mxu0 0.0
  %2203 = vmatprep.subr.mxu0 0.0
  %2204 = vmatpush1.xpose.msra.mxu0 0.0
  %2205 = vmatprep.subr.mxu0 0.0
  %2206 = vmatpush1.xpose.msra.mxu0 %v2175
  %2207 = vmatprep.subr.mxu0 0.0
  %2208 = vmatpush1.xpose.msra.mxu0 %v2173
  %2209 = vmatprep.subr.mxu0 0.0
  %2210 = vmatpush2.xpose.msra.mxu0 0.0
  %2211 = vmatprep.subr.mxu0 0.0
  %2212 = vmatpush2.xpose.msra.mxu0 0.0
  %2213 = vmatprep.subr.mxu0 0.0
  %2214 = vmatpush2.xpose.msra.mxu0 0.0
  %2215 = vmatprep.subr.mxu0 0.0
  %2216 = vmatpush2.xpose.msra.mxu0 0.0
  %2217 = vmatprep.subr.mxu0 0.0
  %2218 = vmatpush2.xpose.msra.mxu0 0.0
  %2219 = vmatprep.subr.mxu0 0.0
  %2220 = vmatpush2.xpose.msra.mxu0 0.0
  %2221 = vmatprep.subr.mxu0 0.0
  %2222 = vmatpush2.xpose.msra.mxu0 0.0
  %2223 = vmatprep.subr.mxu0 0.0
  %2224 = vmatpush2.xpose.msra.mxu0 0.0
  %2225 = vmatprep.subr.mxu0 0.0
  %2226 = vmatpush2.xpose.msra.mxu0 0.0
  %2227 = vmatprep.subr.mxu0 0.0
  %2228 = vmatpush2.xpose.msra.mxu0 0.0
  %2229 = vmatprep.subr.mxu0 0.0
  %2230 = vmatpush2.xpose.msra.mxu0 0.0
  %2231 = vmatprep.subr.mxu0 0.0
  %2232 = vmatpush2.xpose.msra.mxu0 0.0
  %2233 = vmatprep.subr.mxu0 0.0
  %2234 = vmatpush2.xpose.msra.mxu0 0.0
  %2235 = vmatprep.subr.mxu0 0.0
  %2236 = vmatpush2.xpose.msra.mxu0 0.0
  %2237 = vmatprep.subr.mxu0 0.0
  %2238 = vmatpush2.xpose.msra.mxu0 0.0
  %2239 = vmatprep.subr.mxu0 0.0
  %2240 = vmatpush2.xpose.msra.mxu0 0.0
  %2241 = vmatprep.mubr.f32.mxu0 0.0
  %2242 = vmatmul.mubr.f32.gmra.mxu0 %v2169
  %v2243 = vpop.f32.mrf.mxu0
  %v2244 = vadd.f32 0.0, %v2243
  %v2245 = vpop.f32.mrf.mxu0
  %2246 = vmatprep.mubr.f32.mxu0 0.0
  %2247 = vmatmul.mubr.f32.gmra.mxu0 %v2171
  %v2248 = vpop.f32.mrf.mxu0
  %v2249 = vadd.f32 0.0, %v2248
  %v2250 = vpop.f32.mrf.mxu0
  %2251 = vdwg.mxu0
  %v2252 = vmul.f32 %v2244, 0.35355338
  %v2253 = vmul.f32 %v2249, 0.35355338
  %v2254 = vadd.f32 %v2252, %v38
  %v2255 = vadd.f32 %v2253, %v39
  %v2256 = vsel %vm347, %v2254, -inf
  %2257 = vmax.xlane.f32.xlu0 %v2256
  %v2258 = vpop.xlane.xlu0 %2257
  %v2259 = vsel %vm347, %v2255, -inf
  %2260 = vmax.xlane.f32.xlu0 %v2259
  %v2261 = vpop.xlane.xlu0 %2260
  %v2262 = vsub.f32 %v2254, %v2258
  %v2263 = vsub.f32 %v2255, %v2261
  %v2264 = vmul.f32 %v2262, 1.442695
  %v2265 = vpow.pop %v2264
  %v2266 = vmul.f32 %v2263, 1.442695
  %v2267 = vpow.pop %v2266
  %v2268 = vsel %vm347, %v2265, 0.0
  %2269 = vadd.xlane.f32.xlu0 %v2268
  %v2270 = vpop.xlane.xlu0 %2269
  %v2271 = vsel %vm347, %v2267, 0.0
  %2272 = vadd.xlane.f32.xlu0 %v2271
  %v2273 = vpop.xlane.xlu0 %2272
  %v2274 = vrcp.pop %v2270
  %v2275 = vrcp.pop %v2273
  %v2276 = vmul.f32 %v2265, %v2274
  %v2277 = vmul.f32 %v2267, %v2275
  %2278 = vrot.lane.b32.xlu0 %v1543, 40
  %v2279 = vpop.permute.xlu0 %2278
  %2280 = vrot.lane.b32.xlu0 %v1548, 40
  %v2281 = vpop.permute.xlu0 %2280
  %v2285 = vsel %vm347, %v2276, 0
  %v2288 = vsel %vm347, %v2277, 0
  %2290 = vmatprep.subr.mxu0 0.0
  %2291 = vmatpush1.msra.mxu0 0.0
  %2292 = vmatprep.subr.mxu0 0.0
  %2293 = vmatpush1.msra.mxu0 0.0
  %2294 = vmatprep.subr.mxu0 0.0
  %2295 = vmatpush1.msra.mxu0 0.0
  %2296 = vmatprep.subr.mxu0 0.0
  %2297 = vmatpush1.msra.mxu0 0.0
  %2298 = vmatprep.subr.mxu0 0.0
  %2299 = vmatpush1.msra.mxu0 0.0
  %2300 = vmatprep.subr.mxu0 0.0
  %2301 = vmatpush1.msra.mxu0 0.0
  %2302 = vmatprep.subr.mxu0 0.0
  %2303 = vmatpush1.msra.mxu0 0.0
  %2304 = vmatprep.subr.mxu0 0.0
  %2305 = vmatpush1.msra.mxu0 0.0
  %2306 = vmatprep.subr.mxu0 0.0
  %2307 = vmatpush1.msra.mxu0 0.0
  %2308 = vmatprep.subr.mxu0 0.0
  %2309 = vmatpush1.msra.mxu0 0.0
  %2310 = vmatprep.subr.mxu0 0.0
  %2311 = vmatpush1.msra.mxu0 0.0
  %2312 = vmatprep.subr.mxu0 0.0
  %2313 = vmatpush1.msra.mxu0 0.0
  %2314 = vmatprep.subr.mxu0 0.0
  %2315 = vmatpush1.msra.mxu0 0.0
  %2316 = vmatprep.subr.mxu0 0.0
  %2317 = vmatpush1.msra.mxu0 0.0
  %2318 = vmatprep.subr.mxu0 0.0
  %2319 = vmatpush1.msra.mxu0 %v2281
  %2320 = vmatprep.subr.mxu0 0.0
  %2321 = vmatpush1.msra.mxu0 %v2279
  %2322 = vmatprep.subr.mxu0 0.0
  %2323 = vmatpush2.msra.mxu0 0.0
  %2324 = vmatprep.subr.mxu0 0.0
  %2325 = vmatpush2.msra.mxu0 0.0
  %2326 = vmatprep.subr.mxu0 0.0
  %2327 = vmatpush2.msra.mxu0 0.0
  %2328 = vmatprep.subr.mxu0 0.0
  %2329 = vmatpush2.msra.mxu0 0.0
  %2330 = vmatprep.subr.mxu0 0.0
  %2331 = vmatpush2.msra.mxu0 0.0
  %2332 = vmatprep.subr.mxu0 0.0
  %2333 = vmatpush2.msra.mxu0 0.0
  %2334 = vmatprep.subr.mxu0 0.0
  %2335 = vmatpush2.msra.mxu0 0.0
  %2336 = vmatprep.subr.mxu0 0.0
  %2337 = vmatpush2.msra.mxu0 0.0
  %2338 = vmatprep.subr.mxu0 0.0
  %2339 = vmatpush2.msra.mxu0 0.0
  %2340 = vmatprep.subr.mxu0 0.0
  %2341 = vmatpush2.msra.mxu0 0.0
  %2342 = vmatprep.subr.mxu0 0.0
  %2343 = vmatpush2.msra.mxu0 0.0
  %2344 = vmatprep.subr.mxu0 0.0
  %2345 = vmatpush2.msra.mxu0 0.0
  %2346 = vmatprep.subr.mxu0 0.0
  %2347 = vmatpush2.msra.mxu0 0.0
  %2348 = vmatprep.subr.mxu0 0.0
  %2349 = vmatpush2.msra.mxu0 0.0
  %2350 = vmatprep.subr.mxu0 0.0
  %2351 = vmatpush2.msra.mxu0 0.0
  %2352 = vmatprep.subr.mxu0 0.0
  %2353 = vmatpush2.msra.mxu0 0.0
  %2354 = vmatprep.mubr.f32.mxu0 0.0
  %2355 = vmatmul.mubr.f32.gmra.mxu0 %v2285
  %v2356 = vpop.f32.mrf.mxu0
  %v2357 = vadd.f32 0.0, %v2356
  %v2358 = vpop.f32.mrf.mxu0
  %2359 = vmatprep.mubr.f32.mxu0 0.0
  %2360 = vmatmul.mubr.f32.gmra.mxu0 %v2288
  %v2361 = vpop.f32.mrf.mxu0
  %v2362 = vadd.f32 0.0, %v2361
  %v2363 = vpop.f32.mrf.mxu0
  %2364 = vdwg.mxu0
  %2367 = vrot.lane.b32.xlu0 %v1949, 8
  %v2368 = vpop.permute.xlu0 %2367
  %2369 = vrot.lane.b32.xlu0 %v1954, 8
  %v2370 = vpop.permute.xlu0 %2369
  %2375 = vrot.lane.b32.xlu0 %v2153, 16
  %v2376 = vpop.permute.xlu0 %2375
  %2377 = vrot.lane.b32.xlu0 %v2158, 16
  %v2378 = vpop.permute.xlu0 %2377
  %2383 = vrot.lane.b32.xlu0 %v2357, 24
  %v2384 = vpop.permute.xlu0 %2383
  %2385 = vrot.lane.b32.xlu0 %v2362, 24
  %v2386 = vpop.permute.xlu0 %2385
  %v2389 = vsel %vm259, %v1745, %v2368
  %v2390 = vsel %vm259, %v1750, %v2370
  %v2391 = vsel %vm347, %v2389, %v2376
  %v2392 = vsel %vm347, %v2390, %v2378
  %v2393 = vsel %vm1097, %v2391, %v2384
  %v2394 = vsel %vm1097, %v2392, %v2386
  %v2395 = vlaneseq
  %v2396 = vshrl.u32 %v2395, 7
  %v2397 = vsub.s32 1, %v2396
  %v2398 = vrot.slane %v1465, %v2397
  %v2400 = vsel %vm171, %v2393, 0
  %v2403 = vsel %vm171, %v2394, 0
  %2405 = vmatprep.subr.mxu0 0.0
  %2406 = vmatpush1.msra.mxu0 0.0
  %2407 = vmatprep.subr.mxu0 0.0
  %2408 = vmatpush1.msra.mxu0 0.0
  %2409 = vmatprep.subr.mxu0 0.0
  %2410 = vmatpush1.msra.mxu0 0.0
  %2411 = vmatprep.subr.mxu0 0.0
  %2412 = vmatpush1.msra.mxu0 0.0
  %2413 = vmatprep.subr.mxu0 0.0
  %2414 = vmatpush1.msra.mxu0 0.0
  %2415 = vmatprep.subr.mxu0 0.0
  %2416 = vmatpush1.msra.mxu0 0.0
  %2417 = vmatprep.subr.mxu0 0.0
  %2418 = vmatpush1.msra.mxu0 0.0
  %2419 = vmatprep.subr.mxu0 0.0
  %2420 = vmatpush1.msra.mxu0 0.0
  %2421 = vmatprep.subr.mxu0 0.0
  %2422 = vmatpush1.msra.mxu0 0.0
  %2423 = vmatprep.subr.mxu0 0.0
  %2424 = vmatpush1.msra.mxu0 0.0
  %2425 = vmatprep.subr.mxu0 0.0
  %2426 = vmatpush1.msra.mxu0 0.0
  %2427 = vmatprep.subr.mxu0 0.0
  %2428 = vmatpush1.msra.mxu0 0.0
  %2429 = vmatprep.subr.mxu0 0.0
  %2430 = vmatpush1.msra.mxu0 %v1441
  %2431 = vmatprep.subr.mxu0 0.0
  %2432 = vmatpush1.msra.mxu0 %v1440
  %2433 = vmatprep.subr.mxu0 0.0
  %2434 = vmatpush1.msra.mxu0 %v1439
  %2435 = vmatprep.subr.mxu0 0.0
  %2436 = vmatpush1.msra.mxu0 %v1438
  %2437 = vmatprep.subr.mxu0 0.0
  %2438 = vmatpush2.msra.mxu0 0.0
  %2439 = vmatprep.subr.mxu0 0.0
  %2440 = vmatpush2.msra.mxu0 0.0
  %2441 = vmatprep.subr.mxu0 0.0
  %2442 = vmatpush2.msra.mxu0 0.0
  %2443 = vmatprep.subr.mxu0 0.0
  %2444 = vmatpush2.msra.mxu0 0.0
  %2445 = vmatprep.subr.mxu0 0.0
  %2446 = vmatpush2.msra.mxu0 0.0
  %2447 = vmatprep.subr.mxu0 0.0
  %2448 = vmatpush2.msra.mxu0 0.0
  %2449 = vmatprep.subr.mxu0 0.0
  %2450 = vmatpush2.msra.mxu0 0.0
  %2451 = vmatprep.subr.mxu0 0.0
  %2452 = vmatpush2.msra.mxu0 0.0
  %2453 = vmatprep.subr.mxu0 0.0
  %2454 = vmatpush2.msra.mxu0 0.0
  %2455 = vmatprep.subr.mxu0 0.0
  %2456 = vmatpush2.msra.mxu0 0.0
  %2457 = vmatprep.subr.mxu0 0.0
  %2458 = vmatpush2.msra.mxu0 0.0
  %2459 = vmatprep.subr.mxu0 0.0
  %2460 = vmatpush2.msra.mxu0 0.0
  %2461 = vmatprep.subr.mxu0 0.0
  %2462 = vmatpush2.msra.mxu0 0.0
  %2463 = vmatprep.subr.mxu0 0.0
  %2464 = vmatpush2.msra.mxu0 0.0
  %2465 = vmatprep.subr.mxu0 0.0
  %2466 = vmatpush2.msra.mxu0 0.0
  %2467 = vmatprep.subr.mxu0 0.0
  %2468 = vmatpush2.msra.mxu0 0.0
  %2469 = vmatprep.mubr.f32.mxu0 0.0
  %2470 = vmatmul.mubr.f32.gmra.mxu0 %v2400
  %v2471 = vpop.f32.mrf.mxu0
  %v2472 = vadd.f32 %v2398, %v2471
  %v2473 = vpop.f32.mrf.mxu0
  %2474 = vmatprep.mubr.f32.mxu0 0.0
  %2475 = vmatmul.mubr.f32.gmra.mxu0 %v2403
  %v2476 = vpop.f32.mrf.mxu0
  %v2477 = vadd.f32 %v2398, %v2476
  %v2478 = vpop.f32.mrf.mxu0
  %2479 = vdwg.mxu0
  %v2480 = vadd.f32 %v1430, %v2472
  %v2481 = vadd.f32 %v1431, %v2477
  %v2482 = vsel %vm171, %v2480, 0.0
  %2483 = vadd.xlane.f32.xlu0 %v2482
  %v2484 = vpop.xlane.xlu0 %2483
  %v2485 = vsel %vm171, %v2481, 0.0
  %2486 = vadd.xlane.f32.xlu0 %v2485
  %v2487 = vpop.xlane.xlu0 %2486
  %v2488 = vmul.f32 %v2484, %v1193
  %v2489 = vmul.f32 %v2487, %v1193
  %v2490 = vsub.f32 %v2480, %v2488
  %v2491 = vsub.f32 %v2481, %v2489
  %v2492 = vmul.f32 %v2490, %v2490
  %v2493 = vmul.f32 %v2491, %v2491
  %v2494 = vsel %vm171, %v2492, 0.0
  %2495 = vadd.xlane.f32.xlu0 %v2494
  %v2496 = vpop.xlane.xlu0 %2495
  %v2497 = vsel %vm171, %v2493, 0.0
  %2498 = vadd.xlane.f32.xlu0 %v2497
  %v2499 = vpop.xlane.xlu0 %2498
  %v2500 = vmul.f32 %v2496, %v1193
  %v2501 = vmul.f32 %v2499, %v1193
  %v2502 = vadd.f32 %v2500, 1e-05
  %v2503 = vadd.f32 %v2501, 1e-05
  %v2504 = vrsqrt.pop %v2502
  %v2505 = vrsqrt.pop %v2503
  %v2506 = vmul.f32 %v2490, %v2504
  %v2507 = vmul.f32 %v2491, %v2505
  %v2508 = vlaneseq
  %v2509 = vshrl.u32 %v2508, 7
  %v2510 = vsub.s32 2, %v2509
  %v2511 = vrot.slane %v1465, %v2510
  %v2512 = vmul.f32 %v2506, %v2511
  %v2513 = vmul.f32 %v2507, %v2511
  %v2514 = vlaneseq
  %v2515 = vshrl.u32 %v2514, 7
  %v2516 = vsub.s32 3, %v2515
  %v2517 = vrot.slane %v1465, %v2516
  %v2518 = vadd.f32 %v2512, %v2517
  %v2519 = vadd.f32 %v2513, %v2517
  %v2520 = vlaneseq
  %v2521 = vshrl.u32 %v2520, 7
  %v2522 = vsub.s32 4, %v2521
  %v2523 = vrot.slane %v1465, %v2522
  %v2525 = vsel %vm171, %v2518, 0
  %v2528 = vsel %vm171, %v2519, 0
  %2530 = vmatprep.subr.mxu0 0.0
  %2531 = vmatpush1.msra.mxu0 0.0
  %2532 = vmatprep.subr.mxu0 0.0
  %2533 = vmatpush1.msra.mxu0 0.0
  %2534 = vmatprep.subr.mxu0 0.0
  %2535 = vmatpush1.msra.mxu0 0.0
  %2536 = vmatprep.subr.mxu0 0.0
  %2537 = vmatpush1.msra.mxu0 0.0
  %2538 = vmatprep.subr.mxu0 0.0
  %2539 = vmatpush1.msra.mxu0 0.0
  %2540 = vmatprep.subr.mxu0 0.0
  %2541 = vmatpush1.msra.mxu0 0.0
  %2542 = vmatprep.subr.mxu0 0.0
  %2543 = vmatpush1.msra.mxu0 0.0
  %2544 = vmatprep.subr.mxu0 0.0
  %2545 = vmatpush1.msra.mxu0 0.0
  %2546 = vmatprep.subr.mxu0 0.0
  %2547 = vmatpush1.msra.mxu0 0.0
  %2548 = vmatprep.subr.mxu0 0.0
  %2549 = vmatpush1.msra.mxu0 0.0
  %2550 = vmatprep.subr.mxu0 0.0
  %2551 = vmatpush1.msra.mxu0 0.0
  %2552 = vmatprep.subr.mxu0 0.0
  %2553 = vmatpush1.msra.mxu0 0.0
  %2554 = vmatprep.subr.mxu0 0.0
  %2555 = vmatpush1.msra.mxu0 %v1446
  %2556 = vmatprep.subr.mxu0 0.0
  %2557 = vmatpush1.msra.mxu0 %v1445
  %2558 = vmatprep.subr.mxu0 0.0
  %2559 = vmatpush1.msra.mxu0 %v1444
  %2560 = vmatprep.subr.mxu0 0.0
  %2561 = vmatpush1.msra.mxu0 %v1443
  %2562 = vmatprep.subr.mxu0 0.0
  %2563 = vmatpush2.msra.mxu0 0.0
  %2564 = vmatprep.subr.mxu0 0.0
  %2565 = vmatpush2.msra.mxu0 0.0
  %2566 = vmatprep.subr.mxu0 0.0
  %2567 = vmatpush2.msra.mxu0 0.0
  %2568 = vmatprep.subr.mxu0 0.0
  %2569 = vmatpush2.msra.mxu0 0.0
  %2570 = vmatprep.subr.mxu0 0.0
  %2571 = vmatpush2.msra.mxu0 0.0
  %2572 = vmatprep.subr.mxu0 0.0
  %2573 = vmatpush2.msra.mxu0 0.0
  %2574 = vmatprep.subr.mxu0 0.0
  %2575 = vmatpush2.msra.mxu0 0.0
  %2576 = vmatprep.subr.mxu0 0.0
  %2577 = vmatpush2.msra.mxu0 0.0
  %2578 = vmatprep.subr.mxu0 0.0
  %2579 = vmatpush2.msra.mxu0 0.0
  %2580 = vmatprep.subr.mxu0 0.0
  %2581 = vmatpush2.msra.mxu0 0.0
  %2582 = vmatprep.subr.mxu0 0.0
  %2583 = vmatpush2.msra.mxu0 0.0
  %2584 = vmatprep.subr.mxu0 0.0
  %2585 = vmatpush2.msra.mxu0 0.0
  %2586 = vmatprep.subr.mxu0 0.0
  %2587 = vmatpush2.msra.mxu0 0.0
  %2588 = vmatprep.subr.mxu0 0.0
  %2589 = vmatpush2.msra.mxu0 0.0
  %2590 = vmatprep.subr.mxu0 0.0
  %2591 = vmatpush2.msra.mxu0 0.0
  %2592 = vmatprep.subr.mxu0 0.0
  %2593 = vmatpush2.msra.mxu0 0.0
  %2594 = vmatprep.mubr.f32.mxu0 0.0
  %2595 = vmatmul.mubr.f32.gmra.mxu0 %v2525
  %v2596 = vpop.f32.mrf.mxu0
  %v2597 = vadd.f32 %v2523, %v2596
  %v2598 = vpop.f32.mrf.mxu0
  %2599 = vmatprep.mubr.f32.mxu0 0.0
  %2600 = vmatmul.mubr.f32.gmra.mxu0 %v2528
  %v2601 = vpop.f32.mrf.mxu0
  %v2602 = vadd.f32 %v2523, %v2601
  %v2603 = vpop.f32.mrf.mxu0
  %2604 = vdwg.mxu0
  %v2605 = vmax.f32 %v2597, 0.0
  %v2606 = vmax.f32 %v2602, 0.0
  %v2607 = vlaneseq
  %v2608 = vshrl.u32 %v2607, 7
  %v2609 = vsub.s32 5, %v2608
  %v2610 = vrot.slane %v1465, %v2609
  %2611 = vmatprep.subr.mxu0 0.0
  %2612 = vmatpush1.msra.mxu0 %v1463
  %2613 = vmatprep.subr.mxu0 0.0
  %2614 = vmatpush1.msra.mxu0 %v1462
  %2615 = vmatprep.subr.mxu0 0.0
  %2616 = vmatpush1.msra.mxu0 %v1461
  %2617 = vmatprep.subr.mxu0 0.0
  %2618 = vmatpush1.msra.mxu0 %v1460
  %2619 = vmatprep.subr.mxu0 0.0
  %2620 = vmatpush1.msra.mxu0 %v1459
  %2621 = vmatprep.subr.mxu0 0.0
  %2622 = vmatpush1.msra.mxu0 %v1458
  %2623 = vmatprep.subr.mxu0 0.0
  %2624 = vmatpush1.msra.mxu0 %v1457
  %2625 = vmatprep.subr.mxu0 0.0
  %2626 = vmatpush1.msra.mxu0 %v1456
  %2627 = vmatprep.subr.mxu0 0.0
  %2628 = vmatpush1.msra.mxu0 %v1455
  %2629 = vmatprep.subr.mxu0 0.0
  %2630 = vmatpush1.msra.mxu0 %v1454
  %2631 = vmatprep.subr.mxu0 0.0
  %2632 = vmatpush1.msra.mxu0 %v1453
  %2633 = vmatprep.subr.mxu0 0.0
  %2634 = vmatpush1.msra.mxu0 %v1452
  %2635 = vmatprep.subr.mxu0 0.0
  %2636 = vmatpush1.msra.mxu0 %v1451
  %2637 = vmatprep.subr.mxu0 0.0
  %2638 = vmatpush1.msra.mxu0 %v1450
  %2639 = vmatprep.subr.mxu0 0.0
  %2640 = vmatpush1.msra.mxu0 %v1449
  %2641 = vmatprep.subr.mxu0 0.0
  %2642 = vmatpush1.msra.mxu0 %v1448
  %2643 = vmatprep.subr.mxu0 0.0
  %2644 = vmatpush2.msra.mxu0 0.0
  %2645 = vmatprep.subr.mxu0 0.0
  %2646 = vmatpush2.msra.mxu0 0.0
  %2647 = vmatprep.subr.mxu0 0.0
  %2648 = vmatpush2.msra.mxu0 0.0
  %2649 = vmatprep.subr.mxu0 0.0
  %2650 = vmatpush2.msra.mxu0 0.0
  %2651 = vmatprep.subr.mxu0 0.0
  %2652 = vmatpush2.msra.mxu0 0.0
  %2653 = vmatprep.subr.mxu0 0.0
  %2654 = vmatpush2.msra.mxu0 0.0
  %2655 = vmatprep.subr.mxu0 0.0
  %2656 = vmatpush2.msra.mxu0 0.0
  %2657 = vmatprep.subr.mxu0 0.0
  %2658 = vmatpush2.msra.mxu0 0.0
  %2659 = vmatprep.subr.mxu0 0.0
  %2660 = vmatpush2.msra.mxu0 0.0
  %2661 = vmatprep.subr.mxu0 0.0
  %2662 = vmatpush2.msra.mxu0 0.0
  %2663 = vmatprep.subr.mxu0 0.0
  %2664 = vmatpush2.msra.mxu0 0.0
  %2665 = vmatprep.subr.mxu0 0.0
  %2666 = vmatpush2.msra.mxu0 0.0
  %2667 = vmatprep.subr.mxu0 0.0
  %2668 = vmatpush2.msra.mxu0 0.0
  %2669 = vmatprep.subr.mxu0 0.0
  %2670 = vmatpush2.msra.mxu0 0.0
  %2671 = vmatprep.subr.mxu0 0.0
  %2672 = vmatpush2.msra.mxu0 0.0
  %2673 = vmatprep.subr.mxu0 0.0
  %2674 = vmatpush2.msra.mxu0 0.0
  %2675 = vmatprep.mubr.f32.mxu0 0.0
  %2676 = vmatmul.mubr.f32.gmra.mxu0 %v2605
  %v2677 = vpop.f32.mrf.mxu0
  %v2678 = vadd.f32 %v2610, %v2677
  %v2679 = vpop.f32.mrf.mxu0
  %2680 = vmatprep.mubr.f32.mxu0 0.0
  %2681 = vmatmul.mubr.f32.gmra.mxu0 %v2606
  %v2682 = vpop.f32.mrf.mxu0
  %v2683 = vadd.f32 %v2610, %v2682
  %v2684 = vpop.f32.mrf.mxu0
  %2685 = vdwg.mxu0
  %v2686 = vadd.f32 %v2518, %v2678
  %v2687 = vadd.f32 %v2519, %v2683
  %v2688 = vsel %vm171, %v2686, 0.0
  %2689 = vadd.xlane.f32.xlu0 %v2688
  %v2690 = vpop.xlane.xlu0 %2689
  %v2691 = vsel %vm171, %v2687, 0.0
  %2692 = vadd.xlane.f32.xlu0 %v2691
  %v2693 = vpop.xlane.xlu0 %2692
  %v2694 = vmul.f32 %v2690, %v1193
  %v2695 = vmul.f32 %v2693, %v1193
  %v2696 = vsub.f32 %v2686, %v2694
  %v2697 = vsub.f32 %v2687, %v2695
  %v2698 = vmul.f32 %v2696, %v2696
  %v2699 = vmul.f32 %v2697, %v2697
  %v2700 = vsel %vm171, %v2698, 0.0
  %2701 = vadd.xlane.f32.xlu0 %v2700
  %v2702 = vpop.xlane.xlu0 %2701
  %v2703 = vsel %vm171, %v2699, 0.0
  %2704 = vadd.xlane.f32.xlu0 %v2703
  %v2705 = vpop.xlane.xlu0 %2704
  %v2706 = vmul.f32 %v2702, %v1193
  %v2707 = vmul.f32 %v2705, %v1193
  %v2708 = vadd.f32 %v2706, 1e-05
  %v2709 = vadd.f32 %v2707, 1e-05
  %v2710 = vrsqrt.pop %v2708
  %v2711 = vrsqrt.pop %v2709
  %v2712 = vmul.f32 %v2696, %v2710
  %v2713 = vmul.f32 %v2697, %v2711
  %v2714 = vlaneseq
  %v2715 = vshrl.u32 %v2714, 7
  %v2716 = vsub.s32 6, %v2715
  %v2717 = vrot.slane %v1465, %v2716
  %v2718 = vmul.f32 %v2712, %v2717
  %v2719 = vmul.f32 %v2713, %v2717
  %v2720 = vlaneseq
  %v2721 = vshrl.u32 %v2720, 7
  %v2722 = vsub.s32 7, %v2721
  %v2723 = vrot.slane %v1465, %v2722
  %v2724 = vadd.f32 %v2718, %v2723
  %v2725 = vadd.f32 %v2719, %v2723
  %v2726 = vld [vmem:[%s9] sm:$0xff]
  %v2727 = vld [vmem:[%s9 + $0x8] sm:$0xff]
  %v2728 = vld [vmem:[%s9 + $0x10] sm:$0xff]
  %v2729 = vld [vmem:[%s9 + $0x18] sm:$0xff]
  %v2730 = vld [vmem:[%s10] sm:$0x1]
  %v2732 = vlaneseq
  %v2733 = vshrl.u32 %v2732, 7
  %v2734 = vsub.s32 0, %v2733
  %v2735 = vrot.slane %v2730, %v2734
  %v2738 = vsel %vm171, %v2724, 0
  %v2741 = vsel %vm171, %v2725, 0
  %2743 = vmatprep.subr.mxu0 0.0
  %2744 = vmatpush1.msra.mxu0 0.0
  %2745 = vmatprep.subr.mxu0 0.0
  %2746 = vmatpush1.msra.mxu0 0.0
  %2747 = vmatprep.subr.mxu0 0.0
  %2748 = vmatpush1.msra.mxu0 0.0
  %2749 = vmatprep.subr.mxu0 0.0
  %2750 = vmatpush1.msra.mxu0 0.0
  %2751 = vmatprep.subr.mxu0 0.0
  %2752 = vmatpush1.msra.mxu0 0.0
  %2753 = vmatprep.subr.mxu0 0.0
  %2754 = vmatpush1.msra.mxu0 0.0
  %2755 = vmatprep.subr.mxu0 0.0
  %2756 = vmatpush1.msra.mxu0 0.0
  %2757 = vmatprep.subr.mxu0 0.0
  %2758 = vmatpush1.msra.mxu0 0.0
  %2759 = vmatprep.subr.mxu0 0.0
  %2760 = vmatpush1.msra.mxu0 0.0
  %2761 = vmatprep.subr.mxu0 0.0
  %2762 = vmatpush1.msra.mxu0 0.0
  %2763 = vmatprep.subr.mxu0 0.0
  %2764 = vmatpush1.msra.mxu0 0.0
  %2765 = vmatprep.subr.mxu0 0.0
  %2766 = vmatpush1.msra.mxu0 0.0
  %2767 = vmatprep.subr.mxu0 0.0
  %2768 = vmatpush1.msra.mxu0 %v2729
  %2769 = vmatprep.subr.mxu0 0.0
  %2770 = vmatpush1.msra.mxu0 %v2728
  %2771 = vmatprep.subr.mxu0 0.0
  %2772 = vmatpush1.msra.mxu0 %v2727
  %2773 = vmatprep.subr.mxu0 0.0
  %2774 = vmatpush1.msra.mxu0 %v2726
  %2775 = vmatprep.subr.mxu0 0.0
  %2776 = vmatpush2.msra.mxu0 0.0
  %2777 = vmatprep.subr.mxu0 0.0
  %2778 = vmatpush2.msra.mxu0 0.0
  %2779 = vmatprep.subr.mxu0 0.0
  %2780 = vmatpush2.msra.mxu0 0.0
  %2781 = vmatprep.subr.mxu0 0.0
  %2782 = vmatpush2.msra.mxu0 0.0
  %2783 = vmatprep.subr.mxu0 0.0
  %2784 = vmatpush2.msra.mxu0 0.0
  %2785 = vmatprep.subr.mxu0 0.0
  %2786 = vmatpush2.msra.mxu0 0.0
  %2787 = vmatprep.subr.mxu0 0.0
  %2788 = vmatpush2.msra.mxu0 0.0
  %2789 = vmatprep.subr.mxu0 0.0
  %2790 = vmatpush2.msra.mxu0 0.0
  %2791 = vmatprep.subr.mxu0 0.0
  %2792 = vmatpush2.msra.mxu0 0.0
  %2793 = vmatprep.subr.mxu0 0.0
  %2794 = vmatpush2.msra.mxu0 0.0
  %2795 = vmatprep.subr.mxu0 0.0
  %2796 = vmatpush2.msra.mxu0 0.0
  %2797 = vmatprep.subr.mxu0 0.0
  %2798 = vmatpush2.msra.mxu0 0.0
  %2799 = vmatprep.subr.mxu0 0.0
  %2800 = vmatpush2.msra.mxu0 0.0
  %2801 = vmatprep.subr.mxu0 0.0
  %2802 = vmatpush2.msra.mxu0 0.0
  %2803 = vmatprep.subr.mxu0 0.0
  %2804 = vmatpush2.msra.mxu0 0.0
  %2805 = vmatprep.subr.mxu0 0.0
  %2806 = vmatpush2.msra.mxu0 0.0
  %2807 = vmatprep.mubr.f32.mxu0 0.0
  %2808 = vmatmul.mubr.f32.gmra.mxu0 %v2738
  %v2809 = vpop.f32.mrf.mxu0
  %v2810 = vadd.f32 %v2735, %v2809
  %v2811 = vpop.f32.mrf.mxu0
  %2812 = vmatprep.mubr.f32.mxu0 0.0
  %2813 = vmatmul.mubr.f32.gmra.mxu0 %v2741
  %v2814 = vpop.f32.mrf.mxu0
  %v2815 = vadd.f32 %v2735, %v2814
  %v2816 = vpop.f32.mrf.mxu0
  %2817 = vdwg.mxu0
  %vm2818 = vcmask 80896
  %2819 = vst.msk [vmem:[%s11] sm:$0xff] %vm2818, %v2810
  %2820 = vst.msk [vmem:[%s11 + $0x8] sm:$0xff] %vm2818, %v2815
  // Predicated region
  $region46: #{transformer_forward_pallas.1} parent=0 // pred_check
    _
  $region47: #{transformer_forward_pallas.1} parent=0 // pred_check_branch
    %2822 = sbr.rel (0) target = $region49
  $region48: #{transformer_forward_pallas.1} parent=0 // pred_region
    _
  $region49: #{transformer_forward_pallas.1} parent=0 // pred_fallthru
    _
  // Predicated region
  $region50: #{transformer_forward_pallas.1} parent=0 // pred_check
    _
  $region51: #{transformer_forward_pallas.1} parent=0 // pred_check_branch
    %2824 = sbr.rel (0) target = $region53
  $region52: #{transformer_forward_pallas.1} parent=0 // pred_region
    _
  $region53: #{transformer_forward_pallas.1} parent=0 // pred_fallthru
    _

</llo_original>
